<compile_context>
chip_gen: v7x
topology: tpu7x:2x2x1
jax: 0.10.0
libtpu: 0.0.40
codegen_flags: <defaults>
</compile_context>

<pallas_src>
import functools
import math

import jax
import jax.numpy as jnp
from jax.experimental import pallas as pl
from jax.experimental.pallas import tpu as pltpu


def _layernorm(x, w, b, eps=1e-5):
  m = jnp.mean(x, axis=-1, keepdims=True)
  v = jnp.mean((x - m) ** 2, axis=-1, keepdims=True)
  return (x - m) * jax.lax.rsqrt(v + eps) * w + b


def _gelu(x):
  # TODO(synk): nn.GELU() default is the exact erf form; the tanh approximation
  # is used here (max abs deviation ~1e-3) since erf has no guaranteed Mosaic
  # lowering. The pure-JAX reference below uses the same formula.
  c = math.sqrt(2.0 / math.pi)
  return 0.5 * x * (1.0 + jnp.tanh(c * (x + 0.044715 * x * x * x)))


def vit_kernel(x_ref, w32_ref, wff2_ref, vec_ref, out_ref,
               *, depth, heads, dim, dim_head, mlp_dim, scale):
  """One batch element per grid step; the whole ViT forward runs in-kernel."""
  inner = heads * dim_head
  x = x_ref[0]                                   # (seq, dim); cls token is row 0

  for l in range(depth):                         # static unroll over layers
    # --- per-layer parameters: single packed loads, static slices ---
    w32 = w32_ref[l]                             # (dim, 3*inner + dim + mlp_dim)
    wqkv = w32[:, :3 * inner]                    # fused q|k|v projection
    wout = w32[:, 3 * inner:3 * inner + dim]     # attention output projection
    wff1 = w32[:, 3 * inner + dim:]              # FF expansion
    wff2 = wff2_ref[l]                           # (mlp_dim, dim) FF contraction
    vec = vec_ref[l]                             # (8, W) packed vectors
    ln1_w, ln1_b = vec[0:1, :dim], vec[1:2, :dim]
    ln2_w, ln2_b = vec[2:3, :dim], vec[3:4, :dim]
    out_b, ff2_b = vec[4:5, :dim], vec[5:6, :dim]
    ff1_b = vec[6:7, :mlp_dim]

    # --- x = PreNorm(Attention)(x) + x ---
    h = _layernorm(x, ln1_w, ln1_b)
    qkv = jnp.dot(h, wqkv, preferred_element_type=jnp.float32)   # (seq, 3*inner)
    q = qkv[:, :inner] * scale                   # fold softmax scale into q once
    k = qkv[:, inner:2 * inner]
    v = qkv[:, 2 * inner:]
    head_outs = []
    for hh in range(heads):                      # static unroll over heads
      sl = slice(hh * dim_head, (hh + 1) * dim_head)
      qh, kh, vh = q[:, sl], k[:, sl], v[:, sl]
      # contract the LAST dims of q and k -> no k transpose materialized
      dots = jax.lax.dot_general(
          qh, kh, (((1,), (1,)), ((), ())),
          preferred_element_type=jnp.float32)                    # (seq, seq)
      mx = jnp.max(dots, axis=-1, keepdims=True)
      e = jnp.exp(dots - mx)
      p = e * pl.reciprocal(jnp.sum(e, axis=-1, keepdims=True), approx=True)
      head_outs.append(jnp.dot(p, vh, preferred_element_type=jnp.float32))
    attn_out = jnp.concatenate(head_outs, axis=-1)               # (seq, inner)
    x = x + jnp.dot(attn_out, wout, preferred_element_type=jnp.float32) + out_b

    # --- x = PreNorm(FeedForward)(x) + x ---
    h = _layernorm(x, ln2_w, ln2_b)
    h = _gelu(jnp.dot(h, wff1, preferred_element_type=jnp.float32) + ff1_b)
    x = x + jnp.dot(h, wff2, preferred_element_type=jnp.float32) + ff2_b

  # --- pool='cls' + mlp_head(dim -> 1): mul+reduce avoids a 1-lane matmul ---
  hv = vec_ref[0][7:8, :]                        # head params live in layer-0 row 7
  cls = x[0:1, :]                                # (1, dim)
  logit = jnp.sum(cls * hv[:, :dim], axis=-1, keepdims=True) + hv[0:1, dim:dim + 1]
  out_ref[0] = logit.astype(out_ref.dtype)


def pack_params(params, *, dim, inner, mlp_dim):
  """Pack the many small parameter arrays into 3 replicated kernel refs."""
  (qkv_w, out_w, out_b, ff1_w, ff1_b, ff2_w, ff2_b,
   ln1_w, ln1_b, ln2_w, ln2_b, head_w, head_b) = params
  depth = qkv_w.shape[0]
  assert inner == dim, "column-packing of qkv|out|ff1 assumes inner_dim == dim"
  # All input-dim==dim weights packed along the output columns.
  w32 = jnp.concatenate([qkv_w, out_w, ff1_w], axis=-1)   # (depth, dim, 3i+dim+mlp)

  W = max(mlp_dim, dim + 1)
  def row(a):                                              # (depth, k) -> (depth, 1, W)
    return jnp.pad(a, ((0, 0), (0, W - a.shape[-1])))[:, None, :]
  head_row = jnp.zeros((depth, W), jnp.float32)
  head_row = head_row.at[0, :dim].set(head_w[:, 0])
  head_row = head_row.at[0, dim].set(head_b)
  vecs = jnp.concatenate(
      [row(ln1_w), row(ln1_b), row(ln2_w), row(ln2_b),
       row(out_b), row(ff2_b), row(ff1_b), head_row[:, None, :]],
      axis=1)                                              # (depth, 8, W)
  return w32, ff2_w, vecs


def vit_forward(x, cls_token, packed_params, *, depth, heads, dim_head, mlp_dim):
  b, n, dim = x.shape
  seq = n + 1
  w32, wff2, vecs = packed_params

  # cls-token prepend (and eval-mode dropout == identity) are plain-JAX glue.
  xc = jnp.concatenate([jnp.broadcast_to(cls_token, (b, 1, dim)), x], axis=1)

  kernel = functools.partial(
      vit_kernel, depth=depth, heads=heads, dim=dim, dim_head=dim_head,
      mlp_dim=mlp_dim, scale=dim_head ** (-0.5))

  out = pl.pallas_call(
      kernel,
      grid=(b,),
      in_specs=[
          pl.BlockSpec((1, seq, dim), lambda i: (i, 0, 0)),
          pl.BlockSpec(w32.shape, lambda i: (0, 0, 0)),
          pl.BlockSpec(wff2.shape, lambda i: (0, 0, 0)),
          pl.BlockSpec(vecs.shape, lambda i: (0, 0, 0)),
      ],
      out_specs=pl.BlockSpec((1, 1, 1), lambda i: (i, 0, 0)),
      out_shape=jax.ShapeDtypeStruct((b, 1, 1), jnp.float32),
      compiler_params=pltpu.CompilerParams(dimension_semantics=("parallel",)),
  )(xc, w32, wff2, vecs)
  return out.reshape(b, 1)


def reference(x, cls_token, params, *, heads, dim_head, mlp_dim):
  """Pure-JAX reference mirroring the PyTorch ViT forward pass (eval mode)."""
  (qkv_w, out_w, out_b, ff1_w, ff1_b, ff2_w, ff2_b,
   ln1_w, ln1_b, ln2_w, ln2_b, head_w, head_b) = params
  b, n, dim = x.shape
  depth = qkv_w.shape[0]
  inner = heads * dim_head
  scale = dim_head ** (-0.5)

  def ln(t, w, bb):
    m = t.mean(-1, keepdims=True)
    v = ((t - m) ** 2).mean(-1, keepdims=True)
    return (t - m) / jnp.sqrt(v + 1e-5) * w + bb

  x = jnp.concatenate([jnp.broadcast_to(cls_token, (b, 1, dim)), x], axis=1)
  for l in range(depth):
    h = ln(x, ln1_w[l], ln1_b[l])
    qkv = h @ qkv_w[l]
    q, k, v = jnp.split(qkv, 3, axis=-1)
    def sh(t):
      return t.reshape(b, -1, heads, dim_head).transpose(0, 2, 1, 3)
    qh, kh, vh = sh(q), sh(k), sh(v)
    dots = jnp.einsum('bhid,bhjd->bhij', qh, kh) * scale
    attn = jax.nn.softmax(dots, axis=-1)
    o = jnp.einsum('bhij,bhjd->bhid', attn, vh)
    o = o.transpose(0, 2, 1, 3).reshape(b, -1, inner)
    x = x + o @ out_w[l] + out_b[l]
    h = ln(x, ln2_w[l], ln2_b[l])
    x = x + _gelu(h @ ff1_w[l] + ff1_b[l]) @ ff2_w[l] + ff2_b[l]
  cls = x[:, 0]                     # pool == 'cls'
  return cls @ head_w + head_b      # (b, 1)


if __name__ == "__main__":
  b, n, dim = 2, 8, 32              # batch, num patch tokens, model dim
  depth, heads, dim_head, mlp_dim = 2, 4, 8, 64
  inner = heads * dim_head          # 32 (== dim, so to_out projection is active)

  key = jax.random.PRNGKey(0)
  ks = jax.random.split(key, 16)
  s_in = 1.0 / math.sqrt(dim)
  s_mlp = 1.0 / math.sqrt(mlp_dim)

  x = jax.random.normal(ks[0], (b, n, dim), jnp.float32)
  cls_token = jax.random.normal(ks[1], (1, 1, dim), jnp.float32)

  qkv_w = jax.random.normal(ks[2], (depth, dim, 3 * inner), jnp.float32) * s_in
  out_w = jax.random.normal(ks[3], (depth, inner, dim), jnp.float32) * s_in
  out_b = jax.random.normal(ks[4], (depth, dim), jnp.float32) * 0.05
  ff1_w = jax.random.normal(ks[5], (depth, dim, mlp_dim), jnp.float32) * s_in
  ff1_b = jax.random.normal(ks[6], (depth, mlp_dim), jnp.float32) * 0.05
  ff2_w = jax.random.normal(ks[7], (depth, mlp_dim, dim), jnp.float32) * s_mlp
  ff2_b = jax.random.normal(ks[8], (depth, dim), jnp.float32) * 0.05
  ln1_w = 1.0 + 0.1 * jax.random.normal(ks[9], (depth, dim), jnp.float32)
  ln1_b = 0.05 * jax.random.normal(ks[10], (depth, dim), jnp.float32)
  ln2_w = 1.0 + 0.1 * jax.random.normal(ks[11], (depth, dim), jnp.float32)
  ln2_b = 0.05 * jax.random.normal(ks[12], (depth, dim), jnp.float32)
  head_w = jax.random.normal(ks[13], (dim, 1), jnp.float32) * s_in
  head_b = jax.random.normal(ks[14], (), jnp.float32) * 0.05

  params = (qkv_w, out_w, out_b, ff1_w, ff1_b, ff2_w, ff2_b,
            ln1_w, ln1_b, ln2_w, ln2_b, head_w, head_b)
  packed = pack_params(params, dim=dim, inner=inner, mlp_dim=mlp_dim)

  out = vit_forward(x, cls_token, packed, depth=depth, heads=heads,
                    dim_head=dim_head, mlp_dim=mlp_dim)
  out = jax.block_until_ready(out)

  with jax.default_matmul_precision("highest"):
    ref = reference(x, cls_token, params, heads=heads, dim_head=dim_head,
                    mlp_dim=mlp_dim)
  ref = jax.block_until_ready(ref)

  assert out.shape == ref.shape == (b, 1), (out.shape, ref.shape)
  assert bool(jnp.all(jnp.isfinite(out)))
  err = float(jnp.max(jnp.abs(out - ref)))
  assert err < 2e-2, err
  print("KERNEL_OK")
</pallas_src>

<mosaic_0001>
module attributes {stable_mosaic.version = 11 : i64} {
  func.func @vit_kernel(%arg0: i32, %arg1: memref<1x9x32xf32, #tpu.memory_space<vmem>>, %arg2: memref<2x32x192xf32, #tpu.memory_space<vmem>>, %arg3: memref<2x64x32xf32, #tpu.memory_space<vmem>>, %arg4: memref<2x8x64xf32, #tpu.memory_space<vmem>>, %arg5: memref<1x1x1xf32, #tpu.memory_space<vmem>>) attributes {dimension_semantics = [#tpu.dimension_semantics<parallel>], iteration_bounds = array<i64: 2>, scalar_prefetch = 0 : i64, scratch_operands = 0 : i64, tpu.core_type = #tpu.core_type<tc>, window_params = [{transform_indices = @transform_0, window_bounds = array<i64: 1, 9, 32>}, {pipeline_mode = #tpu.pipeline_mode<synchronous>, transform_indices = @transform_1, window_bounds = array<i64: 2, 32, 192>}, {pipeline_mode = #tpu.pipeline_mode<synchronous>, transform_indices = @transform_2, window_bounds = array<i64: 2, 64, 32>}, {pipeline_mode = #tpu.pipeline_mode<synchronous>, transform_indices = @transform_3, window_bounds = array<i64: 2, 8, 64>}, {transform_indices = @transform_4, window_bounds = array<i64: 1, 1, 1>}]} {
    %c0 = arith.constant 0 : index
    %c0_0 = arith.constant 0 : index
    %c0_1 = arith.constant 0 : index
    %0 = vector.load %arg1[%c0, %c0_0, %c0_1] : memref<1x9x32xf32, #tpu.memory_space<vmem>>, vector<1x9x32xf32>
    %1 = vector.shape_cast %0 : vector<1x9x32xf32> to vector<9x32xf32>
    %c0_2 = arith.constant 0 : index
    %c0_3 = arith.constant 0 : index
    %c0_4 = arith.constant 0 : index
    %2 = vector.load %arg2[%c0_2, %c0_3, %c0_4] : memref<2x32x192xf32, #tpu.memory_space<vmem>>, vector<1x32x192xf32>
    %3 = vector.shape_cast %2 : vector<1x32x192xf32> to vector<32x192xf32>
    %4 = vector.extract_strided_slice %3 {offsets = [0, 0], sizes = [32, 96], strides = [1, 1]} : vector<32x192xf32> to vector<32x96xf32>
    %5 = vector.extract_strided_slice %3 {offsets = [0, 96], sizes = [32, 32], strides = [1, 1]} : vector<32x192xf32> to vector<32x32xf32>
    %6 = vector.extract_strided_slice %3 {offsets = [0, 128], sizes = [32, 64], strides = [1, 1]} : vector<32x192xf32> to vector<32x64xf32>
    %c0_5 = arith.constant 0 : index
    %c0_6 = arith.constant 0 : index
    %c0_7 = arith.constant 0 : index
    %7 = vector.load %arg3[%c0_5, %c0_6, %c0_7] : memref<2x64x32xf32, #tpu.memory_space<vmem>>, vector<1x64x32xf32>
    %8 = vector.shape_cast %7 : vector<1x64x32xf32> to vector<64x32xf32>
    %c0_8 = arith.constant 0 : index
    %c0_9 = arith.constant 0 : index
    %c0_10 = arith.constant 0 : index
    %9 = vector.load %arg4[%c0_8, %c0_9, %c0_10] : memref<2x8x64xf32, #tpu.memory_space<vmem>>, vector<1x8x64xf32>
    %10 = vector.shape_cast %9 : vector<1x8x64xf32> to vector<8x64xf32>
    %11 = vector.extract_strided_slice %10 {offsets = [0, 0], sizes = [1, 32], strides = [1, 1]} : vector<8x64xf32> to vector<1x32xf32>
    %12 = vector.extract_strided_slice %10 {offsets = [1, 0], sizes = [1, 32], strides = [1, 1]} : vector<8x64xf32> to vector<1x32xf32>
    %13 = vector.extract_strided_slice %10 {offsets = [2, 0], sizes = [1, 32], strides = [1, 1]} : vector<8x64xf32> to vector<1x32xf32>
    %14 = vector.extract_strided_slice %10 {offsets = [3, 0], sizes = [1, 32], strides = [1, 1]} : vector<8x64xf32> to vector<1x32xf32>
    %15 = vector.extract_strided_slice %10 {offsets = [4, 0], sizes = [1, 32], strides = [1, 1]} : vector<8x64xf32> to vector<1x32xf32>
    %16 = vector.extract_strided_slice %10 {offsets = [5, 0], sizes = [1, 32], strides = [1, 1]} : vector<8x64xf32> to vector<1x32xf32>
    %17 = vector.extract_strided_slice %10 {offsets = [6, 0], sizes = [1, 64], strides = [1, 1]} : vector<8x64xf32> to vector<1x64xf32>
    %cst = arith.constant dense<0.000000e+00> : vector<9xf32>
    %18 = vector.multi_reduction <add>, %1, %cst [1] : vector<9x32xf32> to vector<9xf32>
    %19 = vector.shape_cast %18 : vector<9xf32> to vector<9x1xf32>
    %cst_11 = arith.constant 3.200000e+01 : f32
    %20 = vector.broadcast %cst_11 : f32 to vector<9x1xf32>
    %21 = arith.divf %19, %20 : vector<9x1xf32>
    %22 = vector.broadcast %21 : vector<9x1xf32> to vector<9x32xf32>
    %23 = arith.subf %1, %22 : vector<9x32xf32>
    %24 = arith.mulf %23, %23 : vector<9x32xf32>
    %cst_12 = arith.constant dense<0.000000e+00> : vector<9xf32>
    %25 = vector.multi_reduction <add>, %24, %cst_12 [1] : vector<9x32xf32> to vector<9xf32>
    %26 = vector.shape_cast %25 : vector<9xf32> to vector<9x1xf32>
    %cst_13 = arith.constant 3.200000e+01 : f32
    %27 = vector.broadcast %cst_13 : f32 to vector<9x1xf32>
    %28 = arith.divf %26, %27 : vector<9x1xf32>
    %29 = vector.broadcast %21 : vector<9x1xf32> to vector<9x32xf32>
    %30 = arith.subf %1, %29 : vector<9x32xf32>
    %cst_14 = arith.constant 9.99999974E-6 : f32
    %31 = vector.broadcast %cst_14 : f32 to vector<9x1xf32>
    %32 = arith.addf %28, %31 : vector<9x1xf32>
    %33 = math.rsqrt %32 : vector<9x1xf32>
    %34 = vector.broadcast %33 : vector<9x1xf32> to vector<9x32xf32>
    %35 = arith.mulf %30, %34 : vector<9x32xf32>
    %36 = vector.broadcast %11 : vector<1x32xf32> to vector<9x32xf32>
    %37 = arith.mulf %35, %36 : vector<9x32xf32>
    %38 = vector.broadcast %12 : vector<1x32xf32> to vector<9x32xf32>
    %39 = arith.addf %37, %38 : vector<9x32xf32>
    %cst_15 = arith.constant dense<0.000000e+00> : vector<9x96xf32>
    %40 = tpu.matmul %39, %4, %cst_15 {dimension_numbers = #tpu.dot_dimension_numbers<[1], [0], [0], [1], [0, 0, 1, 1], [], []>} : vector<9x32xf32>, vector<32x96xf32>, vector<9x96xf32> -> vector<9x96xf32>
    %41 = vector.extract_strided_slice %40 {offsets = [0, 0], sizes = [9, 32], strides = [1, 1]} : vector<9x96xf32> to vector<9x32xf32>
    %cst_16 = arith.constant 0.353553385 : f32
    %42 = vector.broadcast %cst_16 : f32 to vector<9x32xf32>
    %43 = arith.mulf %41, %42 : vector<9x32xf32>
    %44 = vector.extract_strided_slice %40 {offsets = [0, 32], sizes = [9, 32], strides = [1, 1]} : vector<9x96xf32> to vector<9x32xf32>
    %45 = vector.extract_strided_slice %40 {offsets = [0, 64], sizes = [9, 32], strides = [1, 1]} : vector<9x96xf32> to vector<9x32xf32>
    %46 = vector.extract_strided_slice %43 {offsets = [0, 0], sizes = [9, 8], strides = [1, 1]} : vector<9x32xf32> to vector<9x8xf32>
    %47 = vector.extract_strided_slice %44 {offsets = [0, 0], sizes = [9, 8], strides = [1, 1]} : vector<9x32xf32> to vector<9x8xf32>
    %48 = vector.extract_strided_slice %45 {offsets = [0, 0], sizes = [9, 8], strides = [1, 1]} : vector<9x32xf32> to vector<9x8xf32>
    %cst_17 = arith.constant dense<0.000000e+00> : vector<9x9xf32>
    %49 = tpu.matmul %46, %47, %cst_17 {dimension_numbers = #tpu.dot_dimension_numbers<[1], [1], [0], [0], [0, 0, 1, 0], [], []>} : vector<9x8xf32>, vector<9x8xf32>, vector<9x9xf32> -> vector<9x9xf32>
    %cst_18 = arith.constant dense<0xFF800000> : vector<9xf32>
    %50 = vector.multi_reduction <maximumf>, %49, %cst_18 [1] : vector<9x9xf32> to vector<9xf32>
    %51 = vector.shape_cast %50 : vector<9xf32> to vector<9x1xf32>
    %52 = vector.broadcast %51 : vector<9x1xf32> to vector<9x9xf32>
    %53 = arith.subf %49, %52 : vector<9x9xf32>
    %54 = math.exp %53 : vector<9x9xf32>
    %cst_19 = arith.constant dense<0.000000e+00> : vector<9xf32>
    %55 = vector.multi_reduction <add>, %54, %cst_19 [1] : vector<9x9xf32> to vector<9xf32>
    %56 = vector.shape_cast %55 : vector<9xf32> to vector<9x1xf32>
    %57 = tpu.reciprocal %56 {approx = true} : vector<9x1xf32> -> vector<9x1xf32>
    %58 = vector.broadcast %57 : vector<9x1xf32> to vector<9x9xf32>
    %59 = arith.mulf %54, %58 : vector<9x9xf32>
    %cst_20 = arith.constant dense<0.000000e+00> : vector<9x8xf32>
    %60 = tpu.matmul %59, %48, %cst_20 {dimension_numbers = #tpu.dot_dimension_numbers<[1], [0], [0], [1], [0, 0, 1, 1], [], []>} : vector<9x9xf32>, vector<9x8xf32>, vector<9x8xf32> -> vector<9x8xf32>
    %61 = vector.extract_strided_slice %43 {offsets = [0, 8], sizes = [9, 8], strides = [1, 1]} : vector<9x32xf32> to vector<9x8xf32>
    %62 = vector.extract_strided_slice %44 {offsets = [0, 8], sizes = [9, 8], strides = [1, 1]} : vector<9x32xf32> to vector<9x8xf32>
    %63 = vector.extract_strided_slice %45 {offsets = [0, 8], sizes = [9, 8], strides = [1, 1]} : vector<9x32xf32> to vector<9x8xf32>
    %cst_21 = arith.constant dense<0.000000e+00> : vector<9x9xf32>
    %64 = tpu.matmul %61, %62, %cst_21 {dimension_numbers = #tpu.dot_dimension_numbers<[1], [1], [0], [0], [0, 0, 1, 0], [], []>} : vector<9x8xf32>, vector<9x8xf32>, vector<9x9xf32> -> vector<9x9xf32>
    %cst_22 = arith.constant dense<0xFF800000> : vector<9xf32>
    %65 = vector.multi_reduction <maximumf>, %64, %cst_22 [1] : vector<9x9xf32> to vector<9xf32>
    %66 = vector.shape_cast %65 : vector<9xf32> to vector<9x1xf32>
    %67 = vector.broadcast %66 : vector<9x1xf32> to vector<9x9xf32>
    %68 = arith.subf %64, %67 : vector<9x9xf32>
    %69 = math.exp %68 : vector<9x9xf32>
    %cst_23 = arith.constant dense<0.000000e+00> : vector<9xf32>
    %70 = vector.multi_reduction <add>, %69, %cst_23 [1] : vector<9x9xf32> to vector<9xf32>
    %71 = vector.shape_cast %70 : vector<9xf32> to vector<9x1xf32>
    %72 = tpu.reciprocal %71 {approx = true} : vector<9x1xf32> -> vector<9x1xf32>
    %73 = vector.broadcast %72 : vector<9x1xf32> to vector<9x9xf32>
    %74 = arith.mulf %69, %73 : vector<9x9xf32>
    %cst_24 = arith.constant dense<0.000000e+00> : vector<9x8xf32>
    %75 = tpu.matmul %74, %63, %cst_24 {dimension_numbers = #tpu.dot_dimension_numbers<[1], [0], [0], [1], [0, 0, 1, 1], [], []>} : vector<9x9xf32>, vector<9x8xf32>, vector<9x8xf32> -> vector<9x8xf32>
    %76 = vector.extract_strided_slice %43 {offsets = [0, 16], sizes = [9, 8], strides = [1, 1]} : vector<9x32xf32> to vector<9x8xf32>
    %77 = vector.extract_strided_slice %44 {offsets = [0, 16], sizes = [9, 8], strides = [1, 1]} : vector<9x32xf32> to vector<9x8xf32>
    %78 = vector.extract_strided_slice %45 {offsets = [0, 16], sizes = [9, 8], strides = [1, 1]} : vector<9x32xf32> to vector<9x8xf32>
    %cst_25 = arith.constant dense<0.000000e+00> : vector<9x9xf32>
    %79 = tpu.matmul %76, %77, %cst_25 {dimension_numbers = #tpu.dot_dimension_numbers<[1], [1], [0], [0], [0, 0, 1, 0], [], []>} : vector<9x8xf32>, vector<9x8xf32>, vector<9x9xf32> -> vector<9x9xf32>
    %cst_26 = arith.constant dense<0xFF800000> : vector<9xf32>
    %80 = vector.multi_reduction <maximumf>, %79, %cst_26 [1] : vector<9x9xf32> to vector<9xf32>
    %81 = vector.shape_cast %80 : vector<9xf32> to vector<9x1xf32>
    %82 = vector.broadcast %81 : vector<9x1xf32> to vector<9x9xf32>
    %83 = arith.subf %79, %82 : vector<9x9xf32>
    %84 = math.exp %83 : vector<9x9xf32>
    %cst_27 = arith.constant dense<0.000000e+00> : vector<9xf32>
    %85 = vector.multi_reduction <add>, %84, %cst_27 [1] : vector<9x9xf32> to vector<9xf32>
    %86 = vector.shape_cast %85 : vector<9xf32> to vector<9x1xf32>
    %87 = tpu.reciprocal %86 {approx = true} : vector<9x1xf32> -> vector<9x1xf32>
    %88 = vector.broadcast %87 : vector<9x1xf32> to vector<9x9xf32>
    %89 = arith.mulf %84, %88 : vector<9x9xf32>
    %cst_28 = arith.constant dense<0.000000e+00> : vector<9x8xf32>
    %90 = tpu.matmul %89, %78, %cst_28 {dimension_numbers = #tpu.dot_dimension_numbers<[1], [0], [0], [1], [0, 0, 1, 1], [], []>} : vector<9x9xf32>, vector<9x8xf32>, vector<9x8xf32> -> vector<9x8xf32>
    %91 = vector.extract_strided_slice %43 {offsets = [0, 24], sizes = [9, 8], strides = [1, 1]} : vector<9x32xf32> to vector<9x8xf32>
    %92 = vector.extract_strided_slice %44 {offsets = [0, 24], sizes = [9, 8], strides = [1, 1]} : vector<9x32xf32> to vector<9x8xf32>
    %93 = vector.extract_strided_slice %45 {offsets = [0, 24], sizes = [9, 8], strides = [1, 1]} : vector<9x32xf32> to vector<9x8xf32>
    %cst_29 = arith.constant dense<0.000000e+00> : vector<9x9xf32>
    %94 = tpu.matmul %91, %92, %cst_29 {dimension_numbers = #tpu.dot_dimension_numbers<[1], [1], [0], [0], [0, 0, 1, 0], [], []>} : vector<9x8xf32>, vector<9x8xf32>, vector<9x9xf32> -> vector<9x9xf32>
    %cst_30 = arith.constant dense<0xFF800000> : vector<9xf32>
    %95 = vector.multi_reduction <maximumf>, %94, %cst_30 [1] : vector<9x9xf32> to vector<9xf32>
    %96 = vector.shape_cast %95 : vector<9xf32> to vector<9x1xf32>
    %97 = vector.broadcast %96 : vector<9x1xf32> to vector<9x9xf32>
    %98 = arith.subf %94, %97 : vector<9x9xf32>
    %99 = math.exp %98 : vector<9x9xf32>
    %cst_31 = arith.constant dense<0.000000e+00> : vector<9xf32>
    %100 = vector.multi_reduction <add>, %99, %cst_31 [1] : vector<9x9xf32> to vector<9xf32>
    %101 = vector.shape_cast %100 : vector<9xf32> to vector<9x1xf32>
    %102 = tpu.reciprocal %101 {approx = true} : vector<9x1xf32> -> vector<9x1xf32>
    %103 = vector.broadcast %102 : vector<9x1xf32> to vector<9x9xf32>
    %104 = arith.mulf %99, %103 : vector<9x9xf32>
    %cst_32 = arith.constant dense<0.000000e+00> : vector<9x8xf32>
    %105 = tpu.matmul %104, %93, %cst_32 {dimension_numbers = #tpu.dot_dimension_numbers<[1], [0], [0], [1], [0, 0, 1, 1], [], []>} : vector<9x9xf32>, vector<9x8xf32>, vector<9x8xf32> -> vector<9x8xf32>
    %106 = tpu.concatenate %60, %75, %90, %105 in 1 : vector<9x8xf32>, vector<9x8xf32>, vector<9x8xf32>, vector<9x8xf32> -> vector<9x32xf32>
    %cst_33 = arith.constant dense<0.000000e+00> : vector<9x32xf32>
    %107 = tpu.matmul %106, %5, %cst_33 {dimension_numbers = #tpu.dot_dimension_numbers<[1], [0], [0], [1], [0, 0, 1, 1], [], []>} : vector<9x32xf32>, vector<32x32xf32>, vector<9x32xf32> -> vector<9x32xf32>
    %108 = arith.addf %1, %107 : vector<9x32xf32>
    %109 = vector.broadcast %15 : vector<1x32xf32> to vector<9x32xf32>
    %110 = arith.addf %108, %109 : vector<9x32xf32>
    %cst_34 = arith.constant dense<0.000000e+00> : vector<9xf32>
    %111 = vector.multi_reduction <add>, %110, %cst_34 [1] : vector<9x32xf32> to vector<9xf32>
    %112 = vector.shape_cast %111 : vector<9xf32> to vector<9x1xf32>
    %cst_35 = arith.constant 3.200000e+01 : f32
    %113 = vector.broadcast %cst_35 : f32 to vector<9x1xf32>
    %114 = arith.divf %112, %113 : vector<9x1xf32>
    %115 = vector.broadcast %114 : vector<9x1xf32> to vector<9x32xf32>
    %116 = arith.subf %110, %115 : vector<9x32xf32>
    %117 = arith.mulf %116, %116 : vector<9x32xf32>
    %cst_36 = arith.constant dense<0.000000e+00> : vector<9xf32>
    %118 = vector.multi_reduction <add>, %117, %cst_36 [1] : vector<9x32xf32> to vector<9xf32>
    %119 = vector.shape_cast %118 : vector<9xf32> to vector<9x1xf32>
    %cst_37 = arith.constant 3.200000e+01 : f32
    %120 = vector.broadcast %cst_37 : f32 to vector<9x1xf32>
    %121 = arith.divf %119, %120 : vector<9x1xf32>
    %122 = vector.broadcast %114 : vector<9x1xf32> to vector<9x32xf32>
    %123 = arith.subf %110, %122 : vector<9x32xf32>
    %cst_38 = arith.constant 9.99999974E-6 : f32
    %124 = vector.broadcast %cst_38 : f32 to vector<9x1xf32>
    %125 = arith.addf %121, %124 : vector<9x1xf32>
    %126 = math.rsqrt %125 : vector<9x1xf32>
    %127 = vector.broadcast %126 : vector<9x1xf32> to vector<9x32xf32>
    %128 = arith.mulf %123, %127 : vector<9x32xf32>
    %129 = vector.broadcast %13 : vector<1x32xf32> to vector<9x32xf32>
    %130 = arith.mulf %128, %129 : vector<9x32xf32>
    %131 = vector.broadcast %14 : vector<1x32xf32> to vector<9x32xf32>
    %132 = arith.addf %130, %131 : vector<9x32xf32>
    %cst_39 = arith.constant dense<0.000000e+00> : vector<9x64xf32>
    %133 = tpu.matmul %132, %6, %cst_39 {dimension_numbers = #tpu.dot_dimension_numbers<[1], [0], [0], [1], [0, 0, 1, 1], [], []>} : vector<9x32xf32>, vector<32x64xf32>, vector<9x64xf32> -> vector<9x64xf32>
    %134 = vector.broadcast %17 : vector<1x64xf32> to vector<9x64xf32>
    %135 = arith.addf %133, %134 : vector<9x64xf32>
    %cst_40 = arith.constant 5.000000e-01 : f32
    %136 = vector.broadcast %cst_40 : f32 to vector<9x64xf32>
    %137 = arith.mulf %136, %135 : vector<9x64xf32>
    %cst_41 = arith.constant 4.471500e-02 : f32
    %138 = vector.broadcast %cst_41 : f32 to vector<9x64xf32>
    %139 = arith.mulf %138, %135 : vector<9x64xf32>
    %140 = arith.mulf %139, %135 : vector<9x64xf32>
    %141 = arith.mulf %140, %135 : vector<9x64xf32>
    %142 = arith.addf %135, %141 : vector<9x64xf32>
    %cst_42 = arith.constant 0.797884583 : f32
    %143 = vector.broadcast %cst_42 : f32 to vector<9x64xf32>
    %144 = arith.mulf %143, %142 : vector<9x64xf32>
    %145 = math.tanh %144 : vector<9x64xf32>
    %cst_43 = arith.constant 1.000000e+00 : f32
    %146 = vector.broadcast %cst_43 : f32 to vector<9x64xf32>
    %147 = arith.addf %146, %145 : vector<9x64xf32>
    %148 = arith.mulf %137, %147 : vector<9x64xf32>
    %cst_44 = arith.constant dense<0.000000e+00> : vector<9x32xf32>
    %149 = tpu.matmul %148, %8, %cst_44 {dimension_numbers = #tpu.dot_dimension_numbers<[1], [0], [0], [1], [0, 0, 1, 1], [], []>} : vector<9x64xf32>, vector<64x32xf32>, vector<9x32xf32> -> vector<9x32xf32>
    %150 = arith.addf %110, %149 : vector<9x32xf32>
    %151 = vector.broadcast %16 : vector<1x32xf32> to vector<9x32xf32>
    %152 = arith.addf %150, %151 : vector<9x32xf32>
    %c1 = arith.constant 1 : index
    %c0_45 = arith.constant 0 : index
    %c0_46 = arith.constant 0 : index
    %153 = vector.load %arg2[%c1, %c0_45, %c0_46] : memref<2x32x192xf32, #tpu.memory_space<vmem>>, vector<1x32x192xf32>
    %154 = vector.shape_cast %153 : vector<1x32x192xf32> to vector<32x192xf32>
    %155 = vector.extract_strided_slice %154 {offsets = [0, 0], sizes = [32, 96], strides = [1, 1]} : vector<32x192xf32> to vector<32x96xf32>
    %156 = vector.extract_strided_slice %154 {offsets = [0, 96], sizes = [32, 32], strides = [1, 1]} : vector<32x192xf32> to vector<32x32xf32>
    %157 = vector.extract_strided_slice %154 {offsets = [0, 128], sizes = [32, 64], strides = [1, 1]} : vector<32x192xf32> to vector<32x64xf32>
    %c1_47 = arith.constant 1 : index
    %c0_48 = arith.constant 0 : index
    %c0_49 = arith.constant 0 : index
    %158 = vector.load %arg3[%c1_47, %c0_48, %c0_49] : memref<2x64x32xf32, #tpu.memory_space<vmem>>, vector<1x64x32xf32>
    %159 = vector.shape_cast %158 : vector<1x64x32xf32> to vector<64x32xf32>
    %c1_50 = arith.constant 1 : index
    %c0_51 = arith.constant 0 : index
    %c0_52 = arith.constant 0 : index
    %160 = vector.load %arg4[%c1_50, %c0_51, %c0_52] : memref<2x8x64xf32, #tpu.memory_space<vmem>>, vector<1x8x64xf32>
    %161 = vector.shape_cast %160 : vector<1x8x64xf32> to vector<8x64xf32>
    %162 = vector.extract_strided_slice %161 {offsets = [0, 0], sizes = [1, 32], strides = [1, 1]} : vector<8x64xf32> to vector<1x32xf32>
    %163 = vector.extract_strided_slice %161 {offsets = [1, 0], sizes = [1, 32], strides = [1, 1]} : vector<8x64xf32> to vector<1x32xf32>
    %164 = vector.extract_strided_slice %161 {offsets = [2, 0], sizes = [1, 32], strides = [1, 1]} : vector<8x64xf32> to vector<1x32xf32>
    %165 = vector.extract_strided_slice %161 {offsets = [3, 0], sizes = [1, 32], strides = [1, 1]} : vector<8x64xf32> to vector<1x32xf32>
    %166 = vector.extract_strided_slice %161 {offsets = [4, 0], sizes = [1, 32], strides = [1, 1]} : vector<8x64xf32> to vector<1x32xf32>
    %167 = vector.extract_strided_slice %161 {offsets = [5, 0], sizes = [1, 32], strides = [1, 1]} : vector<8x64xf32> to vector<1x32xf32>
    %168 = vector.extract_strided_slice %161 {offsets = [6, 0], sizes = [1, 64], strides = [1, 1]} : vector<8x64xf32> to vector<1x64xf32>
    %cst_53 = arith.constant dense<0.000000e+00> : vector<9xf32>
    %169 = vector.multi_reduction <add>, %152, %cst_53 [1] : vector<9x32xf32> to vector<9xf32>
    %170 = vector.shape_cast %169 : vector<9xf32> to vector<9x1xf32>
    %cst_54 = arith.constant 3.200000e+01 : f32
    %171 = vector.broadcast %cst_54 : f32 to vector<9x1xf32>
    %172 = arith.divf %170, %171 : vector<9x1xf32>
    %173 = vector.broadcast %172 : vector<9x1xf32> to vector<9x32xf32>
    %174 = arith.subf %152, %173 : vector<9x32xf32>
    %175 = arith.mulf %174, %174 : vector<9x32xf32>
    %cst_55 = arith.constant dense<0.000000e+00> : vector<9xf32>
    %176 = vector.multi_reduction <add>, %175, %cst_55 [1] : vector<9x32xf32> to vector<9xf32>
    %177 = vector.shape_cast %176 : vector<9xf32> to vector<9x1xf32>
    %cst_56 = arith.constant 3.200000e+01 : f32
    %178 = vector.broadcast %cst_56 : f32 to vector<9x1xf32>
    %179 = arith.divf %177, %178 : vector<9x1xf32>
    %180 = vector.broadcast %172 : vector<9x1xf32> to vector<9x32xf32>
    %181 = arith.subf %152, %180 : vector<9x32xf32>
    %cst_57 = arith.constant 9.99999974E-6 : f32
    %182 = vector.broadcast %cst_57 : f32 to vector<9x1xf32>
    %183 = arith.addf %179, %182 : vector<9x1xf32>
    %184 = math.rsqrt %183 : vector<9x1xf32>
    %185 = vector.broadcast %184 : vector<9x1xf32> to vector<9x32xf32>
    %186 = arith.mulf %181, %185 : vector<9x32xf32>
    %187 = vector.broadcast %162 : vector<1x32xf32> to vector<9x32xf32>
    %188 = arith.mulf %186, %187 : vector<9x32xf32>
    %189 = vector.broadcast %163 : vector<1x32xf32> to vector<9x32xf32>
    %190 = arith.addf %188, %189 : vector<9x32xf32>
    %cst_58 = arith.constant dense<0.000000e+00> : vector<9x96xf32>
    %191 = tpu.matmul %190, %155, %cst_58 {dimension_numbers = #tpu.dot_dimension_numbers<[1], [0], [0], [1], [0, 0, 1, 1], [], []>} : vector<9x32xf32>, vector<32x96xf32>, vector<9x96xf32> -> vector<9x96xf32>
    %192 = vector.extract_strided_slice %191 {offsets = [0, 0], sizes = [9, 32], strides = [1, 1]} : vector<9x96xf32> to vector<9x32xf32>
    %cst_59 = arith.constant 0.353553385 : f32
    %193 = vector.broadcast %cst_59 : f32 to vector<9x32xf32>
    %194 = arith.mulf %192, %193 : vector<9x32xf32>
    %195 = vector.extract_strided_slice %191 {offsets = [0, 32], sizes = [9, 32], strides = [1, 1]} : vector<9x96xf32> to vector<9x32xf32>
    %196 = vector.extract_strided_slice %191 {offsets = [0, 64], sizes = [9, 32], strides = [1, 1]} : vector<9x96xf32> to vector<9x32xf32>
    %197 = vector.extract_strided_slice %194 {offsets = [0, 0], sizes = [9, 8], strides = [1, 1]} : vector<9x32xf32> to vector<9x8xf32>
    %198 = vector.extract_strided_slice %195 {offsets = [0, 0], sizes = [9, 8], strides = [1, 1]} : vector<9x32xf32> to vector<9x8xf32>
    %199 = vector.extract_strided_slice %196 {offsets = [0, 0], sizes = [9, 8], strides = [1, 1]} : vector<9x32xf32> to vector<9x8xf32>
    %cst_60 = arith.constant dense<0.000000e+00> : vector<9x9xf32>
    %200 = tpu.matmul %197, %198, %cst_60 {dimension_numbers = #tpu.dot_dimension_numbers<[1], [1], [0], [0], [0, 0, 1, 0], [], []>} : vector<9x8xf32>, vector<9x8xf32>, vector<9x9xf32> -> vector<9x9xf32>
    %cst_61 = arith.constant dense<0xFF800000> : vector<9xf32>
    %201 = vector.multi_reduction <maximumf>, %200, %cst_61 [1] : vector<9x9xf32> to vector<9xf32>
    %202 = vector.shape_cast %201 : vector<9xf32> to vector<9x1xf32>
    %203 = vector.broadcast %202 : vector<9x1xf32> to vector<9x9xf32>
    %204 = arith.subf %200, %203 : vector<9x9xf32>
    %205 = math.exp %204 : vector<9x9xf32>
    %cst_62 = arith.constant dense<0.000000e+00> : vector<9xf32>
    %206 = vector.multi_reduction <add>, %205, %cst_62 [1] : vector<9x9xf32> to vector<9xf32>
    %207 = vector.shape_cast %206 : vector<9xf32> to vector<9x1xf32>
    %208 = tpu.reciprocal %207 {approx = true} : vector<9x1xf32> -> vector<9x1xf32>
    %209 = vector.broadcast %208 : vector<9x1xf32> to vector<9x9xf32>
    %210 = arith.mulf %205, %209 : vector<9x9xf32>
    %cst_63 = arith.constant dense<0.000000e+00> : vector<9x8xf32>
    %211 = tpu.matmul %210, %199, %cst_63 {dimension_numbers = #tpu.dot_dimension_numbers<[1], [0], [0], [1], [0, 0, 1, 1], [], []>} : vector<9x9xf32>, vector<9x8xf32>, vector<9x8xf32> -> vector<9x8xf32>
    %212 = vector.extract_strided_slice %194 {offsets = [0, 8], sizes = [9, 8], strides = [1, 1]} : vector<9x32xf32> to vector<9x8xf32>
    %213 = vector.extract_strided_slice %195 {offsets = [0, 8], sizes = [9, 8], strides = [1, 1]} : vector<9x32xf32> to vector<9x8xf32>
    %214 = vector.extract_strided_slice %196 {offsets = [0, 8], sizes = [9, 8], strides = [1, 1]} : vector<9x32xf32> to vector<9x8xf32>
    %cst_64 = arith.constant dense<0.000000e+00> : vector<9x9xf32>
    %215 = tpu.matmul %212, %213, %cst_64 {dimension_numbers = #tpu.dot_dimension_numbers<[1], [1], [0], [0], [0, 0, 1, 0], [], []>} : vector<9x8xf32>, vector<9x8xf32>, vector<9x9xf32> -> vector<9x9xf32>
    %cst_65 = arith.constant dense<0xFF800000> : vector<9xf32>
    %216 = vector.multi_reduction <maximumf>, %215, %cst_65 [1] : vector<9x9xf32> to vector<9xf32>
    %217 = vector.shape_cast %216 : vector<9xf32> to vector<9x1xf32>
    %218 = vector.broadcast %217 : vector<9x1xf32> to vector<9x9xf32>
    %219 = arith.subf %215, %218 : vector<9x9xf32>
    %220 = math.exp %219 : vector<9x9xf32>
    %cst_66 = arith.constant dense<0.000000e+00> : vector<9xf32>
    %221 = vector.multi_reduction <add>, %220, %cst_66 [1] : vector<9x9xf32> to vector<9xf32>
    %222 = vector.shape_cast %221 : vector<9xf32> to vector<9x1xf32>
    %223 = tpu.reciprocal %222 {approx = true} : vector<9x1xf32> -> vector<9x1xf32>
    %224 = vector.broadcast %223 : vector<9x1xf32> to vector<9x9xf32>
    %225 = arith.mulf %220, %224 : vector<9x9xf32>
    %cst_67 = arith.constant dense<0.000000e+00> : vector<9x8xf32>
    %226 = tpu.matmul %225, %214, %cst_67 {dimension_numbers = #tpu.dot_dimension_numbers<[1], [0], [0], [1], [0, 0, 1, 1], [], []>} : vector<9x9xf32>, vector<9x8xf32>, vector<9x8xf32> -> vector<9x8xf32>
    %227 = vector.extract_strided_slice %194 {offsets = [0, 16], sizes = [9, 8], strides = [1, 1]} : vector<9x32xf32> to vector<9x8xf32>
    %228 = vector.extract_strided_slice %195 {offsets = [0, 16], sizes = [9, 8], strides = [1, 1]} : vector<9x32xf32> to vector<9x8xf32>
    %229 = vector.extract_strided_slice %196 {offsets = [0, 16], sizes = [9, 8], strides = [1, 1]} : vector<9x32xf32> to vector<9x8xf32>
    %cst_68 = arith.constant dense<0.000000e+00> : vector<9x9xf32>
    %230 = tpu.matmul %227, %228, %cst_68 {dimension_numbers = #tpu.dot_dimension_numbers<[1], [1], [0], [0], [0, 0, 1, 0], [], []>} : vector<9x8xf32>, vector<9x8xf32>, vector<9x9xf32> -> vector<9x9xf32>
    %cst_69 = arith.constant dense<0xFF800000> : vector<9xf32>
    %231 = vector.multi_reduction <maximumf>, %230, %cst_69 [1] : vector<9x9xf32> to vector<9xf32>
    %232 = vector.shape_cast %231 : vector<9xf32> to vector<9x1xf32>
    %233 = vector.broadcast %232 : vector<9x1xf32> to vector<9x9xf32>
    %234 = arith.subf %230, %233 : vector<9x9xf32>
    %235 = math.exp %234 : vector<9x9xf32>
    %cst_70 = arith.constant dense<0.000000e+00> : vector<9xf32>
    %236 = vector.multi_reduction <add>, %235, %cst_70 [1] : vector<9x9xf32> to vector<9xf32>
    %237 = vector.shape_cast %236 : vector<9xf32> to vector<9x1xf32>
    %238 = tpu.reciprocal %237 {approx = true} : vector<9x1xf32> -> vector<9x1xf32>
    %239 = vector.broadcast %238 : vector<9x1xf32> to vector<9x9xf32>
    %240 = arith.mulf %235, %239 : vector<9x9xf32>
    %cst_71 = arith.constant dense<0.000000e+00> : vector<9x8xf32>
    %241 = tpu.matmul %240, %229, %cst_71 {dimension_numbers = #tpu.dot_dimension_numbers<[1], [0], [0], [1], [0, 0, 1, 1], [], []>} : vector<9x9xf32>, vector<9x8xf32>, vector<9x8xf32> -> vector<9x8xf32>
    %242 = vector.extract_strided_slice %194 {offsets = [0, 24], sizes = [9, 8], strides = [1, 1]} : vector<9x32xf32> to vector<9x8xf32>
    %243 = vector.extract_strided_slice %195 {offsets = [0, 24], sizes = [9, 8], strides = [1, 1]} : vector<9x32xf32> to vector<9x8xf32>
    %244 = vector.extract_strided_slice %196 {offsets = [0, 24], sizes = [9, 8], strides = [1, 1]} : vector<9x32xf32> to vector<9x8xf32>
    %cst_72 = arith.constant dense<0.000000e+00> : vector<9x9xf32>
    %245 = tpu.matmul %242, %243, %cst_72 {dimension_numbers = #tpu.dot_dimension_numbers<[1], [1], [0], [0], [0, 0, 1, 0], [], []>} : vector<9x8xf32>, vector<9x8xf32>, vector<9x9xf32> -> vector<9x9xf32>
    %cst_73 = arith.constant dense<0xFF800000> : vector<9xf32>
    %246 = vector.multi_reduction <maximumf>, %245, %cst_73 [1] : vector<9x9xf32> to vector<9xf32>
    %247 = vector.shape_cast %246 : vector<9xf32> to vector<9x1xf32>
    %248 = vector.broadcast %247 : vector<9x1xf32> to vector<9x9xf32>
    %249 = arith.subf %245, %248 : vector<9x9xf32>
    %250 = math.exp %249 : vector<9x9xf32>
    %cst_74 = arith.constant dense<0.000000e+00> : vector<9xf32>
    %251 = vector.multi_reduction <add>, %250, %cst_74 [1] : vector<9x9xf32> to vector<9xf32>
    %252 = vector.shape_cast %251 : vector<9xf32> to vector<9x1xf32>
    %253 = tpu.reciprocal %252 {approx = true} : vector<9x1xf32> -> vector<9x1xf32>
    %254 = vector.broadcast %253 : vector<9x1xf32> to vector<9x9xf32>
    %255 = arith.mulf %250, %254 : vector<9x9xf32>
    %cst_75 = arith.constant dense<0.000000e+00> : vector<9x8xf32>
    %256 = tpu.matmul %255, %244, %cst_75 {dimension_numbers = #tpu.dot_dimension_numbers<[1], [0], [0], [1], [0, 0, 1, 1], [], []>} : vector<9x9xf32>, vector<9x8xf32>, vector<9x8xf32> -> vector<9x8xf32>
    %257 = tpu.concatenate %211, %226, %241, %256 in 1 : vector<9x8xf32>, vector<9x8xf32>, vector<9x8xf32>, vector<9x8xf32> -> vector<9x32xf32>
    %cst_76 = arith.constant dense<0.000000e+00> : vector<9x32xf32>
    %258 = tpu.matmul %257, %156, %cst_76 {dimension_numbers = #tpu.dot_dimension_numbers<[1], [0], [0], [1], [0, 0, 1, 1], [], []>} : vector<9x32xf32>, vector<32x32xf32>, vector<9x32xf32> -> vector<9x32xf32>
    %259 = arith.addf %152, %258 : vector<9x32xf32>
    %260 = vector.broadcast %166 : vector<1x32xf32> to vector<9x32xf32>
    %261 = arith.addf %259, %260 : vector<9x32xf32>
    %cst_77 = arith.constant dense<0.000000e+00> : vector<9xf32>
    %262 = vector.multi_reduction <add>, %261, %cst_77 [1] : vector<9x32xf32> to vector<9xf32>
    %263 = vector.shape_cast %262 : vector<9xf32> to vector<9x1xf32>
    %cst_78 = arith.constant 3.200000e+01 : f32
    %264 = vector.broadcast %cst_78 : f32 to vector<9x1xf32>
    %265 = arith.divf %263, %264 : vector<9x1xf32>
    %266 = vector.broadcast %265 : vector<9x1xf32> to vector<9x32xf32>
    %267 = arith.subf %261, %266 : vector<9x32xf32>
    %268 = arith.mulf %267, %267 : vector<9x32xf32>
    %cst_79 = arith.constant dense<0.000000e+00> : vector<9xf32>
    %269 = vector.multi_reduction <add>, %268, %cst_79 [1] : vector<9x32xf32> to vector<9xf32>
    %270 = vector.shape_cast %269 : vector<9xf32> to vector<9x1xf32>
    %cst_80 = arith.constant 3.200000e+01 : f32
    %271 = vector.broadcast %cst_80 : f32 to vector<9x1xf32>
    %272 = arith.divf %270, %271 : vector<9x1xf32>
    %273 = vector.broadcast %265 : vector<9x1xf32> to vector<9x32xf32>
    %274 = arith.subf %261, %273 : vector<9x32xf32>
    %cst_81 = arith.constant 9.99999974E-6 : f32
    %275 = vector.broadcast %cst_81 : f32 to vector<9x1xf32>
    %276 = arith.addf %272, %275 : vector<9x1xf32>
    %277 = math.rsqrt %276 : vector<9x1xf32>
    %278 = vector.broadcast %277 : vector<9x1xf32> to vector<9x32xf32>
    %279 = arith.mulf %274, %278 : vector<9x32xf32>
    %280 = vector.broadcast %164 : vector<1x32xf32> to vector<9x32xf32>
    %281 = arith.mulf %279, %280 : vector<9x32xf32>
    %282 = vector.broadcast %165 : vector<1x32xf32> to vector<9x32xf32>
    %283 = arith.addf %281, %282 : vector<9x32xf32>
    %cst_82 = arith.constant dense<0.000000e+00> : vector<9x64xf32>
    %284 = tpu.matmul %283, %157, %cst_82 {dimension_numbers = #tpu.dot_dimension_numbers<[1], [0], [0], [1], [0, 0, 1, 1], [], []>} : vector<9x32xf32>, vector<32x64xf32>, vector<9x64xf32> -> vector<9x64xf32>
    %285 = vector.broadcast %168 : vector<1x64xf32> to vector<9x64xf32>
    %286 = arith.addf %284, %285 : vector<9x64xf32>
    %cst_83 = arith.constant 5.000000e-01 : f32
    %287 = vector.broadcast %cst_83 : f32 to vector<9x64xf32>
    %288 = arith.mulf %287, %286 : vector<9x64xf32>
    %cst_84 = arith.constant 4.471500e-02 : f32
    %289 = vector.broadcast %cst_84 : f32 to vector<9x64xf32>
    %290 = arith.mulf %289, %286 : vector<9x64xf32>
    %291 = arith.mulf %290, %286 : vector<9x64xf32>
    %292 = arith.mulf %291, %286 : vector<9x64xf32>
    %293 = arith.addf %286, %292 : vector<9x64xf32>
    %cst_85 = arith.constant 0.797884583 : f32
    %294 = vector.broadcast %cst_85 : f32 to vector<9x64xf32>
    %295 = arith.mulf %294, %293 : vector<9x64xf32>
    %296 = math.tanh %295 : vector<9x64xf32>
    %cst_86 = arith.constant 1.000000e+00 : f32
    %297 = vector.broadcast %cst_86 : f32 to vector<9x64xf32>
    %298 = arith.addf %297, %296 : vector<9x64xf32>
    %299 = arith.mulf %288, %298 : vector<9x64xf32>
    %cst_87 = arith.constant dense<0.000000e+00> : vector<9x32xf32>
    %300 = tpu.matmul %299, %159, %cst_87 {dimension_numbers = #tpu.dot_dimension_numbers<[1], [0], [0], [1], [0, 0, 1, 1], [], []>} : vector<9x64xf32>, vector<64x32xf32>, vector<9x32xf32> -> vector<9x32xf32>
    %301 = arith.addf %261, %300 : vector<9x32xf32>
    %302 = vector.broadcast %167 : vector<1x32xf32> to vector<9x32xf32>
    %303 = arith.addf %301, %302 : vector<9x32xf32>
    %c0_88 = arith.constant 0 : index
    %c0_89 = arith.constant 0 : index
    %c0_90 = arith.constant 0 : index
    %304 = vector.load %arg4[%c0_88, %c0_89, %c0_90] : memref<2x8x64xf32, #tpu.memory_space<vmem>>, vector<1x8x64xf32>
    %305 = vector.shape_cast %304 : vector<1x8x64xf32> to vector<8x64xf32>
    %306 = vector.extract_strided_slice %305 {offsets = [7, 0], sizes = [1, 64], strides = [1, 1]} : vector<8x64xf32> to vector<1x64xf32>
    %307 = vector.extract_strided_slice %303 {offsets = [0, 0], sizes = [1, 32], strides = [1, 1]} : vector<9x32xf32> to vector<1x32xf32>
    %308 = vector.extract_strided_slice %306 {offsets = [0, 0], sizes = [1, 32], strides = [1, 1]} : vector<1x64xf32> to vector<1x32xf32>
    %309 = arith.mulf %307, %308 : vector<1x32xf32>
    %cst_91 = arith.constant dense<0.000000e+00> : vector<1xf32>
    %310 = vector.multi_reduction <add>, %309, %cst_91 [1] : vector<1x32xf32> to vector<1xf32>
    %311 = vector.shape_cast %310 : vector<1xf32> to vector<1x1xf32>
    %312 = vector.extract_strided_slice %306 {offsets = [0, 32], sizes = [1, 1], strides = [1, 1]} : vector<1x64xf32> to vector<1x1xf32>
    %313 = arith.addf %311, %312 : vector<1x1xf32>
    %c0_92 = arith.constant 0 : index
    %c0_93 = arith.constant 0 : index
    %c0_94 = arith.constant 0 : index
    %314 = vector.load %arg5[%c0_92, %c0_93, %c0_94] : memref<1x1x1xf32, #tpu.memory_space<vmem>>, vector<1x1x1xf32>
    %315 = vector.shape_cast %314 : vector<1x1x1xf32> to vector<1x1xf32>
    %316 = vector.shape_cast %313 : vector<1x1xf32> to vector<1x1x1xf32>
    tpu.vector_store %arg5[%c0_92, %c0_93, %c0_94], %316 {strides = array<i32>} : memref<1x1x1xf32, #tpu.memory_space<vmem>>, vector<1x1x1xf32>,
    return
  }
  func.func @transform_0(%arg0: i32) -> (i32, i32, i32) {
    %c0_i32 = arith.constant 0 : i32
    %c0_i32_0 = arith.constant 0 : i32
    %c0_i32_1 = arith.constant 0 : i32
    return %arg0, %c0_i32, %c0_i32_0 : i32, i32, i32
  }
  func.func @transform_1(%arg0: i32) -> (i32, i32, i32) {
    %c0_i32 = arith.constant 0 : i32
    %c0_i32_0 = arith.constant 0 : i32
    %c0_i32_1 = arith.constant 0 : i32
    %c0_i32_2 = arith.constant 0 : i32
    return %c0_i32, %c0_i32_0, %c0_i32_1 : i32, i32, i32
  }
  func.func @transform_2(%arg0: i32) -> (i32, i32, i32) {
    %c0_i32 = arith.constant 0 : i32
    %c0_i32_0 = arith.constant 0 : i32
    %c0_i32_1 = arith.constant 0 : i32
    %c0_i32_2 = arith.constant 0 : i32
    return %c0_i32, %c0_i32_0, %c0_i32_1 : i32, i32, i32
  }
  func.func @transform_3(%arg0: i32) -> (i32, i32, i32) {
    %c0_i32 = arith.constant 0 : i32
    %c0_i32_0 = arith.constant 0 : i32
    %c0_i32_1 = arith.constant 0 : i32
    %c0_i32_2 = arith.constant 0 : i32
    return %c0_i32, %c0_i32_0, %c0_i32_1 : i32, i32, i32
  }
  func.func @transform_4(%arg0: i32) -> (i32, i32, i32) {
    %c0_i32 = arith.constant 0 : i32
    %c0_i32_0 = arith.constant 0 : i32
    %c0_i32_1 = arith.constant 0 : i32
    return %arg0, %c0_i32, %c0_i32_0 : i32, i32, i32
  }
}

</mosaic_0001>

<llo_original>
// kernel: tpu_custom_call.1
$region0: #{tpu_custom_call.1}
  #allocation0 [shape = 'u32[]', space=smem, size = 0x4, offset = 0x4, fixed_abs, tag = 'smem constant byte address 0x4 - core index']
  #allocation1 [shape = 'u32[144,128]{1,0:T(1,128)}', space=vmem, size = 0x12000, scoped, tag = 'internal scratch']
  %s0 = inlined_call_operand.vmem [shape: f32[2,9,32], index: 0, kind: input, shape index: {}]
  %s1 = inlined_call_operand.vmem [shape: f32[2,32,192], index: 1, kind: input, shape index: {}]
  %s2 = inlined_call_operand.vmem [shape: f32[2,64,32], index: 2, kind: input, shape index: {}]
  %s3 = inlined_call_operand.vmem [shape: f32[2,8,64], index: 3, kind: input, shape index: {}]
  %s4 = inlined_call_operand.vmem [shape: f32[2,1,1], index: 4, kind: output, shape index: {}]
  %s5 = sld [smem:[#allocation0]]
  $region49: #{tpu_custom_call.1} parent=0
    _
  %s7 = ssub.s32 1, %s5
  %s8 = scalar_select 0, %s7, %s5
  loop: start=0, step=1, limit=4
  $region2: #{tpu_custom_call.1} parent=0 // loop_pre_header
    _
  $region3: #{tpu_custom_call.1} parent=0 // loop_header
    %s10 = sphi 0, %s14
    %p11 = scmp.ge.s32.totalorder %s10, 4
    %s20 = sphi 0, %s22
    %s23 = sphi 0, %s20
    %s24 = sphi 0, %s23
    %s40 = sphi 0, %s24
    %s44 = sphi 0, %s44
    %s46 = sphi 0, %s44
    %s47 = sphi 0, %s46
    %s61 = sphi 0, %s47
    %s65 = sphi 0, %s65
    %s67 = sphi 0, %s65
    %s68 = sphi 0, %s67
    %s82 = sphi 0, %s68
    %s86 = sphi 0, %s86
    %s88 = sphi 0, %s86
    %s89 = sphi 0, %s88
    %s103 = sphi 0, %s89
    %s109 = sphi 0, %s111
    %s112 = sphi 0, %s109
    %s113 = sphi 0, %s112
    %s129 = sphi 0, %s113
  $region4: #{tpu_custom_call.1} parent=0 // loop_header_branch
    %13 = sbr.rel (%p11) target = $region8
  $region5: #{tpu_custom_call.1} parent=0 // loop_body
    %s15 = ssub.s32 %s10, 1
    %s16 = ssub.s32 %s10, 2
    %s17 = sadd.s32 %s10, 1
    %s18 = ssub.s32 %s10, %s17
    %p19 = scmp.eq.s32.totalorder %s18, 0
    %s21 = sadd.s32 %s20, 1
    %s22 = scalar_select %p19, %s20, %s21
    %p25 = pneg %p19
    %p26 = scmp.eq.s32.totalorder %s10, 1
    %p27 = por %p25, %p26
    %p28 = scmp.ne.s32.totalorder %s20, %s23
    %p29 = scmp.eq.s32.totalorder %s10, 0
    %p30 = por %p28, %p29
    %p31 = scmp.ne.s32.totalorder %s20, %s23
    %p32 = scmp.eq.s32.totalorder %s15, 1
    %p33 = por %p31, %p32
    %p34 = scmp.ne.s32.totalorder %s23, %s24
    %p35 = scmp.eq.s32.totalorder %s15, 0
    %p36 = por %p34, %p35
    %p37 = scmp.ne.s32.totalorder %s23, %s24
    %p38 = scmp.eq.s32.totalorder %s16, 1
    %p39 = por %p37, %p38
    %p41 = scmp.ne.s32.totalorder %s24, %s40
    %p42 = scmp.eq.s32.totalorder %s16, 0
    %p43 = por %p41, %p42
    %s45 = sadd.s32 %s44, 1
    %p48 = scmp.eq.s32.totalorder %s10, 1
    %p49 = scmp.ne.s32.totalorder %s44, %s46
    %p50 = scmp.eq.s32.totalorder %s10, 0
    %p51 = por %p49, %p50
    %p52 = scmp.ne.s32.totalorder %s44, %s46
    %p53 = scmp.eq.s32.totalorder %s15, 1
    %p54 = por %p52, %p53
    %p55 = scmp.ne.s32.totalorder %s46, %s47
    %p56 = scmp.eq.s32.totalorder %s15, 0
    %p57 = por %p55, %p56
    %p58 = scmp.ne.s32.totalorder %s46, %s47
    %p59 = scmp.eq.s32.totalorder %s16, 1
    %p60 = por %p58, %p59
    %p62 = scmp.ne.s32.totalorder %s47, %s61
    %p63 = scmp.eq.s32.totalorder %s16, 0
    %p64 = por %p62, %p63
    %s66 = sadd.s32 %s65, 1
    %p69 = scmp.eq.s32.totalorder %s10, 1
    %p70 = scmp.ne.s32.totalorder %s65, %s67
    %p71 = scmp.eq.s32.totalorder %s10, 0
    %p72 = por %p70, %p71
    %p73 = scmp.ne.s32.totalorder %s65, %s67
    %p74 = scmp.eq.s32.totalorder %s15, 1
    %p75 = por %p73, %p74
    %p76 = scmp.ne.s32.totalorder %s67, %s68
    %p77 = scmp.eq.s32.totalorder %s15, 0
    %p78 = por %p76, %p77
    %p79 = scmp.ne.s32.totalorder %s67, %s68
    %p80 = scmp.eq.s32.totalorder %s16, 1
    %p81 = por %p79, %p80
    %p83 = scmp.ne.s32.totalorder %s68, %s82
    %p84 = scmp.eq.s32.totalorder %s16, 0
    %p85 = por %p83, %p84
    %s87 = sadd.s32 %s86, 1
    %p90 = scmp.eq.s32.totalorder %s10, 1
    %p91 = scmp.ne.s32.totalorder %s86, %s88
    %p92 = scmp.eq.s32.totalorder %s10, 0
    %p93 = por %p91, %p92
    %p94 = scmp.ne.s32.totalorder %s86, %s88
    %p95 = scmp.eq.s32.totalorder %s15, 1
    %p96 = por %p94, %p95
    %p97 = scmp.ne.s32.totalorder %s88, %s89
    %p98 = scmp.eq.s32.totalorder %s15, 0
    %p99 = por %p97, %p98
    %p100 = scmp.ne.s32.totalorder %s88, %s89
    %p101 = scmp.eq.s32.totalorder %s16, 1
    %p102 = por %p100, %p101
    %p104 = scmp.ne.s32.totalorder %s89, %s103
    %p105 = scmp.eq.s32.totalorder %s16, 0
    %p106 = por %p104, %p105
    %s107 = ssub.s32 %s10, %s17
    %p108 = scmp.eq.s32.totalorder %s107, 0
    %s110 = sadd.s32 %s109, 1
    %s111 = scalar_select %p108, %s109, %s110
    %p114 = pneg %p108
    %p115 = scmp.eq.s32.totalorder %s10, 1
    %p116 = por %p114, %p115
    %p117 = scmp.ne.s32.totalorder %s109, %s112
    %p118 = scmp.eq.s32.totalorder %s10, 0
    %p119 = por %p117, %p118
    %p120 = scmp.ne.s32.totalorder %s109, %s112
    %p121 = scmp.eq.s32.totalorder %s15, 1
    %p122 = por %p120, %p121
    %p123 = scmp.ne.s32.totalorder %s112, %s113
    %p124 = scmp.eq.s32.totalorder %s15, 0
    %p125 = por %p123, %p124
    %p126 = scmp.ne.s32.totalorder %s112, %s113
    %p127 = scmp.eq.s32.totalorder %s16, 1
    %p128 = por %p126, %p127
    %p130 = scmp.ne.s32.totalorder %s113, %s129
    %p131 = scmp.eq.s32.totalorder %s16, 0
    %p132 = por %p130, %p131
    %p133 = scmp.le.s32.totalorder 1, %s10
    %p134 = scmp.lt.s32.totalorder %s10, 3
    %p135 = pnand %p133, %p134
    %p136 = pneg %p135
    // Predicated region
    $region9: #{tpu_custom_call.1} parent=5 // pred_check
      _
    $region10: #{tpu_custom_call.1} parent=5 // pred_check_branch
      %138 = sbr.rel (%p135) target = $region12
    $region11: #{tpu_custom_call.1} parent=5 // pred_region
      %s139 = ssub.s32 %s10, 1
      // Predicated region
      $region13: #{tpu_custom_call.1} parent=11 // pred_check
        %p140 = pneg %p57
      $region14: #{tpu_custom_call.1} parent=11 // pred_check_branch
        %142 = sbr.rel (%p140) target = $region16
      $region15: #{tpu_custom_call.1} parent=11 // pred_region
        _
      $region16: #{tpu_custom_call.1} parent=11 // pred_fallthru
        _
      // Predicated region
      $region17: #{tpu_custom_call.1} parent=11 // pred_check
        %p143 = pneg %p78
      $region18: #{tpu_custom_call.1} parent=11 // pred_check_branch
        %145 = sbr.rel (%p143) target = $region20
      $region19: #{tpu_custom_call.1} parent=11 // pred_region
        _
      $region20: #{tpu_custom_call.1} parent=11 // pred_fallthru
        _
      // Predicated region
      $region21: #{tpu_custom_call.1} parent=11 // pred_check
        %p146 = pneg %p99
      $region22: #{tpu_custom_call.1} parent=11 // pred_check_branch
        %148 = sbr.rel (%p146) target = $region24
      $region23: #{tpu_custom_call.1} parent=11 // pred_region
        _
      $region24: #{tpu_custom_call.1} parent=11 // pred_fallthru
        _
    $region12: #{tpu_custom_call.1} parent=5 // pred_fallthru
      _
    %p149 = scmp.lt.s32.totalorder %s10, 2
    // Predicated region
    $region25: #{tpu_custom_call.1} parent=5 // pred_check
      %p150 = pneg %p149
    $region26: #{tpu_custom_call.1} parent=5 // pred_check_branch
      %152 = sbr.rel (%p150) target = $region28
    $region27: #{tpu_custom_call.1} parent=5 // pred_region
      // Predicated region
      $region29: #{tpu_custom_call.1} parent=27 // pred_check
        %p153 = pneg %p30
      $region30: #{tpu_custom_call.1} parent=27 // pred_check_branch
        %155 = sbr.rel (%p153) target = $region32
      $region31: #{tpu_custom_call.1} parent=27 // pred_region
        %p156 = scmp.lt.s32.totalorder %s10, 1
        %s157 = scalar_select %p156, %s10, 1
        %s158 = smul.addr %s157, 2
        %s159 = smul.addr %s158, 8
        %s160 = scalar_lea.vmem %s0, %s159
      $region32: #{tpu_custom_call.1} parent=27 // pred_fallthru
        _
    $region28: #{tpu_custom_call.1} parent=5 // pred_fallthru
      _
    %p161 = scmp.le.s32.totalorder 1, %s10
    %p162 = scmp.lt.s32.totalorder %s10, 3
    %p163 = pnand %p161, %p162
    %p164 = pneg %p163
    // Predicated region
    $region33: #{tpu_custom_call.1} parent=5 // pred_check
      _
    $region34: #{tpu_custom_call.1} parent=5 // pred_check_branch
      %166 = sbr.rel (%p163) target = $region36
    $region35: #{tpu_custom_call.1} parent=5 // pred_region
      %s167 = ssub.s32 %s10, 1
      %p168 = scmp.lt.s32.totalorder %s15, 1
      %s169 = scalar_select %p168, %s15, 1
      %s170 = smul.addr %s169, 2
      %s171 = smul.addr %s170, 8
      %s172 = scalar_lea.vmem %s0, %s171
      %p173 = pneg %p36
      %p174 = pneg %p33
      %p175 = pneg %p57
      %p176 = pneg %p54
      %p177 = pneg %p78
      %p178 = pneg %p75
      %p179 = pneg %p99
      %p180 = pneg %p96
      %p181 = pneg %p125
      %p182 = pneg %p122
      %p183 = scmp.lt.s32.totalorder %s15, 1
      %s184 = scalar_select %p183, %s15, 1
      %s185 = scalar_lea.vmem %s4, %s184
      %p186 = scmp.lt.s32.totalorder %s15, 1
      %s187 = scalar_select %p186, %s15, 1
      %s188 = smul.addr %s187, 2
      %s189 = smul.addr %s188, 8
      %s190 = scalar_lea.vmem %s0, %s189
      %p191 = scmp.lt.s32.totalorder %s15, 1
      %s192 = scalar_select %p191, %s15, 1
      %s193 = scalar_lea.vmem %s4, %s192
      %v194 = vld [vmem:[%s190] sm:$0xff]
      %v195 = vld [vmem:[%s190 + $0x8] sm:$0x1]
      %v196 = vld [vmem:[%s1] sm:$0xff]
      %v197 = vld [vmem:[%s1 + $0x8] sm:$0xff]
      %v198 = vld [vmem:[%s1 + $0x10] sm:$0xff]
      %v199 = vld [vmem:[%s1 + $0x18] sm:$0xff]
      %v200 = vld [vmem:[%s1 + $0x20] sm:$0xff]
      %v201 = vld [vmem:[%s1 + $0x28] sm:$0xff]
      %v202 = vld [vmem:[%s1 + $0x30] sm:$0xff]
      %v203 = vld [vmem:[%s1 + $0x38] sm:$0xff]
      %v204 = vld [vmem:[%s2] sm:$0xff]
      %v205 = vld [vmem:[%s2 + $0x8] sm:$0xff]
      %v206 = vld [vmem:[%s2 + $0x10] sm:$0xff]
      %v207 = vld [vmem:[%s2 + $0x18] sm:$0xff]
      %v208 = vld [vmem:[%s2 + $0x20] sm:$0xff]
      %v209 = vld [vmem:[%s2 + $0x28] sm:$0xff]
      %v210 = vld [vmem:[%s2 + $0x30] sm:$0xff]
      %v211 = vld [vmem:[%s2 + $0x38] sm:$0xff]
      %v212 = vld [vmem:[%s3] sm:$0xff]
      %vm213 = vcmask 261120
      %v214 = vsel %vm213, %v194, 0.0
      %215 = vadd.xlane.f32.xlu0 %v214
      %v216 = vpop.xlane.xlu0 %215
      %vm217 = vcmask 253952
      %v218 = vsel %vm217, %v195, 0.0
      %219 = vadd.xlane.f32.xlu0 %v218
      %v220 = vpop.xlane.xlu0 %219
      %v221 = vrcp.pop 32.0
      %v222 = vmul.f32 %v216, %v221
      %v223 = vmul.f32 %v220, %v221
      %v224 = vsub.f32 %v194, %v222
      %v225 = vsub.f32 %v195, %v223
      %v226 = vmul.f32 %v224, %v224
      %v227 = vmul.f32 %v225, %v225
      %v228 = vsel %vm213, %v226, 0.0
      %229 = vadd.xlane.f32.xlu0 %v228
      %v230 = vpop.xlane.xlu0 %229
      %v231 = vsel %vm217, %v227, 0.0
      %232 = vadd.xlane.f32.xlu0 %v231
      %v233 = vpop.xlane.xlu0 %232
      %v234 = vmul.f32 %v230, %v221
      %v235 = vmul.f32 %v233, %v221
      %v236 = vadd.f32 %v234, 1e-05
      %v237 = vadd.f32 %v235, 1e-05
      %v238 = vrsqrt.pop %v236
      %v239 = vrsqrt.pop %v237
      %v240 = vmul.f32 %v224, %v238
      %v241 = vmul.f32 %v225, %v239
      %v242 = vlaneseq
      %v243 = vshrl.u32 %v242, 7
      %v244 = vsub.s32 0, %v243
      %v245 = vrot.slane %v212, %v244
      %v246 = vmul.f32 %v240, %v245
      %v247 = vmul.f32 %v241, %v245
      %v248 = vlaneseq
      %v249 = vshrl.u32 %v248, 7
      %v250 = vsub.s32 1, %v249
      %v251 = vrot.slane %v212, %v250
      %v252 = vadd.f32 %v246, %v251
      %v253 = vadd.f32 %v247, %v251
      %v255 = vsel %vm213, %v252, 0
      %v258 = vsel %vm213, %v253, 0
      %260 = vmatprep.subr.mxu0 0.0
      %261 = vmatpush1.msra.mxu0 %v196
      %262 = vmatprep.subr.mxu0 0.0
      %263 = vmatpush1.msra.mxu0 %v198
      %264 = vmatprep.subr.mxu0 0.0
      %265 = vmatpush1.msra.mxu0 %v200
      %266 = vmatprep.subr.mxu0 0.0
      %267 = vmatpush1.msra.mxu0 %v202
      %268 = vmatprep.subr.mxu0 0.0
      %269 = vmatpush1.msra.mxu0 0.0
      %270 = vmatprep.subr.mxu0 0.0
      %271 = vmatpush1.msra.mxu0 0.0
      %272 = vmatprep.subr.mxu0 0.0
      %273 = vmatpush1.msra.mxu0 0.0
      %274 = vmatprep.subr.mxu0 0.0
      %275 = vmatpush1.msra.mxu0 0.0
      %276 = vmatprep.subr.mxu0 0.0
      %277 = vmatpush1.msra.mxu0 0.0
      %278 = vmatprep.subr.mxu0 0.0
      %279 = vmatpush1.msra.mxu0 0.0
      %280 = vmatprep.subr.mxu0 0.0
      %281 = vmatpush1.msra.mxu0 0.0
      %282 = vmatprep.subr.mxu0 0.0
      %283 = vmatpush1.msra.mxu0 0.0
      %284 = vmatprep.subr.mxu0 0.0
      %285 = vmatpush1.msra.mxu0 0.0
      %286 = vmatprep.subr.mxu0 0.0
      %287 = vmatpush1.msra.mxu0 0.0
      %288 = vmatprep.subr.mxu0 0.0
      %289 = vmatpush1.msra.mxu0 0.0
      %290 = vmatprep.subr.mxu0 0.0
      %291 = vmatpush1.msra.mxu0 0.0
      %292 = vmatprep.subr.mxu0 0.0
      %293 = vmatpush1.msra.mxu0 0.0
      %294 = vmatprep.subr.mxu0 0.0
      %295 = vmatpush1.msra.mxu0 0.0
      %296 = vmatprep.subr.mxu0 0.0
      %297 = vmatpush1.msra.mxu0 0.0
      %298 = vmatprep.subr.mxu0 0.0
      %299 = vmatpush1.msra.mxu0 0.0
      %300 = vmatprep.subr.mxu0 0.0
      %301 = vmatpush1.msra.mxu0 0.0
      %302 = vmatprep.subr.mxu0 0.0
      %303 = vmatpush1.msra.mxu0 0.0
      %304 = vmatprep.subr.mxu0 0.0
      %305 = vmatpush1.msra.mxu0 0.0
      %306 = vmatprep.subr.mxu0 0.0
      %307 = vmatpush1.msra.mxu0 0.0
      %308 = vmatprep.subr.mxu0 0.0
      %309 = vmatpush1.msra.mxu0 0.0
      %310 = vmatprep.subr.mxu0 0.0
      %311 = vmatpush1.msra.mxu0 0.0
      %312 = vmatprep.subr.mxu0 0.0
      %313 = vmatpush1.msra.mxu0 0.0
      %314 = vmatprep.subr.mxu0 0.0
      %315 = vmatpush1.msra.mxu0 0.0
      %316 = vmatprep.subr.mxu0 0.0
      %317 = vmatpush1.msra.mxu0 0.0
      %318 = vmatprep.subr.mxu0 0.0
      %319 = vmatpush1.msra.mxu0 0.0
      %320 = vmatprep.subr.mxu0 0.0
      %321 = vmatpush1.msra.mxu0 0.0
      %322 = vmatprep.subr.mxu0 0.0
      %323 = vmatpush1.msra.mxu0 0.0
      %324 = vmatprep.mubr.f32.mxu0 0.0
      %325 = vmatmul.mubr.f32.gmra.mrb[0].mxu0 %v255
      %v326 = vpop.f32.mrb[0].mxu0
      %v327 = vadd.f32 0.0, %v326
      %v328 = vpop.f32.mrb[0].mxu0
      %329 = vmatprep.mubr.f32.mxu0 0.0
      %330 = vmatmul.mubr.f32.gmra.mrb[0].mxu0 %v258
      %v331 = vpop.f32.mrb[0].mxu0
      %v332 = vadd.f32 0.0, %v331
      %v333 = vpop.f32.mrb[0].mxu0
      %334 = vdwg.mxu0
      %v335 = vmul.f32 %v327, 0.35355338
      %v336 = vmul.f32 %v332, 0.35355338
      %339 = vrot.lane.b32.xlu0 %v327, 96
      %v340 = vpop.permute.xlu0 %339
      %341 = vrot.lane.b32.xlu0 %v332, 96
      %v342 = vpop.permute.xlu0 %341
      %vm343 = vcmask 64512
      %v345 = vsel %vm343, %v335, 0
      %v348 = vsel %vm343, %v336, 0
      %v350 = vsel %vm343, %v340, 0
      %v352 = vsel %vm343, %v342, 0
      %354 = vmatprep.subr.mxu0 0.0
      %355 = vmatpush1.xpose.msra.mxu0 %v350
      %356 = vmatprep.subr.mxu0 0.0
      %357 = vmatpush1.xpose.msra.mxu0 %v352
      %358 = vmatprep.subr.mxu0 0.0
      %359 = vmatpush1.xpose.msra.mxu0 0.0
      %360 = vmatprep.subr.mxu0 0.0
      %361 = vmatpush1.xpose.msra.mxu0 0.0
      %362 = vmatprep.subr.mxu0 0.0
      %363 = vmatpush1.xpose.msra.mxu0 0.0
      %364 = vmatprep.subr.mxu0 0.0
      %365 = vmatpush1.xpose.msra.mxu0 0.0
      %366 = vmatprep.subr.mxu0 0.0
      %367 = vmatpush1.xpose.msra.mxu0 0.0
      %368 = vmatprep.subr.mxu0 0.0
      %369 = vmatpush1.xpose.msra.mxu0 0.0
      %370 = vmatprep.subr.mxu0 0.0
      %371 = vmatpush1.xpose.msra.mxu0 0.0
      %372 = vmatprep.subr.mxu0 0.0
      %373 = vmatpush1.xpose.msra.mxu0 0.0
      %374 = vmatprep.subr.mxu0 0.0
      %375 = vmatpush1.xpose.msra.mxu0 0.0
      %376 = vmatprep.subr.mxu0 0.0
      %377 = vmatpush1.xpose.msra.mxu0 0.0
      %378 = vmatprep.subr.mxu0 0.0
      %379 = vmatpush1.xpose.msra.mxu0 0.0
      %380 = vmatprep.subr.mxu0 0.0
      %381 = vmatpush1.xpose.msra.mxu0 0.0
      %382 = vmatprep.subr.mxu0 0.0
      %383 = vmatpush1.xpose.msra.mxu0 0.0
      %384 = vmatprep.subr.mxu0 0.0
      %385 = vmatpush1.xpose.msra.mxu0 0.0
      %386 = vmatprep.subr.mxu0 0.0
      %387 = vmatpush1.xpose.msra.mxu0 0.0
      %388 = vmatprep.subr.mxu0 0.0
      %389 = vmatpush1.xpose.msra.mxu0 0.0
      %390 = vmatprep.subr.mxu0 0.0
      %391 = vmatpush1.xpose.msra.mxu0 0.0
      %392 = vmatprep.subr.mxu0 0.0
      %393 = vmatpush1.xpose.msra.mxu0 0.0
      %394 = vmatprep.subr.mxu0 0.0
      %395 = vmatpush1.xpose.msra.mxu0 0.0
      %396 = vmatprep.subr.mxu0 0.0
      %397 = vmatpush1.xpose.msra.mxu0 0.0
      %398 = vmatprep.subr.mxu0 0.0
      %399 = vmatpush1.xpose.msra.mxu0 0.0
      %400 = vmatprep.subr.mxu0 0.0
      %401 = vmatpush1.xpose.msra.mxu0 0.0
      %402 = vmatprep.subr.mxu0 0.0
      %403 = vmatpush1.xpose.msra.mxu0 0.0
      %404 = vmatprep.subr.mxu0 0.0
      %405 = vmatpush1.xpose.msra.mxu0 0.0
      %406 = vmatprep.subr.mxu0 0.0
      %407 = vmatpush1.xpose.msra.mxu0 0.0
      %408 = vmatprep.subr.mxu0 0.0
      %409 = vmatpush1.xpose.msra.mxu0 0.0
      %410 = vmatprep.subr.mxu0 0.0
      %411 = vmatpush1.xpose.msra.mxu0 0.0
      %412 = vmatprep.subr.mxu0 0.0
      %413 = vmatpush1.xpose.msra.mxu0 0.0
      %414 = vmatprep.subr.mxu0 0.0
      %415 = vmatpush1.xpose.msra.mxu0 0.0
      %416 = vmatprep.subr.mxu0 0.0
      %417 = vmatpush1.xpose.msra.mxu0 0.0
      %418 = vmatprep.mubr.f32.mxu0 0.0
      %419 = vmatmul.mubr.f32.gmra.mrb[0].mxu0 %v345
      %v420 = vpop.f32.mrb[0].mxu0
      %v421 = vadd.f32 0.0, %v420
      %v422 = vpop.f32.mrb[0].mxu0
      %423 = vmatprep.mubr.f32.mxu0 0.0
      %424 = vmatmul.mubr.f32.gmra.mrb[0].mxu0 %v348
      %v425 = vpop.f32.mrb[0].mxu0
      %v426 = vadd.f32 0.0, %v425
      %v427 = vpop.f32.mrb[0].mxu0
      %428 = vdwg.mxu0
      %vm429 = vcmask 72704
      %v430 = vsel %vm429, %v421, -inf
      %431 = vmax.xlane.f32.xlu0 %v430
      %v432 = vpop.xlane.xlu0 %431
      %vm433 = vcmask 65536
      %v434 = vsel %vm433, %v426, -inf
      %435 = vmax.xlane.f32.xlu0 %v434
      %v436 = vpop.xlane.xlu0 %435
      %v437 = vsub.f32 %v421, %v432
      %v438 = vsub.f32 %v426, %v436
      %v439 = vmul.f32 %v437, 1.442695
      %v440 = vpow.pop %v439
      %v441 = vmul.f32 %v438, 1.442695
      %v442 = vpow.pop %v441
      %v443 = vsel %vm429, %v440, 0.0
      %444 = vadd.xlane.f32.xlu0 %v443
      %v445 = vpop.xlane.xlu0 %444
      %v446 = vsel %vm433, %v442, 0.0
      %447 = vadd.xlane.f32.xlu0 %v446
      %v448 = vpop.xlane.xlu0 %447
      %v449 = vrcp.pop %v445
      %v450 = vrcp.pop %v448
      %v451 = vmul.f32 %v440, %v449
      %v452 = vmul.f32 %v442, %v450
      %453 = vrot.lane.b32.xlu0 %v327, 64
      %v454 = vpop.permute.xlu0 %453
      %455 = vrot.lane.b32.xlu0 %v332, 64
      %v456 = vpop.permute.xlu0 %455
      %v459 = vsel %vm429, %v451, 0
      %v462 = vsel %vm429, %v452, 0
      %vm464 = vcmask 1040384
      %v465 = vsel %vm464, %v456, 0
      %467 = vmatprep.subr.mxu0 0.0
      %468 = vmatpush1.msra.mxu0 %v454
      %469 = vmatprep.subr.mxu0 0.0
      %470 = vmatpush1.msra.mxu0 %v465
      %471 = vmatprep.subr.mxu0 0.0
      %472 = vmatpush1.msra.mxu0 0.0
      %473 = vmatprep.subr.mxu0 0.0
      %474 = vmatpush1.msra.mxu0 0.0
      %475 = vmatprep.subr.mxu0 0.0
      %476 = vmatpush1.msra.mxu0 0.0
      %477 = vmatprep.subr.mxu0 0.0
      %478 = vmatpush1.msra.mxu0 0.0
      %479 = vmatprep.subr.mxu0 0.0
      %480 = vmatpush1.msra.mxu0 0.0
      %481 = vmatprep.subr.mxu0 0.0
      %482 = vmatpush1.msra.mxu0 0.0
      %483 = vmatprep.subr.mxu0 0.0
      %484 = vmatpush1.msra.mxu0 0.0
      %485 = vmatprep.subr.mxu0 0.0
      %486 = vmatpush1.msra.mxu0 0.0
      %487 = vmatprep.subr.mxu0 0.0
      %488 = vmatpush1.msra.mxu0 0.0
      %489 = vmatprep.subr.mxu0 0.0
      %490 = vmatpush1.msra.mxu0 0.0
      %491 = vmatprep.subr.mxu0 0.0
      %492 = vmatpush1.msra.mxu0 0.0
      %493 = vmatprep.subr.mxu0 0.0
      %494 = vmatpush1.msra.mxu0 0.0
      %495 = vmatprep.subr.mxu0 0.0
      %496 = vmatpush1.msra.mxu0 0.0
      %497 = vmatprep.subr.mxu0 0.0
      %498 = vmatpush1.msra.mxu0 0.0
      %499 = vmatprep.subr.mxu0 0.0
      %500 = vmatpush1.msra.mxu0 0.0
      %501 = vmatprep.subr.mxu0 0.0
      %502 = vmatpush1.msra.mxu0 0.0
      %503 = vmatprep.subr.mxu0 0.0
      %504 = vmatpush1.msra.mxu0 0.0
      %505 = vmatprep.subr.mxu0 0.0
      %506 = vmatpush1.msra.mxu0 0.0
      %507 = vmatprep.subr.mxu0 0.0
      %508 = vmatpush1.msra.mxu0 0.0
      %509 = vmatprep.subr.mxu0 0.0
      %510 = vmatpush1.msra.mxu0 0.0
      %511 = vmatprep.subr.mxu0 0.0
      %512 = vmatpush1.msra.mxu0 0.0
      %513 = vmatprep.subr.mxu0 0.0
      %514 = vmatpush1.msra.mxu0 0.0
      %515 = vmatprep.subr.mxu0 0.0
      %516 = vmatpush1.msra.mxu0 0.0
      %517 = vmatprep.subr.mxu0 0.0
      %518 = vmatpush1.msra.mxu0 0.0
      %519 = vmatprep.subr.mxu0 0.0
      %520 = vmatpush1.msra.mxu0 0.0
      %521 = vmatprep.subr.mxu0 0.0
      %522 = vmatpush1.msra.mxu0 0.0
      %523 = vmatprep.subr.mxu0 0.0
      %524 = vmatpush1.msra.mxu0 0.0
      %525 = vmatprep.subr.mxu0 0.0
      %526 = vmatpush1.msra.mxu0 0.0
      %527 = vmatprep.subr.mxu0 0.0
      %528 = vmatpush1.msra.mxu0 0.0
      %529 = vmatprep.subr.mxu0 0.0
      %530 = vmatpush1.msra.mxu0 0.0
      %531 = vmatprep.mubr.f32.mxu0 0.0
      %532 = vmatmul.mubr.f32.gmra.mrb[0].mxu0 %v459
      %v533 = vpop.f32.mrb[0].mxu0
      %v534 = vadd.f32 0.0, %v533
      %v535 = vpop.f32.mrb[0].mxu0
      %536 = vmatprep.mubr.f32.mxu0 0.0
      %537 = vmatmul.mubr.f32.gmra.mrb[0].mxu0 %v462
      %v538 = vpop.f32.mrb[0].mxu0
      %v539 = vadd.f32 0.0, %v538
      %v540 = vpop.f32.mrb[0].mxu0
      %541 = vdwg.mxu0
      %542 = vrot.lane.b32.xlu0 %v335, 120
      %v543 = vpop.permute.xlu0 %542
      %544 = vrot.lane.b32.xlu0 %v336, 120
      %v545 = vpop.permute.xlu0 %544
      %546 = vrot.lane.b32.xlu0 %v327, 88
      %v547 = vpop.permute.xlu0 %546
      %548 = vrot.lane.b32.xlu0 %v332, 88
      %v549 = vpop.permute.xlu0 %548
      %v550 = vsel %vm343, %v543, 0
      %v552 = vsel %vm343, %v545, 0
      %v554 = vsel %vm343, %v547, 0
      %v556 = vsel %vm343, %v549, 0
      %558 = vmatprep.subr.mxu0 0.0
      %559 = vmatpush1.xpose.msra.mxu0 %v554
      %560 = vmatprep.subr.mxu0 0.0
      %561 = vmatpush1.xpose.msra.mxu0 %v556
      %562 = vmatprep.subr.mxu0 0.0
      %563 = vmatpush1.xpose.msra.mxu0 0.0
      %564 = vmatprep.subr.mxu0 0.0
      %565 = vmatpush1.xpose.msra.mxu0 0.0
      %566 = vmatprep.subr.mxu0 0.0
      %567 = vmatpush1.xpose.msra.mxu0 0.0
      %568 = vmatprep.subr.mxu0 0.0
      %569 = vmatpush1.xpose.msra.mxu0 0.0
      %570 = vmatprep.subr.mxu0 0.0
      %571 = vmatpush1.xpose.msra.mxu0 0.0
      %572 = vmatprep.subr.mxu0 0.0
      %573 = vmatpush1.xpose.msra.mxu0 0.0
      %574 = vmatprep.subr.mxu0 0.0
      %575 = vmatpush1.xpose.msra.mxu0 0.0
      %576 = vmatprep.subr.mxu0 0.0
      %577 = vmatpush1.xpose.msra.mxu0 0.0
      %578 = vmatprep.subr.mxu0 0.0
      %579 = vmatpush1.xpose.msra.mxu0 0.0
      %580 = vmatprep.subr.mxu0 0.0
      %581 = vmatpush1.xpose.msra.mxu0 0.0
      %582 = vmatprep.subr.mxu0 0.0
      %583 = vmatpush1.xpose.msra.mxu0 0.0
      %584 = vmatprep.subr.mxu0 0.0
      %585 = vmatpush1.xpose.msra.mxu0 0.0
      %586 = vmatprep.subr.mxu0 0.0
      %587 = vmatpush1.xpose.msra.mxu0 0.0
      %588 = vmatprep.subr.mxu0 0.0
      %589 = vmatpush1.xpose.msra.mxu0 0.0
      %590 = vmatprep.subr.mxu0 0.0
      %591 = vmatpush1.xpose.msra.mxu0 0.0
      %592 = vmatprep.subr.mxu0 0.0
      %593 = vmatpush1.xpose.msra.mxu0 0.0
      %594 = vmatprep.subr.mxu0 0.0
      %595 = vmatpush1.xpose.msra.mxu0 0.0
      %596 = vmatprep.subr.mxu0 0.0
      %597 = vmatpush1.xpose.msra.mxu0 0.0
      %598 = vmatprep.subr.mxu0 0.0
      %599 = vmatpush1.xpose.msra.mxu0 0.0
      %600 = vmatprep.subr.mxu0 0.0
      %601 = vmatpush1.xpose.msra.mxu0 0.0
      %602 = vmatprep.subr.mxu0 0.0
      %603 = vmatpush1.xpose.msra.mxu0 0.0
      %604 = vmatprep.subr.mxu0 0.0
      %605 = vmatpush1.xpose.msra.mxu0 0.0
      %606 = vmatprep.subr.mxu0 0.0
      %607 = vmatpush1.xpose.msra.mxu0 0.0
      %608 = vmatprep.subr.mxu0 0.0
      %609 = vmatpush1.xpose.msra.mxu0 0.0
      %610 = vmatprep.subr.mxu0 0.0
      %611 = vmatpush1.xpose.msra.mxu0 0.0
      %612 = vmatprep.subr.mxu0 0.0
      %613 = vmatpush1.xpose.msra.mxu0 0.0
      %614 = vmatprep.subr.mxu0 0.0
      %615 = vmatpush1.xpose.msra.mxu0 0.0
      %616 = vmatprep.subr.mxu0 0.0
      %617 = vmatpush1.xpose.msra.mxu0 0.0
      %618 = vmatprep.subr.mxu0 0.0
      %619 = vmatpush1.xpose.msra.mxu0 0.0
      %620 = vmatprep.subr.mxu0 0.0
      %621 = vmatpush1.xpose.msra.mxu0 0.0
      %622 = vmatprep.mubr.f32.mxu0 0.0
      %623 = vmatmul.mubr.f32.gmra.mrb[0].mxu0 %v550
      %v624 = vpop.f32.mrb[0].mxu0
      %v625 = vadd.f32 0.0, %v624
      %v626 = vpop.f32.mrb[0].mxu0
      %627 = vmatprep.mubr.f32.mxu0 0.0
      %628 = vmatmul.mubr.f32.gmra.mrb[0].mxu0 %v552
      %v629 = vpop.f32.mrb[0].mxu0
      %v630 = vadd.f32 0.0, %v629
      %v631 = vpop.f32.mrb[0].mxu0
      %632 = vdwg.mxu0
      %v633 = vsel %vm429, %v625, -inf
      %634 = vmax.xlane.f32.xlu0 %v633
      %v635 = vpop.xlane.xlu0 %634
      %v636 = vsel %vm433, %v630, -inf
      %637 = vmax.xlane.f32.xlu0 %v636
      %v638 = vpop.xlane.xlu0 %637
      %v639 = vsub.f32 %v625, %v635
      %v640 = vsub.f32 %v630, %v638
      %v641 = vmul.f32 %v639, 1.442695
      %v642 = vpow.pop %v641
      %v643 = vmul.f32 %v640, 1.442695
      %v644 = vpow.pop %v643
      %v645 = vsel %vm429, %v642, 0.0
      %646 = vadd.xlane.f32.xlu0 %v645
      %v647 = vpop.xlane.xlu0 %646
      %v648 = vsel %vm433, %v644, 0.0
      %649 = vadd.xlane.f32.xlu0 %v648
      %v650 = vpop.xlane.xlu0 %649
      %v651 = vrcp.pop %v647
      %v652 = vrcp.pop %v650
      %v653 = vmul.f32 %v642, %v651
      %v654 = vmul.f32 %v644, %v652
      %655 = vrot.lane.b32.xlu0 %v327, 56
      %v656 = vpop.permute.xlu0 %655
      %657 = vrot.lane.b32.xlu0 %v332, 56
      %v658 = vpop.permute.xlu0 %657
      %v661 = vsel %vm429, %v653, 0
      %v664 = vsel %vm429, %v654, 0
      %v666 = vsel %vm464, %v658, 0
      %668 = vmatprep.subr.mxu0 0.0
      %669 = vmatpush1.msra.mxu0 %v656
      %670 = vmatprep.subr.mxu0 0.0
      %671 = vmatpush1.msra.mxu0 %v666
      %672 = vmatprep.subr.mxu0 0.0
      %673 = vmatpush1.msra.mxu0 0.0
      %674 = vmatprep.subr.mxu0 0.0
      %675 = vmatpush1.msra.mxu0 0.0
      %676 = vmatprep.subr.mxu0 0.0
      %677 = vmatpush1.msra.mxu0 0.0
      %678 = vmatprep.subr.mxu0 0.0
      %679 = vmatpush1.msra.mxu0 0.0
      %680 = vmatprep.subr.mxu0 0.0
      %681 = vmatpush1.msra.mxu0 0.0
      %682 = vmatprep.subr.mxu0 0.0
      %683 = vmatpush1.msra.mxu0 0.0
      %684 = vmatprep.subr.mxu0 0.0
      %685 = vmatpush1.msra.mxu0 0.0
      %686 = vmatprep.subr.mxu0 0.0
      %687 = vmatpush1.msra.mxu0 0.0
      %688 = vmatprep.subr.mxu0 0.0
      %689 = vmatpush1.msra.mxu0 0.0
      %690 = vmatprep.subr.mxu0 0.0
      %691 = vmatpush1.msra.mxu0 0.0
      %692 = vmatprep.subr.mxu0 0.0
      %693 = vmatpush1.msra.mxu0 0.0
      %694 = vmatprep.subr.mxu0 0.0
      %695 = vmatpush1.msra.mxu0 0.0
      %696 = vmatprep.subr.mxu0 0.0
      %697 = vmatpush1.msra.mxu0 0.0
      %698 = vmatprep.subr.mxu0 0.0
      %699 = vmatpush1.msra.mxu0 0.0
      %700 = vmatprep.subr.mxu0 0.0
      %701 = vmatpush1.msra.mxu0 0.0
      %702 = vmatprep.subr.mxu0 0.0
      %703 = vmatpush1.msra.mxu0 0.0
      %704 = vmatprep.subr.mxu0 0.0
      %705 = vmatpush1.msra.mxu0 0.0
      %706 = vmatprep.subr.mxu0 0.0
      %707 = vmatpush1.msra.mxu0 0.0
      %708 = vmatprep.subr.mxu0 0.0
      %709 = vmatpush1.msra.mxu0 0.0
      %710 = vmatprep.subr.mxu0 0.0
      %711 = vmatpush1.msra.mxu0 0.0
      %712 = vmatprep.subr.mxu0 0.0
      %713 = vmatpush1.msra.mxu0 0.0
      %714 = vmatprep.subr.mxu0 0.0
      %715 = vmatpush1.msra.mxu0 0.0
      %716 = vmatprep.subr.mxu0 0.0
      %717 = vmatpush1.msra.mxu0 0.0
      %718 = vmatprep.subr.mxu0 0.0
      %719 = vmatpush1.msra.mxu0 0.0
      %720 = vmatprep.subr.mxu0 0.0
      %721 = vmatpush1.msra.mxu0 0.0
      %722 = vmatprep.subr.mxu0 0.0
      %723 = vmatpush1.msra.mxu0 0.0
      %724 = vmatprep.subr.mxu0 0.0
      %725 = vmatpush1.msra.mxu0 0.0
      %726 = vmatprep.subr.mxu0 0.0
      %727 = vmatpush1.msra.mxu0 0.0
      %728 = vmatprep.subr.mxu0 0.0
      %729 = vmatpush1.msra.mxu0 0.0
      %730 = vmatprep.subr.mxu0 0.0
      %731 = vmatpush1.msra.mxu0 0.0
      %732 = vmatprep.mubr.f32.mxu0 0.0
      %733 = vmatmul.mubr.f32.gmra.mrb[0].mxu0 %v661
      %v734 = vpop.f32.mrb[0].mxu0
      %v735 = vadd.f32 0.0, %v734
      %v736 = vpop.f32.mrb[0].mxu0
      %737 = vmatprep.mubr.f32.mxu0 0.0
      %738 = vmatmul.mubr.f32.gmra.mrb[0].mxu0 %v664
      %v739 = vpop.f32.mrb[0].mxu0
      %v740 = vadd.f32 0.0, %v739
      %v741 = vpop.f32.mrb[0].mxu0
      %742 = vdwg.mxu0
      %743 = vrot.lane.b32.xlu0 %v335, 112
      %v744 = vpop.permute.xlu0 %743
      %745 = vrot.lane.b32.xlu0 %v336, 112
      %v746 = vpop.permute.xlu0 %745
      %747 = vrot.lane.b32.xlu0 %v327, 80
      %v748 = vpop.permute.xlu0 %747
      %749 = vrot.lane.b32.xlu0 %v332, 80
      %v750 = vpop.permute.xlu0 %749
      %v751 = vsel %vm343, %v744, 0
      %v753 = vsel %vm343, %v746, 0
      %v755 = vsel %vm343, %v748, 0
      %v757 = vsel %vm343, %v750, 0
      %759 = vmatprep.subr.mxu0 0.0
      %760 = vmatpush1.xpose.msra.mxu0 %v755
      %761 = vmatprep.subr.mxu0 0.0
      %762 = vmatpush1.xpose.msra.mxu0 %v757
      %763 = vmatprep.subr.mxu0 0.0
      %764 = vmatpush1.xpose.msra.mxu0 0.0
      %765 = vmatprep.subr.mxu0 0.0
      %766 = vmatpush1.xpose.msra.mxu0 0.0
      %767 = vmatprep.subr.mxu0 0.0
      %768 = vmatpush1.xpose.msra.mxu0 0.0
      %769 = vmatprep.subr.mxu0 0.0
      %770 = vmatpush1.xpose.msra.mxu0 0.0
      %771 = vmatprep.subr.mxu0 0.0
      %772 = vmatpush1.xpose.msra.mxu0 0.0
      %773 = vmatprep.subr.mxu0 0.0
      %774 = vmatpush1.xpose.msra.mxu0 0.0
      %775 = vmatprep.subr.mxu0 0.0
      %776 = vmatpush1.xpose.msra.mxu0 0.0
      %777 = vmatprep.subr.mxu0 0.0
      %778 = vmatpush1.xpose.msra.mxu0 0.0
      %779 = vmatprep.subr.mxu0 0.0
      %780 = vmatpush1.xpose.msra.mxu0 0.0
      %781 = vmatprep.subr.mxu0 0.0
      %782 = vmatpush1.xpose.msra.mxu0 0.0
      %783 = vmatprep.subr.mxu0 0.0
      %784 = vmatpush1.xpose.msra.mxu0 0.0
      %785 = vmatprep.subr.mxu0 0.0
      %786 = vmatpush1.xpose.msra.mxu0 0.0
      %787 = vmatprep.subr.mxu0 0.0
      %788 = vmatpush1.xpose.msra.mxu0 0.0
      %789 = vmatprep.subr.mxu0 0.0
      %790 = vmatpush1.xpose.msra.mxu0 0.0
      %791 = vmatprep.subr.mxu0 0.0
      %792 = vmatpush1.xpose.msra.mxu0 0.0
      %793 = vmatprep.subr.mxu0 0.0
      %794 = vmatpush1.xpose.msra.mxu0 0.0
      %795 = vmatprep.subr.mxu0 0.0
      %796 = vmatpush1.xpose.msra.mxu0 0.0
      %797 = vmatprep.subr.mxu0 0.0
      %798 = vmatpush1.xpose.msra.mxu0 0.0
      %799 = vmatprep.subr.mxu0 0.0
      %800 = vmatpush1.xpose.msra.mxu0 0.0
      %801 = vmatprep.subr.mxu0 0.0
      %802 = vmatpush1.xpose.msra.mxu0 0.0
      %803 = vmatprep.subr.mxu0 0.0
      %804 = vmatpush1.xpose.msra.mxu0 0.0
      %805 = vmatprep.subr.mxu0 0.0
      %806 = vmatpush1.xpose.msra.mxu0 0.0
      %807 = vmatprep.subr.mxu0 0.0
      %808 = vmatpush1.xpose.msra.mxu0 0.0
      %809 = vmatprep.subr.mxu0 0.0
      %810 = vmatpush1.xpose.msra.mxu0 0.0
      %811 = vmatprep.subr.mxu0 0.0
      %812 = vmatpush1.xpose.msra.mxu0 0.0
      %813 = vmatprep.subr.mxu0 0.0
      %814 = vmatpush1.xpose.msra.mxu0 0.0
      %815 = vmatprep.subr.mxu0 0.0
      %816 = vmatpush1.xpose.msra.mxu0 0.0
      %817 = vmatprep.subr.mxu0 0.0
      %818 = vmatpush1.xpose.msra.mxu0 0.0
      %819 = vmatprep.subr.mxu0 0.0
      %820 = vmatpush1.xpose.msra.mxu0 0.0
      %821 = vmatprep.subr.mxu0 0.0
      %822 = vmatpush1.xpose.msra.mxu0 0.0
      %823 = vmatprep.mubr.f32.mxu0 0.0
      %824 = vmatmul.mubr.f32.gmra.mrb[0].mxu0 %v751
      %v825 = vpop.f32.mrb[0].mxu0
      %v826 = vadd.f32 0.0, %v825
      %v827 = vpop.f32.mrb[0].mxu0
      %828 = vmatprep.mubr.f32.mxu0 0.0
      %829 = vmatmul.mubr.f32.gmra.mrb[0].mxu0 %v753
      %v830 = vpop.f32.mrb[0].mxu0
      %v831 = vadd.f32 0.0, %v830
      %v832 = vpop.f32.mrb[0].mxu0
      %833 = vdwg.mxu0
      %v834 = vsel %vm429, %v826, -inf
      %835 = vmax.xlane.f32.xlu0 %v834
      %v836 = vpop.xlane.xlu0 %835
      %v837 = vsel %vm433, %v831, -inf
      %838 = vmax.xlane.f32.xlu0 %v837
      %v839 = vpop.xlane.xlu0 %838
      %v840 = vsub.f32 %v826, %v836
      %v841 = vsub.f32 %v831, %v839
      %v842 = vmul.f32 %v840, 1.442695
      %v843 = vpow.pop %v842
      %v844 = vmul.f32 %v841, 1.442695
      %v845 = vpow.pop %v844
      %v846 = vsel %vm429, %v843, 0.0
      %847 = vadd.xlane.f32.xlu0 %v846
      %v848 = vpop.xlane.xlu0 %847
      %v849 = vsel %vm433, %v845, 0.0
      %850 = vadd.xlane.f32.xlu0 %v849
      %v851 = vpop.xlane.xlu0 %850
      %v852 = vrcp.pop %v848
      %v853 = vrcp.pop %v851
      %v854 = vmul.f32 %v843, %v852
      %v855 = vmul.f32 %v845, %v853
      %856 = vrot.lane.b32.xlu0 %v327, 48
      %v857 = vpop.permute.xlu0 %856
      %858 = vrot.lane.b32.xlu0 %v332, 48
      %v859 = vpop.permute.xlu0 %858
      %v862 = vsel %vm429, %v854, 0
      %v865 = vsel %vm429, %v855, 0
      %v867 = vsel %vm464, %v859, 0
      %869 = vmatprep.subr.mxu0 0.0
      %870 = vmatpush1.msra.mxu0 %v857
      %871 = vmatprep.subr.mxu0 0.0
      %872 = vmatpush1.msra.mxu0 %v867
      %873 = vmatprep.subr.mxu0 0.0
      %874 = vmatpush1.msra.mxu0 0.0
      %875 = vmatprep.subr.mxu0 0.0
      %876 = vmatpush1.msra.mxu0 0.0
      %877 = vmatprep.subr.mxu0 0.0
      %878 = vmatpush1.msra.mxu0 0.0
      %879 = vmatprep.subr.mxu0 0.0
      %880 = vmatpush1.msra.mxu0 0.0
      %881 = vmatprep.subr.mxu0 0.0
      %882 = vmatpush1.msra.mxu0 0.0
      %883 = vmatprep.subr.mxu0 0.0
      %884 = vmatpush1.msra.mxu0 0.0
      %885 = vmatprep.subr.mxu0 0.0
      %886 = vmatpush1.msra.mxu0 0.0
      %887 = vmatprep.subr.mxu0 0.0
      %888 = vmatpush1.msra.mxu0 0.0
      %889 = vmatprep.subr.mxu0 0.0
      %890 = vmatpush1.msra.mxu0 0.0
      %891 = vmatprep.subr.mxu0 0.0
      %892 = vmatpush1.msra.mxu0 0.0
      %893 = vmatprep.subr.mxu0 0.0
      %894 = vmatpush1.msra.mxu0 0.0
      %895 = vmatprep.subr.mxu0 0.0
      %896 = vmatpush1.msra.mxu0 0.0
      %897 = vmatprep.subr.mxu0 0.0
      %898 = vmatpush1.msra.mxu0 0.0
      %899 = vmatprep.subr.mxu0 0.0
      %900 = vmatpush1.msra.mxu0 0.0
      %901 = vmatprep.subr.mxu0 0.0
      %902 = vmatpush1.msra.mxu0 0.0
      %903 = vmatprep.subr.mxu0 0.0
      %904 = vmatpush1.msra.mxu0 0.0
      %905 = vmatprep.subr.mxu0 0.0
      %906 = vmatpush1.msra.mxu0 0.0
      %907 = vmatprep.subr.mxu0 0.0
      %908 = vmatpush1.msra.mxu0 0.0
      %909 = vmatprep.subr.mxu0 0.0
      %910 = vmatpush1.msra.mxu0 0.0
      %911 = vmatprep.subr.mxu0 0.0
      %912 = vmatpush1.msra.mxu0 0.0
      %913 = vmatprep.subr.mxu0 0.0
      %914 = vmatpush1.msra.mxu0 0.0
      %915 = vmatprep.subr.mxu0 0.0
      %916 = vmatpush1.msra.mxu0 0.0
      %917 = vmatprep.subr.mxu0 0.0
      %918 = vmatpush1.msra.mxu0 0.0
      %919 = vmatprep.subr.mxu0 0.0
      %920 = vmatpush1.msra.mxu0 0.0
      %921 = vmatprep.subr.mxu0 0.0
      %922 = vmatpush1.msra.mxu0 0.0
      %923 = vmatprep.subr.mxu0 0.0
      %924 = vmatpush1.msra.mxu0 0.0
      %925 = vmatprep.subr.mxu0 0.0
      %926 = vmatpush1.msra.mxu0 0.0
      %927 = vmatprep.subr.mxu0 0.0
      %928 = vmatpush1.msra.mxu0 0.0
      %929 = vmatprep.subr.mxu0 0.0
      %930 = vmatpush1.msra.mxu0 0.0
      %931 = vmatprep.subr.mxu0 0.0
      %932 = vmatpush1.msra.mxu0 0.0
      %933 = vmatprep.mubr.f32.mxu0 0.0
      %934 = vmatmul.mubr.f32.gmra.mrb[0].mxu0 %v862
      %v935 = vpop.f32.mrb[0].mxu0
      %v936 = vadd.f32 0.0, %v935
      %v937 = vpop.f32.mrb[0].mxu0
      %938 = vmatprep.mubr.f32.mxu0 0.0
      %939 = vmatmul.mubr.f32.gmra.mrb[0].mxu0 %v865
      %v940 = vpop.f32.mrb[0].mxu0
      %v941 = vadd.f32 0.0, %v940
      %v942 = vpop.f32.mrb[0].mxu0
      %943 = vdwg.mxu0
      %944 = vrot.lane.b32.xlu0 %v335, 104
      %v945 = vpop.permute.xlu0 %944
      %946 = vrot.lane.b32.xlu0 %v336, 104
      %v947 = vpop.permute.xlu0 %946
      %948 = vrot.lane.b32.xlu0 %v327, 72
      %v949 = vpop.permute.xlu0 %948
      %950 = vrot.lane.b32.xlu0 %v332, 72
      %v951 = vpop.permute.xlu0 %950
      %v952 = vsel %vm343, %v945, 0
      %v954 = vsel %vm343, %v947, 0
      %v956 = vsel %vm343, %v949, 0
      %v958 = vsel %vm343, %v951, 0
      %960 = vmatprep.subr.mxu0 0.0
      %961 = vmatpush1.xpose.msra.mxu0 %v956
      %962 = vmatprep.subr.mxu0 0.0
      %963 = vmatpush1.xpose.msra.mxu0 %v958
      %964 = vmatprep.subr.mxu0 0.0
      %965 = vmatpush1.xpose.msra.mxu0 0.0
      %966 = vmatprep.subr.mxu0 0.0
      %967 = vmatpush1.xpose.msra.mxu0 0.0
      %968 = vmatprep.subr.mxu0 0.0
      %969 = vmatpush1.xpose.msra.mxu0 0.0
      %970 = vmatprep.subr.mxu0 0.0
      %971 = vmatpush1.xpose.msra.mxu0 0.0
      %972 = vmatprep.subr.mxu0 0.0
      %973 = vmatpush1.xpose.msra.mxu0 0.0
      %974 = vmatprep.subr.mxu0 0.0
      %975 = vmatpush1.xpose.msra.mxu0 0.0
      %976 = vmatprep.subr.mxu0 0.0
      %977 = vmatpush1.xpose.msra.mxu0 0.0
      %978 = vmatprep.subr.mxu0 0.0
      %979 = vmatpush1.xpose.msra.mxu0 0.0
      %980 = vmatprep.subr.mxu0 0.0
      %981 = vmatpush1.xpose.msra.mxu0 0.0
      %982 = vmatprep.subr.mxu0 0.0
      %983 = vmatpush1.xpose.msra.mxu0 0.0
      %984 = vmatprep.subr.mxu0 0.0
      %985 = vmatpush1.xpose.msra.mxu0 0.0
      %986 = vmatprep.subr.mxu0 0.0
      %987 = vmatpush1.xpose.msra.mxu0 0.0
      %988 = vmatprep.subr.mxu0 0.0
      %989 = vmatpush1.xpose.msra.mxu0 0.0
      %990 = vmatprep.subr.mxu0 0.0
      %991 = vmatpush1.xpose.msra.mxu0 0.0
      %992 = vmatprep.subr.mxu0 0.0
      %993 = vmatpush1.xpose.msra.mxu0 0.0
      %994 = vmatprep.subr.mxu0 0.0
      %995 = vmatpush1.xpose.msra.mxu0 0.0
      %996 = vmatprep.subr.mxu0 0.0
      %997 = vmatpush1.xpose.msra.mxu0 0.0
      %998 = vmatprep.subr.mxu0 0.0
      %999 = vmatpush1.xpose.msra.mxu0 0.0
      %1000 = vmatprep.subr.mxu0 0.0
      %1001 = vmatpush1.xpose.msra.mxu0 0.0
      %1002 = vmatprep.subr.mxu0 0.0
      %1003 = vmatpush1.xpose.msra.mxu0 0.0
      %1004 = vmatprep.subr.mxu0 0.0
      %1005 = vmatpush1.xpose.msra.mxu0 0.0
      %1006 = vmatprep.subr.mxu0 0.0
      %1007 = vmatpush1.xpose.msra.mxu0 0.0
      %1008 = vmatprep.subr.mxu0 0.0
      %1009 = vmatpush1.xpose.msra.mxu0 0.0
      %1010 = vmatprep.subr.mxu0 0.0
      %1011 = vmatpush1.xpose.msra.mxu0 0.0
      %1012 = vmatprep.subr.mxu0 0.0
      %1013 = vmatpush1.xpose.msra.mxu0 0.0
      %1014 = vmatprep.subr.mxu0 0.0
      %1015 = vmatpush1.xpose.msra.mxu0 0.0
      %1016 = vmatprep.subr.mxu0 0.0
      %1017 = vmatpush1.xpose.msra.mxu0 0.0
      %1018 = vmatprep.subr.mxu0 0.0
      %1019 = vmatpush1.xpose.msra.mxu0 0.0
      %1020 = vmatprep.subr.mxu0 0.0
      %1021 = vmatpush1.xpose.msra.mxu0 0.0
      %1022 = vmatprep.subr.mxu0 0.0
      %1023 = vmatpush1.xpose.msra.mxu0 0.0
      %1024 = vmatprep.mubr.f32.mxu0 0.0
      %1025 = vmatmul.mubr.f32.gmra.mrb[0].mxu0 %v952
      %v1026 = vpop.f32.mrb[0].mxu0
      %v1027 = vadd.f32 0.0, %v1026
      %v1028 = vpop.f32.mrb[0].mxu0
      %1029 = vmatprep.mubr.f32.mxu0 0.0
      %1030 = vmatmul.mubr.f32.gmra.mrb[0].mxu0 %v954
      %v1031 = vpop.f32.mrb[0].mxu0
      %v1032 = vadd.f32 0.0, %v1031
      %v1033 = vpop.f32.mrb[0].mxu0
      %1034 = vdwg.mxu0
      %v1035 = vsel %vm429, %v1027, -inf
      %1036 = vmax.xlane.f32.xlu0 %v1035
      %v1037 = vpop.xlane.xlu0 %1036
      %v1038 = vsel %vm433, %v1032, -inf
      %1039 = vmax.xlane.f32.xlu0 %v1038
      %v1040 = vpop.xlane.xlu0 %1039
      %v1041 = vsub.f32 %v1027, %v1037
      %v1042 = vsub.f32 %v1032, %v1040
      %v1043 = vmul.f32 %v1041, 1.442695
      %v1044 = vpow.pop %v1043
      %v1045 = vmul.f32 %v1042, 1.442695
      %v1046 = vpow.pop %v1045
      %v1047 = vsel %vm429, %v1044, 0.0
      %1048 = vadd.xlane.f32.xlu0 %v1047
      %v1049 = vpop.xlane.xlu0 %1048
      %v1050 = vsel %vm433, %v1046, 0.0
      %1051 = vadd.xlane.f32.xlu0 %v1050
      %v1052 = vpop.xlane.xlu0 %1051
      %v1053 = vrcp.pop %v1049
      %v1054 = vrcp.pop %v1052
      %v1055 = vmul.f32 %v1044, %v1053
      %v1056 = vmul.f32 %v1046, %v1054
      %1057 = vrot.lane.b32.xlu0 %v327, 40
      %v1058 = vpop.permute.xlu0 %1057
      %1059 = vrot.lane.b32.xlu0 %v332, 40
      %v1060 = vpop.permute.xlu0 %1059
      %v1063 = vsel %vm429, %v1055, 0
      %v1066 = vsel %vm429, %v1056, 0
      %v1068 = vsel %vm464, %v1060, 0
      %1070 = vmatprep.subr.mxu0 0.0
      %1071 = vmatpush1.msra.mxu0 %v1058
      %1072 = vmatprep.subr.mxu0 0.0
      %1073 = vmatpush1.msra.mxu0 %v1068
      %1074 = vmatprep.subr.mxu0 0.0
      %1075 = vmatpush1.msra.mxu0 0.0
      %1076 = vmatprep.subr.mxu0 0.0
      %1077 = vmatpush1.msra.mxu0 0.0
      %1078 = vmatprep.subr.mxu0 0.0
      %1079 = vmatpush1.msra.mxu0 0.0
      %1080 = vmatprep.subr.mxu0 0.0
      %1081 = vmatpush1.msra.mxu0 0.0
      %1082 = vmatprep.subr.mxu0 0.0
      %1083 = vmatpush1.msra.mxu0 0.0
      %1084 = vmatprep.subr.mxu0 0.0
      %1085 = vmatpush1.msra.mxu0 0.0
      %1086 = vmatprep.subr.mxu0 0.0
      %1087 = vmatpush1.msra.mxu0 0.0
      %1088 = vmatprep.subr.mxu0 0.0
      %1089 = vmatpush1.msra.mxu0 0.0
      %1090 = vmatprep.subr.mxu0 0.0
      %1091 = vmatpush1.msra.mxu0 0.0
      %1092 = vmatprep.subr.mxu0 0.0
      %1093 = vmatpush1.msra.mxu0 0.0
      %1094 = vmatprep.subr.mxu0 0.0
      %1095 = vmatpush1.msra.mxu0 0.0
      %1096 = vmatprep.subr.mxu0 0.0
      %1097 = vmatpush1.msra.mxu0 0.0
      %1098 = vmatprep.subr.mxu0 0.0
      %1099 = vmatpush1.msra.mxu0 0.0
      %1100 = vmatprep.subr.mxu0 0.0
      %1101 = vmatpush1.msra.mxu0 0.0
      %1102 = vmatprep.subr.mxu0 0.0
      %1103 = vmatpush1.msra.mxu0 0.0
      %1104 = vmatprep.subr.mxu0 0.0
      %1105 = vmatpush1.msra.mxu0 0.0
      %1106 = vmatprep.subr.mxu0 0.0
      %1107 = vmatpush1.msra.mxu0 0.0
      %1108 = vmatprep.subr.mxu0 0.0
      %1109 = vmatpush1.msra.mxu0 0.0
      %1110 = vmatprep.subr.mxu0 0.0
      %1111 = vmatpush1.msra.mxu0 0.0
      %1112 = vmatprep.subr.mxu0 0.0
      %1113 = vmatpush1.msra.mxu0 0.0
      %1114 = vmatprep.subr.mxu0 0.0
      %1115 = vmatpush1.msra.mxu0 0.0
      %1116 = vmatprep.subr.mxu0 0.0
      %1117 = vmatpush1.msra.mxu0 0.0
      %1118 = vmatprep.subr.mxu0 0.0
      %1119 = vmatpush1.msra.mxu0 0.0
      %1120 = vmatprep.subr.mxu0 0.0
      %1121 = vmatpush1.msra.mxu0 0.0
      %1122 = vmatprep.subr.mxu0 0.0
      %1123 = vmatpush1.msra.mxu0 0.0
      %1124 = vmatprep.subr.mxu0 0.0
      %1125 = vmatpush1.msra.mxu0 0.0
      %1126 = vmatprep.subr.mxu0 0.0
      %1127 = vmatpush1.msra.mxu0 0.0
      %1128 = vmatprep.subr.mxu0 0.0
      %1129 = vmatpush1.msra.mxu0 0.0
      %1130 = vmatprep.subr.mxu0 0.0
      %1131 = vmatpush1.msra.mxu0 0.0
      %1132 = vmatprep.subr.mxu0 0.0
      %1133 = vmatpush1.msra.mxu0 0.0
      %1134 = vmatprep.mubr.f32.mxu0 0.0
      %1135 = vmatmul.mubr.f32.gmra.mrb[0].mxu0 %v1063
      %v1136 = vpop.f32.mrb[0].mxu0
      %v1137 = vadd.f32 0.0, %v1136
      %v1138 = vpop.f32.mrb[0].mxu0
      %1139 = vmatprep.mubr.f32.mxu0 0.0
      %1140 = vmatmul.mubr.f32.gmra.mrb[0].mxu0 %v1066
      %v1141 = vpop.f32.mrb[0].mxu0
      %v1142 = vadd.f32 0.0, %v1141
      %v1143 = vpop.f32.mrb[0].mxu0
      %1144 = vdwg.mxu0
      %1147 = vrot.lane.b32.xlu0 %v735, 8
      %v1148 = vpop.permute.xlu0 %1147
      %1149 = vrot.lane.b32.xlu0 %v740, 8
      %v1150 = vpop.permute.xlu0 %1149
      %1155 = vrot.lane.b32.xlu0 %v936, 16
      %v1156 = vpop.permute.xlu0 %1155
      %1157 = vrot.lane.b32.xlu0 %v941, 16
      %v1158 = vpop.permute.xlu0 %1157
      %1163 = vrot.lane.b32.xlu0 %v1137, 24
      %v1164 = vpop.permute.xlu0 %1163
      %1165 = vrot.lane.b32.xlu0 %v1142, 24
      %v1166 = vpop.permute.xlu0 %1165
      %v1169 = vsel %vm343, %v534, %v1148
      %v1170 = vsel %vm343, %v539, %v1150
      %vm1171 = vcmask 130048
      %v1172 = vsel %vm1171, %v1169, %v1156
      %v1173 = vsel %vm1171, %v1170, %v1158
      %vm1174 = vcmask 195584
      %v1175 = vsel %vm1174, %v1172, %v1164
      %v1176 = vsel %vm1174, %v1173, %v1166
      %1181 = vrot.lane.b32.xlu0 %v196, 32
      %v1182 = vpop.permute.xlu0 %1181
      %1183 = vrot.lane.b32.xlu0 %v198, 32
      %v1184 = vpop.permute.xlu0 %1183
      %1185 = vrot.lane.b32.xlu0 %v200, 32
      %v1186 = vpop.permute.xlu0 %1185
      %1187 = vrot.lane.b32.xlu0 %v202, 32
      %v1188 = vpop.permute.xlu0 %1187
      %v1194 = vsel %vm213, %v1175, 0
      %v1197 = vsel %vm213, %v1176, 0
      %1199 = vmatprep.subr.mxu0 0.0
      %1200 = vmatpush1.msra.mxu0 %v1182
      %1201 = vmatprep.subr.mxu0 0.0
      %1202 = vmatpush1.msra.mxu0 %v1184
      %1203 = vmatprep.subr.mxu0 0.0
      %1204 = vmatpush1.msra.mxu0 %v1186
      %1205 = vmatprep.subr.mxu0 0.0
      %1206 = vmatpush1.msra.mxu0 %v1188
      %1207 = vmatprep.subr.mxu0 0.0
      %1208 = vmatpush1.msra.mxu0 0.0
      %1209 = vmatprep.subr.mxu0 0.0
      %1210 = vmatpush1.msra.mxu0 0.0
      %1211 = vmatprep.subr.mxu0 0.0
      %1212 = vmatpush1.msra.mxu0 0.0
      %1213 = vmatprep.subr.mxu0 0.0
      %1214 = vmatpush1.msra.mxu0 0.0
      %1215 = vmatprep.subr.mxu0 0.0
      %1216 = vmatpush1.msra.mxu0 0.0
      %1217 = vmatprep.subr.mxu0 0.0
      %1218 = vmatpush1.msra.mxu0 0.0
      %1219 = vmatprep.subr.mxu0 0.0
      %1220 = vmatpush1.msra.mxu0 0.0
      %1221 = vmatprep.subr.mxu0 0.0
      %1222 = vmatpush1.msra.mxu0 0.0
      %1223 = vmatprep.subr.mxu0 0.0
      %1224 = vmatpush1.msra.mxu0 0.0
      %1225 = vmatprep.subr.mxu0 0.0
      %1226 = vmatpush1.msra.mxu0 0.0
      %1227 = vmatprep.subr.mxu0 0.0
      %1228 = vmatpush1.msra.mxu0 0.0
      %1229 = vmatprep.subr.mxu0 0.0
      %1230 = vmatpush1.msra.mxu0 0.0
      %1231 = vmatprep.subr.mxu0 0.0
      %1232 = vmatpush1.msra.mxu0 0.0
      %1233 = vmatprep.subr.mxu0 0.0
      %1234 = vmatpush1.msra.mxu0 0.0
      %1235 = vmatprep.subr.mxu0 0.0
      %1236 = vmatpush1.msra.mxu0 0.0
      %1237 = vmatprep.subr.mxu0 0.0
      %1238 = vmatpush1.msra.mxu0 0.0
      %1239 = vmatprep.subr.mxu0 0.0
      %1240 = vmatpush1.msra.mxu0 0.0
      %1241 = vmatprep.subr.mxu0 0.0
      %1242 = vmatpush1.msra.mxu0 0.0
      %1243 = vmatprep.subr.mxu0 0.0
      %1244 = vmatpush1.msra.mxu0 0.0
      %1245 = vmatprep.subr.mxu0 0.0
      %1246 = vmatpush1.msra.mxu0 0.0
      %1247 = vmatprep.subr.mxu0 0.0
      %1248 = vmatpush1.msra.mxu0 0.0
      %1249 = vmatprep.subr.mxu0 0.0
      %1250 = vmatpush1.msra.mxu0 0.0
      %1251 = vmatprep.subr.mxu0 0.0
      %1252 = vmatpush1.msra.mxu0 0.0
      %1253 = vmatprep.subr.mxu0 0.0
      %1254 = vmatpush1.msra.mxu0 0.0
      %1255 = vmatprep.subr.mxu0 0.0
      %1256 = vmatpush1.msra.mxu0 0.0
      %1257 = vmatprep.subr.mxu0 0.0
      %1258 = vmatpush1.msra.mxu0 0.0
      %1259 = vmatprep.subr.mxu0 0.0
      %1260 = vmatpush1.msra.mxu0 0.0
      %1261 = vmatprep.subr.mxu0 0.0
      %1262 = vmatpush1.msra.mxu0 0.0
      %1263 = vmatprep.mubr.f32.mxu0 0.0
      %1264 = vmatmul.mubr.f32.gmra.mrb[0].mxu0 %v1194
      %v1265 = vpop.f32.mrb[0].mxu0
      %v1266 = vadd.f32 0.0, %v1265
      %v1267 = vpop.f32.mrb[0].mxu0
      %1268 = vmatprep.mubr.f32.mxu0 0.0
      %1269 = vmatmul.mubr.f32.gmra.mrb[0].mxu0 %v1197
      %v1270 = vpop.f32.mrb[0].mxu0
      %v1271 = vadd.f32 0.0, %v1270
      %v1272 = vpop.f32.mrb[0].mxu0
      %1273 = vdwg.mxu0
      %v1274 = vadd.f32 %v194, %v1266
      %v1275 = vadd.f32 %v195, %v1271
      %v1276 = vlaneseq
      %v1277 = vshrl.u32 %v1276, 7
      %v1278 = vsub.s32 4, %v1277
      %v1279 = vrot.slane %v212, %v1278
      %v1280 = vadd.f32 %v1274, %v1279
      %v1281 = vadd.f32 %v1275, %v1279
      %v1282 = vsel %vm213, %v1280, 0.0
      %1283 = vadd.xlane.f32.xlu0 %v1282
      %v1284 = vpop.xlane.xlu0 %1283
      %v1285 = vsel %vm217, %v1281, 0.0
      %1286 = vadd.xlane.f32.xlu0 %v1285
      %v1287 = vpop.xlane.xlu0 %1286
      %v1288 = vmul.f32 %v1284, %v221
      %v1289 = vmul.f32 %v1287, %v221
      %v1290 = vsub.f32 %v1280, %v1288
      %v1291 = vsub.f32 %v1281, %v1289
      %v1292 = vmul.f32 %v1290, %v1290
      %v1293 = vmul.f32 %v1291, %v1291
      %v1294 = vsel %vm213, %v1292, 0.0
      %1295 = vadd.xlane.f32.xlu0 %v1294
      %v1296 = vpop.xlane.xlu0 %1295
      %v1297 = vsel %vm217, %v1293, 0.0
      %1298 = vadd.xlane.f32.xlu0 %v1297
      %v1299 = vpop.xlane.xlu0 %1298
      %v1300 = vmul.f32 %v1296, %v221
      %v1301 = vmul.f32 %v1299, %v221
      %v1302 = vadd.f32 %v1300, 1e-05
      %v1303 = vadd.f32 %v1301, 1e-05
      %v1304 = vrsqrt.pop %v1302
      %v1305 = vrsqrt.pop %v1303
      %v1306 = vmul.f32 %v1290, %v1304
      %v1307 = vmul.f32 %v1291, %v1305
      %v1308 = vlaneseq
      %v1309 = vshrl.u32 %v1308, 7
      %v1310 = vsub.s32 2, %v1309
      %v1311 = vrot.slane %v212, %v1310
      %v1312 = vmul.f32 %v1306, %v1311
      %v1313 = vmul.f32 %v1307, %v1311
      %v1314 = vlaneseq
      %v1315 = vshrl.u32 %v1314, 7
      %v1316 = vsub.s32 3, %v1315
      %v1317 = vrot.slane %v212, %v1316
      %v1318 = vadd.f32 %v1312, %v1317
      %v1319 = vadd.f32 %v1313, %v1317
      %v1320 = vlaneseq
      %v1321 = vshrl.u32 %v1320, 7
      %v1322 = vsub.s32 6, %v1321
      %v1323 = vrot.slane %v212, %v1322
      %v1325 = vsel %vm213, %v1318, 0
      %v1328 = vsel %vm213, %v1319, 0
      %1330 = vmatprep.subr.mxu0 0.0
      %1331 = vmatpush1.msra.mxu0 %v197
      %1332 = vmatprep.subr.mxu0 0.0
      %1333 = vmatpush1.msra.mxu0 %v199
      %1334 = vmatprep.subr.mxu0 0.0
      %1335 = vmatpush1.msra.mxu0 %v201
      %1336 = vmatprep.subr.mxu0 0.0
      %1337 = vmatpush1.msra.mxu0 %v203
      %1338 = vmatprep.subr.mxu0 0.0
      %1339 = vmatpush1.msra.mxu0 0.0
      %1340 = vmatprep.subr.mxu0 0.0
      %1341 = vmatpush1.msra.mxu0 0.0
      %1342 = vmatprep.subr.mxu0 0.0
      %1343 = vmatpush1.msra.mxu0 0.0
      %1344 = vmatprep.subr.mxu0 0.0
      %1345 = vmatpush1.msra.mxu0 0.0
      %1346 = vmatprep.subr.mxu0 0.0
      %1347 = vmatpush1.msra.mxu0 0.0
      %1348 = vmatprep.subr.mxu0 0.0
      %1349 = vmatpush1.msra.mxu0 0.0
      %1350 = vmatprep.subr.mxu0 0.0
      %1351 = vmatpush1.msra.mxu0 0.0
      %1352 = vmatprep.subr.mxu0 0.0
      %1353 = vmatpush1.msra.mxu0 0.0
      %1354 = vmatprep.subr.mxu0 0.0
      %1355 = vmatpush1.msra.mxu0 0.0
      %1356 = vmatprep.subr.mxu0 0.0
      %1357 = vmatpush1.msra.mxu0 0.0
      %1358 = vmatprep.subr.mxu0 0.0
      %1359 = vmatpush1.msra.mxu0 0.0
      %1360 = vmatprep.subr.mxu0 0.0
      %1361 = vmatpush1.msra.mxu0 0.0
      %1362 = vmatprep.subr.mxu0 0.0
      %1363 = vmatpush1.msra.mxu0 0.0
      %1364 = vmatprep.subr.mxu0 0.0
      %1365 = vmatpush1.msra.mxu0 0.0
      %1366 = vmatprep.subr.mxu0 0.0
      %1367 = vmatpush1.msra.mxu0 0.0
      %1368 = vmatprep.subr.mxu0 0.0
      %1369 = vmatpush1.msra.mxu0 0.0
      %1370 = vmatprep.subr.mxu0 0.0
      %1371 = vmatpush1.msra.mxu0 0.0
      %1372 = vmatprep.subr.mxu0 0.0
      %1373 = vmatpush1.msra.mxu0 0.0
      %1374 = vmatprep.subr.mxu0 0.0
      %1375 = vmatpush1.msra.mxu0 0.0
      %1376 = vmatprep.subr.mxu0 0.0
      %1377 = vmatpush1.msra.mxu0 0.0
      %1378 = vmatprep.subr.mxu0 0.0
      %1379 = vmatpush1.msra.mxu0 0.0
      %1380 = vmatprep.subr.mxu0 0.0
      %1381 = vmatpush1.msra.mxu0 0.0
      %1382 = vmatprep.subr.mxu0 0.0
      %1383 = vmatpush1.msra.mxu0 0.0
      %1384 = vmatprep.subr.mxu0 0.0
      %1385 = vmatpush1.msra.mxu0 0.0
      %1386 = vmatprep.subr.mxu0 0.0
      %1387 = vmatpush1.msra.mxu0 0.0
      %1388 = vmatprep.subr.mxu0 0.0
      %1389 = vmatpush1.msra.mxu0 0.0
      %1390 = vmatprep.subr.mxu0 0.0
      %1391 = vmatpush1.msra.mxu0 0.0
      %1392 = vmatprep.subr.mxu0 0.0
      %1393 = vmatpush1.msra.mxu0 0.0
      %1394 = vmatprep.mubr.f32.mxu0 0.0
      %1395 = vmatmul.mubr.f32.gmra.mrb[0].mxu0 %v1325
      %v1396 = vpop.f32.mrb[0].mxu0
      %v1397 = vadd.f32 %v1323, %v1396
      %v1398 = vpop.f32.mrb[0].mxu0
      %1399 = vmatprep.mubr.f32.mxu0 0.0
      %1400 = vmatmul.mubr.f32.gmra.mrb[0].mxu0 %v1328
      %v1401 = vpop.f32.mrb[0].mxu0
      %v1402 = vadd.f32 %v1323, %v1401
      %v1403 = vpop.f32.mrb[0].mxu0
      %1404 = vdwg.mxu0
      %v1405 = vmul.f32 %v1397, 0.5
      %v1406 = vmul.f32 %v1402, 0.5
      %v1407 = vmul.f32 %v1397, 0.044715
      %v1408 = vmul.f32 %v1402, 0.044715
      %v1409 = vmul.f32 %v1407, %v1397
      %v1410 = vmul.f32 %v1408, %v1402
      %v1411 = vmul.f32 %v1409, %v1397
      %v1412 = vmul.f32 %v1410, %v1402
      %v1413 = vadd.f32 %v1397, %v1411
      %v1414 = vadd.f32 %v1402, %v1412
      %v1415 = vmul.f32 %v1413, 0.7978846
      %v1416 = vmul.f32 %v1414, 0.7978846
      %v1417 = vtanh.pop %v1415
      %v1418 = vtanh.pop %v1416
      %v1419 = vadd.f32 %v1417, 1.0
      %v1420 = vadd.f32 %v1418, 1.0
      %v1421 = vmul.f32 %v1405, %v1419
      %v1422 = vmul.f32 %v1406, %v1420
      %vm1423 = vcmask 523264
      %v1425 = vsel %vm1423, %v1421, 0
      %v1428 = vsel %vm1423, %v1422, 0
      %1430 = vmatprep.subr.mxu0 0.0
      %1431 = vmatpush1.msra.mxu0 %v204
      %1432 = vmatprep.subr.mxu0 0.0
      %1433 = vmatpush1.msra.mxu0 %v205
      %1434 = vmatprep.subr.mxu0 0.0
      %1435 = vmatpush1.msra.mxu0 %v206
      %1436 = vmatprep.subr.mxu0 0.0
      %1437 = vmatpush1.msra.mxu0 %v207
      %1438 = vmatprep.subr.mxu0 0.0
      %1439 = vmatpush1.msra.mxu0 %v208
      %1440 = vmatprep.subr.mxu0 0.0
      %1441 = vmatpush1.msra.mxu0 %v209
      %1442 = vmatprep.subr.mxu0 0.0
      %1443 = vmatpush1.msra.mxu0 %v210
      %1444 = vmatprep.subr.mxu0 0.0
      %1445 = vmatpush1.msra.mxu0 %v211
      %1446 = vmatprep.subr.mxu0 0.0
      %1447 = vmatpush1.msra.mxu0 0.0
      %1448 = vmatprep.subr.mxu0 0.0
      %1449 = vmatpush1.msra.mxu0 0.0
      %1450 = vmatprep.subr.mxu0 0.0
      %1451 = vmatpush1.msra.mxu0 0.0
      %1452 = vmatprep.subr.mxu0 0.0
      %1453 = vmatpush1.msra.mxu0 0.0
      %1454 = vmatprep.subr.mxu0 0.0
      %1455 = vmatpush1.msra.mxu0 0.0
      %1456 = vmatprep.subr.mxu0 0.0
      %1457 = vmatpush1.msra.mxu0 0.0
      %1458 = vmatprep.subr.mxu0 0.0
      %1459 = vmatpush1.msra.mxu0 0.0
      %1460 = vmatprep.subr.mxu0 0.0
      %1461 = vmatpush1.msra.mxu0 0.0
      %1462 = vmatprep.subr.mxu0 0.0
      %1463 = vmatpush1.msra.mxu0 0.0
      %1464 = vmatprep.subr.mxu0 0.0
      %1465 = vmatpush1.msra.mxu0 0.0
      %1466 = vmatprep.subr.mxu0 0.0
      %1467 = vmatpush1.msra.mxu0 0.0
      %1468 = vmatprep.subr.mxu0 0.0
      %1469 = vmatpush1.msra.mxu0 0.0
      %1470 = vmatprep.subr.mxu0 0.0
      %1471 = vmatpush1.msra.mxu0 0.0
      %1472 = vmatprep.subr.mxu0 0.0
      %1473 = vmatpush1.msra.mxu0 0.0
      %1474 = vmatprep.subr.mxu0 0.0
      %1475 = vmatpush1.msra.mxu0 0.0
      %1476 = vmatprep.subr.mxu0 0.0
      %1477 = vmatpush1.msra.mxu0 0.0
      %1478 = vmatprep.subr.mxu0 0.0
      %1479 = vmatpush1.msra.mxu0 0.0
      %1480 = vmatprep.subr.mxu0 0.0
      %1481 = vmatpush1.msra.mxu0 0.0
      %1482 = vmatprep.subr.mxu0 0.0
      %1483 = vmatpush1.msra.mxu0 0.0
      %1484 = vmatprep.subr.mxu0 0.0
      %1485 = vmatpush1.msra.mxu0 0.0
      %1486 = vmatprep.subr.mxu0 0.0
      %1487 = vmatpush1.msra.mxu0 0.0
      %1488 = vmatprep.subr.mxu0 0.0
      %1489 = vmatpush1.msra.mxu0 0.0
      %1490 = vmatprep.subr.mxu0 0.0
      %1491 = vmatpush1.msra.mxu0 0.0
      %1492 = vmatprep.subr.mxu0 0.0
      %1493 = vmatpush1.msra.mxu0 0.0
      %1494 = vmatprep.mubr.f32.mxu0 0.0
      %1495 = vmatmul.mubr.f32.gmra.mrb[0].mxu0 %v1425
      %v1496 = vpop.f32.mrb[0].mxu0
      %v1497 = vadd.f32 0.0, %v1496
      %v1498 = vpop.f32.mrb[0].mxu0
      %1499 = vmatprep.mubr.f32.mxu0 0.0
      %1500 = vmatmul.mubr.f32.gmra.mrb[0].mxu0 %v1428
      %v1501 = vpop.f32.mrb[0].mxu0
      %v1502 = vadd.f32 0.0, %v1501
      %v1503 = vpop.f32.mrb[0].mxu0
      %1504 = vdwg.mxu0
      %v1505 = vadd.f32 %v1280, %v1497
      %v1506 = vadd.f32 %v1281, %v1502
      %v1507 = vlaneseq
      %v1508 = vshrl.u32 %v1507, 7
      %v1509 = vsub.s32 5, %v1508
      %v1510 = vrot.slane %v212, %v1509
      %v1511 = vadd.f32 %v1505, %v1510
      %v1512 = vadd.f32 %v1506, %v1510
      %s1513 = scalar_lea.vmem %s1, 64
      %v1514 = vld [vmem:[%s1513] sm:$0xff]
      %v1515 = vld [vmem:[%s1513 + $0x8] sm:$0xff]
      %v1516 = vld [vmem:[%s1513 + $0x10] sm:$0xff]
      %v1517 = vld [vmem:[%s1513 + $0x18] sm:$0xff]
      %v1518 = vld [vmem:[%s1513 + $0x20] sm:$0xff]
      %v1519 = vld [vmem:[%s1513 + $0x28] sm:$0xff]
      %v1520 = vld [vmem:[%s1513 + $0x30] sm:$0xff]
      %v1521 = vld [vmem:[%s1513 + $0x38] sm:$0xff]
      %s1522 = scalar_lea.vmem %s2, 64
      %v1523 = vld [vmem:[%s1522] sm:$0xff]
      %v1524 = vld [vmem:[%s1522 + $0x8] sm:$0xff]
      %v1525 = vld [vmem:[%s1522 + $0x10] sm:$0xff]
      %v1526 = vld [vmem:[%s1522 + $0x18] sm:$0xff]
      %v1527 = vld [vmem:[%s1522 + $0x20] sm:$0xff]
      %v1528 = vld [vmem:[%s1522 + $0x28] sm:$0xff]
      %v1529 = vld [vmem:[%s1522 + $0x30] sm:$0xff]
      %v1530 = vld [vmem:[%s1522 + $0x38] sm:$0xff]
      %s1531 = scalar_lea.vmem %s3, 8
      %v1532 = vld [vmem:[%s1531] sm:$0xff]
      %v1533 = vsel %vm213, %v1511, 0.0
      %1534 = vadd.xlane.f32.xlu0 %v1533
      %v1535 = vpop.xlane.xlu0 %1534
      %v1536 = vsel %vm217, %v1512, 0.0
      %1537 = vadd.xlane.f32.xlu0 %v1536
      %v1538 = vpop.xlane.xlu0 %1537
      %v1539 = vmul.f32 %v1535, %v221
      %v1540 = vmul.f32 %v1538, %v221
      %v1541 = vsub.f32 %v1511, %v1539
      %v1542 = vsub.f32 %v1512, %v1540
      %v1543 = vmul.f32 %v1541, %v1541
      %v1544 = vmul.f32 %v1542, %v1542
      %v1545 = vsel %vm213, %v1543, 0.0
      %1546 = vadd.xlane.f32.xlu0 %v1545
      %v1547 = vpop.xlane.xlu0 %1546
      %v1548 = vsel %vm217, %v1544, 0.0
      %1549 = vadd.xlane.f32.xlu0 %v1548
      %v1550 = vpop.xlane.xlu0 %1549
      %v1551 = vmul.f32 %v1547, %v221
      %v1552 = vmul.f32 %v1550, %v221
      %v1553 = vadd.f32 %v1551, 1e-05
      %v1554 = vadd.f32 %v1552, 1e-05
      %v1555 = vrsqrt.pop %v1553
      %v1556 = vrsqrt.pop %v1554
      %v1557 = vmul.f32 %v1541, %v1555
      %v1558 = vmul.f32 %v1542, %v1556
      %v1559 = vlaneseq
      %v1560 = vshrl.u32 %v1559, 7
      %v1561 = vsub.s32 0, %v1560
      %v1562 = vrot.slane %v1532, %v1561
      %v1563 = vmul.f32 %v1557, %v1562
      %v1564 = vmul.f32 %v1558, %v1562
      %v1565 = vlaneseq
      %v1566 = vshrl.u32 %v1565, 7
      %v1567 = vsub.s32 1, %v1566
      %v1568 = vrot.slane %v1532, %v1567
      %v1569 = vadd.f32 %v1563, %v1568
      %v1570 = vadd.f32 %v1564, %v1568
      %v1572 = vsel %vm213, %v1569, 0
      %v1575 = vsel %vm213, %v1570, 0
      %1577 = vmatprep.subr.mxu0 0.0
      %1578 = vmatpush1.msra.mxu0 %v1514
      %1579 = vmatprep.subr.mxu0 0.0
      %1580 = vmatpush1.msra.mxu0 %v1516
      %1581 = vmatprep.subr.mxu0 0.0
      %1582 = vmatpush1.msra.mxu0 %v1518
      %1583 = vmatprep.subr.mxu0 0.0
      %1584 = vmatpush1.msra.mxu0 %v1520
      %1585 = vmatprep.subr.mxu0 0.0
      %1586 = vmatpush1.msra.mxu0 0.0
      %1587 = vmatprep.subr.mxu0 0.0
      %1588 = vmatpush1.msra.mxu0 0.0
      %1589 = vmatprep.subr.mxu0 0.0
      %1590 = vmatpush1.msra.mxu0 0.0
      %1591 = vmatprep.subr.mxu0 0.0
      %1592 = vmatpush1.msra.mxu0 0.0
      %1593 = vmatprep.subr.mxu0 0.0
      %1594 = vmatpush1.msra.mxu0 0.0
      %1595 = vmatprep.subr.mxu0 0.0
      %1596 = vmatpush1.msra.mxu0 0.0
      %1597 = vmatprep.subr.mxu0 0.0
      %1598 = vmatpush1.msra.mxu0 0.0
      %1599 = vmatprep.subr.mxu0 0.0
      %1600 = vmatpush1.msra.mxu0 0.0
      %1601 = vmatprep.subr.mxu0 0.0
      %1602 = vmatpush1.msra.mxu0 0.0
      %1603 = vmatprep.subr.mxu0 0.0
      %1604 = vmatpush1.msra.mxu0 0.0
      %1605 = vmatprep.subr.mxu0 0.0
      %1606 = vmatpush1.msra.mxu0 0.0
      %1607 = vmatprep.subr.mxu0 0.0
      %1608 = vmatpush1.msra.mxu0 0.0
      %1609 = vmatprep.subr.mxu0 0.0
      %1610 = vmatpush1.msra.mxu0 0.0
      %1611 = vmatprep.subr.mxu0 0.0
      %1612 = vmatpush1.msra.mxu0 0.0
      %1613 = vmatprep.subr.mxu0 0.0
      %1614 = vmatpush1.msra.mxu0 0.0
      %1615 = vmatprep.subr.mxu0 0.0
      %1616 = vmatpush1.msra.mxu0 0.0
      %1617 = vmatprep.subr.mxu0 0.0
      %1618 = vmatpush1.msra.mxu0 0.0
      %1619 = vmatprep.subr.mxu0 0.0
      %1620 = vmatpush1.msra.mxu0 0.0
      %1621 = vmatprep.subr.mxu0 0.0
      %1622 = vmatpush1.msra.mxu0 0.0
      %1623 = vmatprep.subr.mxu0 0.0
      %1624 = vmatpush1.msra.mxu0 0.0
      %1625 = vmatprep.subr.mxu0 0.0
      %1626 = vmatpush1.msra.mxu0 0.0
      %1627 = vmatprep.subr.mxu0 0.0
      %1628 = vmatpush1.msra.mxu0 0.0
      %1629 = vmatprep.subr.mxu0 0.0
      %1630 = vmatpush1.msra.mxu0 0.0
      %1631 = vmatprep.subr.mxu0 0.0
      %1632 = vmatpush1.msra.mxu0 0.0
      %1633 = vmatprep.subr.mxu0 0.0
      %1634 = vmatpush1.msra.mxu0 0.0
      %1635 = vmatprep.subr.mxu0 0.0
      %1636 = vmatpush1.msra.mxu0 0.0
      %1637 = vmatprep.subr.mxu0 0.0
      %1638 = vmatpush1.msra.mxu0 0.0
      %1639 = vmatprep.subr.mxu0 0.0
      %1640 = vmatpush1.msra.mxu0 0.0
      %1641 = vmatprep.mubr.f32.mxu0 0.0
      %1642 = vmatmul.mubr.f32.gmra.mrb[0].mxu0 %v1572
      %v1643 = vpop.f32.mrb[0].mxu0
      %v1644 = vadd.f32 0.0, %v1643
      %v1645 = vpop.f32.mrb[0].mxu0
      %1646 = vmatprep.mubr.f32.mxu0 0.0
      %1647 = vmatmul.mubr.f32.gmra.mrb[0].mxu0 %v1575
      %v1648 = vpop.f32.mrb[0].mxu0
      %v1649 = vadd.f32 0.0, %v1648
      %v1650 = vpop.f32.mrb[0].mxu0
      %1651 = vdwg.mxu0
      %v1652 = vmul.f32 %v1644, 0.35355338
      %v1653 = vmul.f32 %v1649, 0.35355338
      %1656 = vrot.lane.b32.xlu0 %v1644, 96
      %v1657 = vpop.permute.xlu0 %1656
      %1658 = vrot.lane.b32.xlu0 %v1649, 96
      %v1659 = vpop.permute.xlu0 %1658
      %v1661 = vsel %vm343, %v1652, 0
      %v1664 = vsel %vm343, %v1653, 0
      %v1666 = vsel %vm343, %v1657, 0
      %v1668 = vsel %vm343, %v1659, 0
      %1670 = vmatprep.subr.mxu0 0.0
      %1671 = vmatpush1.xpose.msra.mxu0 %v1666
      %1672 = vmatprep.subr.mxu0 0.0
      %1673 = vmatpush1.xpose.msra.mxu0 %v1668
      %1674 = vmatprep.subr.mxu0 0.0
      %1675 = vmatpush1.xpose.msra.mxu0 0.0
      %1676 = vmatprep.subr.mxu0 0.0
      %1677 = vmatpush1.xpose.msra.mxu0 0.0
      %1678 = vmatprep.subr.mxu0 0.0
      %1679 = vmatpush1.xpose.msra.mxu0 0.0
      %1680 = vmatprep.subr.mxu0 0.0
      %1681 = vmatpush1.xpose.msra.mxu0 0.0
      %1682 = vmatprep.subr.mxu0 0.0
      %1683 = vmatpush1.xpose.msra.mxu0 0.0
      %1684 = vmatprep.subr.mxu0 0.0
      %1685 = vmatpush1.xpose.msra.mxu0 0.0
      %1686 = vmatprep.subr.mxu0 0.0
      %1687 = vmatpush1.xpose.msra.mxu0 0.0
      %1688 = vmatprep.subr.mxu0 0.0
      %1689 = vmatpush1.xpose.msra.mxu0 0.0
      %1690 = vmatprep.subr.mxu0 0.0
      %1691 = vmatpush1.xpose.msra.mxu0 0.0
      %1692 = vmatprep.subr.mxu0 0.0
      %1693 = vmatpush1.xpose.msra.mxu0 0.0
      %1694 = vmatprep.subr.mxu0 0.0
      %1695 = vmatpush1.xpose.msra.mxu0 0.0
      %1696 = vmatprep.subr.mxu0 0.0
      %1697 = vmatpush1.xpose.msra.mxu0 0.0
      %1698 = vmatprep.subr.mxu0 0.0
      %1699 = vmatpush1.xpose.msra.mxu0 0.0
      %1700 = vmatprep.subr.mxu0 0.0
      %1701 = vmatpush1.xpose.msra.mxu0 0.0
      %1702 = vmatprep.subr.mxu0 0.0
      %1703 = vmatpush1.xpose.msra.mxu0 0.0
      %1704 = vmatprep.subr.mxu0 0.0
      %1705 = vmatpush1.xpose.msra.mxu0 0.0
      %1706 = vmatprep.subr.mxu0 0.0
      %1707 = vmatpush1.xpose.msra.mxu0 0.0
      %1708 = vmatprep.subr.mxu0 0.0
      %1709 = vmatpush1.xpose.msra.mxu0 0.0
      %1710 = vmatprep.subr.mxu0 0.0
      %1711 = vmatpush1.xpose.msra.mxu0 0.0
      %1712 = vmatprep.subr.mxu0 0.0
      %1713 = vmatpush1.xpose.msra.mxu0 0.0
      %1714 = vmatprep.subr.mxu0 0.0
      %1715 = vmatpush1.xpose.msra.mxu0 0.0
      %1716 = vmatprep.subr.mxu0 0.0
      %1717 = vmatpush1.xpose.msra.mxu0 0.0
      %1718 = vmatprep.subr.mxu0 0.0
      %1719 = vmatpush1.xpose.msra.mxu0 0.0
      %1720 = vmatprep.subr.mxu0 0.0
      %1721 = vmatpush1.xpose.msra.mxu0 0.0
      %1722 = vmatprep.subr.mxu0 0.0
      %1723 = vmatpush1.xpose.msra.mxu0 0.0
      %1724 = vmatprep.subr.mxu0 0.0
      %1725 = vmatpush1.xpose.msra.mxu0 0.0
      %1726 = vmatprep.subr.mxu0 0.0
      %1727 = vmatpush1.xpose.msra.mxu0 0.0
      %1728 = vmatprep.subr.mxu0 0.0
      %1729 = vmatpush1.xpose.msra.mxu0 0.0
      %1730 = vmatprep.subr.mxu0 0.0
      %1731 = vmatpush1.xpose.msra.mxu0 0.0
      %1732 = vmatprep.subr.mxu0 0.0
      %1733 = vmatpush1.xpose.msra.mxu0 0.0
      %1734 = vmatprep.mubr.f32.mxu0 0.0
      %1735 = vmatmul.mubr.f32.gmra.mrb[0].mxu0 %v1661
      %v1736 = vpop.f32.mrb[0].mxu0
      %v1737 = vadd.f32 0.0, %v1736
      %v1738 = vpop.f32.mrb[0].mxu0
      %1739 = vmatprep.mubr.f32.mxu0 0.0
      %1740 = vmatmul.mubr.f32.gmra.mrb[0].mxu0 %v1664
      %v1741 = vpop.f32.mrb[0].mxu0
      %v1742 = vadd.f32 0.0, %v1741
      %v1743 = vpop.f32.mrb[0].mxu0
      %1744 = vdwg.mxu0
      %v1745 = vsel %vm429, %v1737, -inf
      %1746 = vmax.xlane.f32.xlu0 %v1745
      %v1747 = vpop.xlane.xlu0 %1746
      %v1748 = vsel %vm433, %v1742, -inf
      %1749 = vmax.xlane.f32.xlu0 %v1748
      %v1750 = vpop.xlane.xlu0 %1749
      %v1751 = vsub.f32 %v1737, %v1747
      %v1752 = vsub.f32 %v1742, %v1750
      %v1753 = vmul.f32 %v1751, 1.442695
      %v1754 = vpow.pop %v1753
      %v1755 = vmul.f32 %v1752, 1.442695
      %v1756 = vpow.pop %v1755
      %v1757 = vsel %vm429, %v1754, 0.0
      %1758 = vadd.xlane.f32.xlu0 %v1757
      %v1759 = vpop.xlane.xlu0 %1758
      %v1760 = vsel %vm433, %v1756, 0.0
      %1761 = vadd.xlane.f32.xlu0 %v1760
      %v1762 = vpop.xlane.xlu0 %1761
      %v1763 = vrcp.pop %v1759
      %v1764 = vrcp.pop %v1762
      %v1765 = vmul.f32 %v1754, %v1763
      %v1766 = vmul.f32 %v1756, %v1764
      %1767 = vrot.lane.b32.xlu0 %v1644, 64
      %v1768 = vpop.permute.xlu0 %1767
      %1769 = vrot.lane.b32.xlu0 %v1649, 64
      %v1770 = vpop.permute.xlu0 %1769
      %v1773 = vsel %vm429, %v1765, 0
      %v1776 = vsel %vm429, %v1766, 0
      %v1778 = vsel %vm464, %v1770, 0
      %1780 = vmatprep.subr.mxu0 0.0
      %1781 = vmatpush1.msra.mxu0 %v1768
      %1782 = vmatprep.subr.mxu0 0.0
      %1783 = vmatpush1.msra.mxu0 %v1778
      %1784 = vmatprep.subr.mxu0 0.0
      %1785 = vmatpush1.msra.mxu0 0.0
      %1786 = vmatprep.subr.mxu0 0.0
      %1787 = vmatpush1.msra.mxu0 0.0
      %1788 = vmatprep.subr.mxu0 0.0
      %1789 = vmatpush1.msra.mxu0 0.0
      %1790 = vmatprep.subr.mxu0 0.0
      %1791 = vmatpush1.msra.mxu0 0.0
      %1792 = vmatprep.subr.mxu0 0.0
      %1793 = vmatpush1.msra.mxu0 0.0
      %1794 = vmatprep.subr.mxu0 0.0
      %1795 = vmatpush1.msra.mxu0 0.0
      %1796 = vmatprep.subr.mxu0 0.0
      %1797 = vmatpush1.msra.mxu0 0.0
      %1798 = vmatprep.subr.mxu0 0.0
      %1799 = vmatpush1.msra.mxu0 0.0
      %1800 = vmatprep.subr.mxu0 0.0
      %1801 = vmatpush1.msra.mxu0 0.0
      %1802 = vmatprep.subr.mxu0 0.0
      %1803 = vmatpush1.msra.mxu0 0.0
      %1804 = vmatprep.subr.mxu0 0.0
      %1805 = vmatpush1.msra.mxu0 0.0
      %1806 = vmatprep.subr.mxu0 0.0
      %1807 = vmatpush1.msra.mxu0 0.0
      %1808 = vmatprep.subr.mxu0 0.0
      %1809 = vmatpush1.msra.mxu0 0.0
      %1810 = vmatprep.subr.mxu0 0.0
      %1811 = vmatpush1.msra.mxu0 0.0
      %1812 = vmatprep.subr.mxu0 0.0
      %1813 = vmatpush1.msra.mxu0 0.0
      %1814 = vmatprep.subr.mxu0 0.0
      %1815 = vmatpush1.msra.mxu0 0.0
      %1816 = vmatprep.subr.mxu0 0.0
      %1817 = vmatpush1.msra.mxu0 0.0
      %1818 = vmatprep.subr.mxu0 0.0
      %1819 = vmatpush1.msra.mxu0 0.0
      %1820 = vmatprep.subr.mxu0 0.0
      %1821 = vmatpush1.msra.mxu0 0.0
      %1822 = vmatprep.subr.mxu0 0.0
      %1823 = vmatpush1.msra.mxu0 0.0
      %1824 = vmatprep.subr.mxu0 0.0
      %1825 = vmatpush1.msra.mxu0 0.0
      %1826 = vmatprep.subr.mxu0 0.0
      %1827 = vmatpush1.msra.mxu0 0.0
      %1828 = vmatprep.subr.mxu0 0.0
      %1829 = vmatpush1.msra.mxu0 0.0
      %1830 = vmatprep.subr.mxu0 0.0
      %1831 = vmatpush1.msra.mxu0 0.0
      %1832 = vmatprep.subr.mxu0 0.0
      %1833 = vmatpush1.msra.mxu0 0.0
      %1834 = vmatprep.subr.mxu0 0.0
      %1835 = vmatpush1.msra.mxu0 0.0
      %1836 = vmatprep.subr.mxu0 0.0
      %1837 = vmatpush1.msra.mxu0 0.0
      %1838 = vmatprep.subr.mxu0 0.0
      %1839 = vmatpush1.msra.mxu0 0.0
      %1840 = vmatprep.subr.mxu0 0.0
      %1841 = vmatpush1.msra.mxu0 0.0
      %1842 = vmatprep.subr.mxu0 0.0
      %1843 = vmatpush1.msra.mxu0 0.0
      %1844 = vmatprep.mubr.f32.mxu0 0.0
      %1845 = vmatmul.mubr.f32.gmra.mrb[0].mxu0 %v1773
      %v1846 = vpop.f32.mrb[0].mxu0
      %v1847 = vadd.f32 0.0, %v1846
      %v1848 = vpop.f32.mrb[0].mxu0
      %1849 = vmatprep.mubr.f32.mxu0 0.0
      %1850 = vmatmul.mubr.f32.gmra.mrb[0].mxu0 %v1776
      %v1851 = vpop.f32.mrb[0].mxu0
      %v1852 = vadd.f32 0.0, %v1851
      %v1853 = vpop.f32.mrb[0].mxu0
      %1854 = vdwg.mxu0
      %1855 = vrot.lane.b32.xlu0 %v1652, 120
      %v1856 = vpop.permute.xlu0 %1855
      %1857 = vrot.lane.b32.xlu0 %v1653, 120
      %v1858 = vpop.permute.xlu0 %1857
      %1859 = vrot.lane.b32.xlu0 %v1644, 88
      %v1860 = vpop.permute.xlu0 %1859
      %1861 = vrot.lane.b32.xlu0 %v1649, 88
      %v1862 = vpop.permute.xlu0 %1861
      %v1863 = vsel %vm343, %v1856, 0
      %v1865 = vsel %vm343, %v1858, 0
      %v1867 = vsel %vm343, %v1860, 0
      %v1869 = vsel %vm343, %v1862, 0
      %1871 = vmatprep.subr.mxu0 0.0
      %1872 = vmatpush1.xpose.msra.mxu0 %v1867
      %1873 = vmatprep.subr.mxu0 0.0
      %1874 = vmatpush1.xpose.msra.mxu0 %v1869
      %1875 = vmatprep.subr.mxu0 0.0
      %1876 = vmatpush1.xpose.msra.mxu0 0.0
      %1877 = vmatprep.subr.mxu0 0.0
      %1878 = vmatpush1.xpose.msra.mxu0 0.0
      %1879 = vmatprep.subr.mxu0 0.0
      %1880 = vmatpush1.xpose.msra.mxu0 0.0
      %1881 = vmatprep.subr.mxu0 0.0
      %1882 = vmatpush1.xpose.msra.mxu0 0.0
      %1883 = vmatprep.subr.mxu0 0.0
      %1884 = vmatpush1.xpose.msra.mxu0 0.0
      %1885 = vmatprep.subr.mxu0 0.0
      %1886 = vmatpush1.xpose.msra.mxu0 0.0
      %1887 = vmatprep.subr.mxu0 0.0
      %1888 = vmatpush1.xpose.msra.mxu0 0.0
      %1889 = vmatprep.subr.mxu0 0.0
      %1890 = vmatpush1.xpose.msra.mxu0 0.0
      %1891 = vmatprep.subr.mxu0 0.0
      %1892 = vmatpush1.xpose.msra.mxu0 0.0
      %1893 = vmatprep.subr.mxu0 0.0
      %1894 = vmatpush1.xpose.msra.mxu0 0.0
      %1895 = vmatprep.subr.mxu0 0.0
      %1896 = vmatpush1.xpose.msra.mxu0 0.0
      %1897 = vmatprep.subr.mxu0 0.0
      %1898 = vmatpush1.xpose.msra.mxu0 0.0
      %1899 = vmatprep.subr.mxu0 0.0
      %1900 = vmatpush1.xpose.msra.mxu0 0.0
      %1901 = vmatprep.subr.mxu0 0.0
      %1902 = vmatpush1.xpose.msra.mxu0 0.0
      %1903 = vmatprep.subr.mxu0 0.0
      %1904 = vmatpush1.xpose.msra.mxu0 0.0
      %1905 = vmatprep.subr.mxu0 0.0
      %1906 = vmatpush1.xpose.msra.mxu0 0.0
      %1907 = vmatprep.subr.mxu0 0.0
      %1908 = vmatpush1.xpose.msra.mxu0 0.0
      %1909 = vmatprep.subr.mxu0 0.0
      %1910 = vmatpush1.xpose.msra.mxu0 0.0
      %1911 = vmatprep.subr.mxu0 0.0
      %1912 = vmatpush1.xpose.msra.mxu0 0.0
      %1913 = vmatprep.subr.mxu0 0.0
      %1914 = vmatpush1.xpose.msra.mxu0 0.0
      %1915 = vmatprep.subr.mxu0 0.0
      %1916 = vmatpush1.xpose.msra.mxu0 0.0
      %1917 = vmatprep.subr.mxu0 0.0
      %1918 = vmatpush1.xpose.msra.mxu0 0.0
      %1919 = vmatprep.subr.mxu0 0.0
      %1920 = vmatpush1.xpose.msra.mxu0 0.0
      %1921 = vmatprep.subr.mxu0 0.0
      %1922 = vmatpush1.xpose.msra.mxu0 0.0
      %1923 = vmatprep.subr.mxu0 0.0
      %1924 = vmatpush1.xpose.msra.mxu0 0.0
      %1925 = vmatprep.subr.mxu0 0.0
      %1926 = vmatpush1.xpose.msra.mxu0 0.0
      %1927 = vmatprep.subr.mxu0 0.0
      %1928 = vmatpush1.xpose.msra.mxu0 0.0
      %1929 = vmatprep.subr.mxu0 0.0
      %1930 = vmatpush1.xpose.msra.mxu0 0.0
      %1931 = vmatprep.subr.mxu0 0.0
      %1932 = vmatpush1.xpose.msra.mxu0 0.0
      %1933 = vmatprep.subr.mxu0 0.0
      %1934 = vmatpush1.xpose.msra.mxu0 0.0
      %1935 = vmatprep.mubr.f32.mxu0 0.0
      %1936 = vmatmul.mubr.f32.gmra.mrb[0].mxu0 %v1863
      %v1937 = vpop.f32.mrb[0].mxu0
      %v1938 = vadd.f32 0.0, %v1937
      %v1939 = vpop.f32.mrb[0].mxu0
      %1940 = vmatprep.mubr.f32.mxu0 0.0
      %1941 = vmatmul.mubr.f32.gmra.mrb[0].mxu0 %v1865
      %v1942 = vpop.f32.mrb[0].mxu0
      %v1943 = vadd.f32 0.0, %v1942
      %v1944 = vpop.f32.mrb[0].mxu0
      %1945 = vdwg.mxu0
      %v1946 = vsel %vm429, %v1938, -inf
      %1947 = vmax.xlane.f32.xlu0 %v1946
      %v1948 = vpop.xlane.xlu0 %1947
      %v1949 = vsel %vm433, %v1943, -inf
      %1950 = vmax.xlane.f32.xlu0 %v1949
      %v1951 = vpop.xlane.xlu0 %1950
      %v1952 = vsub.f32 %v1938, %v1948
      %v1953 = vsub.f32 %v1943, %v1951
      %v1954 = vmul.f32 %v1952, 1.442695
      %v1955 = vpow.pop %v1954
      %v1956 = vmul.f32 %v1953, 1.442695
      %v1957 = vpow.pop %v1956
      %v1958 = vsel %vm429, %v1955, 0.0
      %1959 = vadd.xlane.f32.xlu0 %v1958
      %v1960 = vpop.xlane.xlu0 %1959
      %v1961 = vsel %vm433, %v1957, 0.0
      %1962 = vadd.xlane.f32.xlu0 %v1961
      %v1963 = vpop.xlane.xlu0 %1962
      %v1964 = vrcp.pop %v1960
      %v1965 = vrcp.pop %v1963
      %v1966 = vmul.f32 %v1955, %v1964
      %v1967 = vmul.f32 %v1957, %v1965
      %1968 = vrot.lane.b32.xlu0 %v1644, 56
      %v1969 = vpop.permute.xlu0 %1968
      %1970 = vrot.lane.b32.xlu0 %v1649, 56
      %v1971 = vpop.permute.xlu0 %1970
      %v1974 = vsel %vm429, %v1966, 0
      %v1977 = vsel %vm429, %v1967, 0
      %v1979 = vsel %vm464, %v1971, 0
      %1981 = vmatprep.subr.mxu0 0.0
      %1982 = vmatpush1.msra.mxu0 %v1969
      %1983 = vmatprep.subr.mxu0 0.0
      %1984 = vmatpush1.msra.mxu0 %v1979
      %1985 = vmatprep.subr.mxu0 0.0
      %1986 = vmatpush1.msra.mxu0 0.0
      %1987 = vmatprep.subr.mxu0 0.0
      %1988 = vmatpush1.msra.mxu0 0.0
      %1989 = vmatprep.subr.mxu0 0.0
      %1990 = vmatpush1.msra.mxu0 0.0
      %1991 = vmatprep.subr.mxu0 0.0
      %1992 = vmatpush1.msra.mxu0 0.0
      %1993 = vmatprep.subr.mxu0 0.0
      %1994 = vmatpush1.msra.mxu0 0.0
      %1995 = vmatprep.subr.mxu0 0.0
      %1996 = vmatpush1.msra.mxu0 0.0
      %1997 = vmatprep.subr.mxu0 0.0
      %1998 = vmatpush1.msra.mxu0 0.0
      %1999 = vmatprep.subr.mxu0 0.0
      %2000 = vmatpush1.msra.mxu0 0.0
      %2001 = vmatprep.subr.mxu0 0.0
      %2002 = vmatpush1.msra.mxu0 0.0
      %2003 = vmatprep.subr.mxu0 0.0
      %2004 = vmatpush1.msra.mxu0 0.0
      %2005 = vmatprep.subr.mxu0 0.0
      %2006 = vmatpush1.msra.mxu0 0.0
      %2007 = vmatprep.subr.mxu0 0.0
      %2008 = vmatpush1.msra.mxu0 0.0
      %2009 = vmatprep.subr.mxu0 0.0
      %2010 = vmatpush1.msra.mxu0 0.0
      %2011 = vmatprep.subr.mxu0 0.0
      %2012 = vmatpush1.msra.mxu0 0.0
      %2013 = vmatprep.subr.mxu0 0.0
      %2014 = vmatpush1.msra.mxu0 0.0
      %2015 = vmatprep.subr.mxu0 0.0
      %2016 = vmatpush1.msra.mxu0 0.0
      %2017 = vmatprep.subr.mxu0 0.0
      %2018 = vmatpush1.msra.mxu0 0.0
      %2019 = vmatprep.subr.mxu0 0.0
      %2020 = vmatpush1.msra.mxu0 0.0
      %2021 = vmatprep.subr.mxu0 0.0
      %2022 = vmatpush1.msra.mxu0 0.0
      %2023 = vmatprep.subr.mxu0 0.0
      %2024 = vmatpush1.msra.mxu0 0.0
      %2025 = vmatprep.subr.mxu0 0.0
      %2026 = vmatpush1.msra.mxu0 0.0
      %2027 = vmatprep.subr.mxu0 0.0
      %2028 = vmatpush1.msra.mxu0 0.0
      %2029 = vmatprep.subr.mxu0 0.0
      %2030 = vmatpush1.msra.mxu0 0.0
      %2031 = vmatprep.subr.mxu0 0.0
      %2032 = vmatpush1.msra.mxu0 0.0
      %2033 = vmatprep.subr.mxu0 0.0
      %2034 = vmatpush1.msra.mxu0 0.0
      %2035 = vmatprep.subr.mxu0 0.0
      %2036 = vmatpush1.msra.mxu0 0.0
      %2037 = vmatprep.subr.mxu0 0.0
      %2038 = vmatpush1.msra.mxu0 0.0
      %2039 = vmatprep.subr.mxu0 0.0
      %2040 = vmatpush1.msra.mxu0 0.0
      %2041 = vmatprep.subr.mxu0 0.0
      %2042 = vmatpush1.msra.mxu0 0.0
      %2043 = vmatprep.subr.mxu0 0.0
      %2044 = vmatpush1.msra.mxu0 0.0
      %2045 = vmatprep.mubr.f32.mxu0 0.0
      %2046 = vmatmul.mubr.f32.gmra.mrb[0].mxu0 %v1974
      %v2047 = vpop.f32.mrb[0].mxu0
      %v2048 = vadd.f32 0.0, %v2047
      %v2049 = vpop.f32.mrb[0].mxu0
      %2050 = vmatprep.mubr.f32.mxu0 0.0
      %2051 = vmatmul.mubr.f32.gmra.mrb[0].mxu0 %v1977
      %v2052 = vpop.f32.mrb[0].mxu0
      %v2053 = vadd.f32 0.0, %v2052
      %v2054 = vpop.f32.mrb[0].mxu0
      %2055 = vdwg.mxu0
      %2056 = vrot.lane.b32.xlu0 %v1652, 112
      %v2057 = vpop.permute.xlu0 %2056
      %2058 = vrot.lane.b32.xlu0 %v1653, 112
      %v2059 = vpop.permute.xlu0 %2058
      %2060 = vrot.lane.b32.xlu0 %v1644, 80
      %v2061 = vpop.permute.xlu0 %2060
      %2062 = vrot.lane.b32.xlu0 %v1649, 80
      %v2063 = vpop.permute.xlu0 %2062
      %v2064 = vsel %vm343, %v2057, 0
      %v2066 = vsel %vm343, %v2059, 0
      %v2068 = vsel %vm343, %v2061, 0
      %v2070 = vsel %vm343, %v2063, 0
      %2072 = vmatprep.subr.mxu0 0.0
      %2073 = vmatpush1.xpose.msra.mxu0 %v2068
      %2074 = vmatprep.subr.mxu0 0.0
      %2075 = vmatpush1.xpose.msra.mxu0 %v2070
      %2076 = vmatprep.subr.mxu0 0.0
      %2077 = vmatpush1.xpose.msra.mxu0 0.0
      %2078 = vmatprep.subr.mxu0 0.0
      %2079 = vmatpush1.xpose.msra.mxu0 0.0
      %2080 = vmatprep.subr.mxu0 0.0
      %2081 = vmatpush1.xpose.msra.mxu0 0.0
      %2082 = vmatprep.subr.mxu0 0.0
      %2083 = vmatpush1.xpose.msra.mxu0 0.0
      %2084 = vmatprep.subr.mxu0 0.0
      %2085 = vmatpush1.xpose.msra.mxu0 0.0
      %2086 = vmatprep.subr.mxu0 0.0
      %2087 = vmatpush1.xpose.msra.mxu0 0.0
      %2088 = vmatprep.subr.mxu0 0.0
      %2089 = vmatpush1.xpose.msra.mxu0 0.0
      %2090 = vmatprep.subr.mxu0 0.0
      %2091 = vmatpush1.xpose.msra.mxu0 0.0
      %2092 = vmatprep.subr.mxu0 0.0
      %2093 = vmatpush1.xpose.msra.mxu0 0.0
      %2094 = vmatprep.subr.mxu0 0.0
      %2095 = vmatpush1.xpose.msra.mxu0 0.0
      %2096 = vmatprep.subr.mxu0 0.0
      %2097 = vmatpush1.xpose.msra.mxu0 0.0
      %2098 = vmatprep.subr.mxu0 0.0
      %2099 = vmatpush1.xpose.msra.mxu0 0.0
      %2100 = vmatprep.subr.mxu0 0.0
      %2101 = vmatpush1.xpose.msra.mxu0 0.0
      %2102 = vmatprep.subr.mxu0 0.0
      %2103 = vmatpush1.xpose.msra.mxu0 0.0
      %2104 = vmatprep.subr.mxu0 0.0
      %2105 = vmatpush1.xpose.msra.mxu0 0.0
      %2106 = vmatprep.subr.mxu0 0.0
      %2107 = vmatpush1.xpose.msra.mxu0 0.0
      %2108 = vmatprep.subr.mxu0 0.0
      %2109 = vmatpush1.xpose.msra.mxu0 0.0
      %2110 = vmatprep.subr.mxu0 0.0
      %2111 = vmatpush1.xpose.msra.mxu0 0.0
      %2112 = vmatprep.subr.mxu0 0.0
      %2113 = vmatpush1.xpose.msra.mxu0 0.0
      %2114 = vmatprep.subr.mxu0 0.0
      %2115 = vmatpush1.xpose.msra.mxu0 0.0
      %2116 = vmatprep.subr.mxu0 0.0
      %2117 = vmatpush1.xpose.msra.mxu0 0.0
      %2118 = vmatprep.subr.mxu0 0.0
      %2119 = vmatpush1.xpose.msra.mxu0 0.0
      %2120 = vmatprep.subr.mxu0 0.0
      %2121 = vmatpush1.xpose.msra.mxu0 0.0
      %2122 = vmatprep.subr.mxu0 0.0
      %2123 = vmatpush1.xpose.msra.mxu0 0.0
      %2124 = vmatprep.subr.mxu0 0.0
      %2125 = vmatpush1.xpose.msra.mxu0 0.0
      %2126 = vmatprep.subr.mxu0 0.0
      %2127 = vmatpush1.xpose.msra.mxu0 0.0
      %2128 = vmatprep.subr.mxu0 0.0
      %2129 = vmatpush1.xpose.msra.mxu0 0.0
      %2130 = vmatprep.subr.mxu0 0.0
      %2131 = vmatpush1.xpose.msra.mxu0 0.0
      %2132 = vmatprep.subr.mxu0 0.0
      %2133 = vmatpush1.xpose.msra.mxu0 0.0
      %2134 = vmatprep.subr.mxu0 0.0
      %2135 = vmatpush1.xpose.msra.mxu0 0.0
      %2136 = vmatprep.mubr.f32.mxu0 0.0
      %2137 = vmatmul.mubr.f32.gmra.mrb[0].mxu0 %v2064
      %v2138 = vpop.f32.mrb[0].mxu0
      %v2139 = vadd.f32 0.0, %v2138
      %v2140 = vpop.f32.mrb[0].mxu0
      %2141 = vmatprep.mubr.f32.mxu0 0.0
      %2142 = vmatmul.mubr.f32.gmra.mrb[0].mxu0 %v2066
      %v2143 = vpop.f32.mrb[0].mxu0
      %v2144 = vadd.f32 0.0, %v2143
      %v2145 = vpop.f32.mrb[0].mxu0
      %2146 = vdwg.mxu0
      %v2147 = vsel %vm429, %v2139, -inf
      %2148 = vmax.xlane.f32.xlu0 %v2147
      %v2149 = vpop.xlane.xlu0 %2148
      %v2150 = vsel %vm433, %v2144, -inf
      %2151 = vmax.xlane.f32.xlu0 %v2150
      %v2152 = vpop.xlane.xlu0 %2151
      %v2153 = vsub.f32 %v2139, %v2149
      %v2154 = vsub.f32 %v2144, %v2152
      %v2155 = vmul.f32 %v2153, 1.442695
      %v2156 = vpow.pop %v2155
      %v2157 = vmul.f32 %v2154, 1.442695
      %v2158 = vpow.pop %v2157
      %v2159 = vsel %vm429, %v2156, 0.0
      %2160 = vadd.xlane.f32.xlu0 %v2159
      %v2161 = vpop.xlane.xlu0 %2160
      %v2162 = vsel %vm433, %v2158, 0.0
      %2163 = vadd.xlane.f32.xlu0 %v2162
      %v2164 = vpop.xlane.xlu0 %2163
      %v2165 = vrcp.pop %v2161
      %v2166 = vrcp.pop %v2164
      %v2167 = vmul.f32 %v2156, %v2165
      %v2168 = vmul.f32 %v2158, %v2166
      %2169 = vrot.lane.b32.xlu0 %v1644, 48
      %v2170 = vpop.permute.xlu0 %2169
      %2171 = vrot.lane.b32.xlu0 %v1649, 48
      %v2172 = vpop.permute.xlu0 %2171
      %v2175 = vsel %vm429, %v2167, 0
      %v2178 = vsel %vm429, %v2168, 0
      %v2180 = vsel %vm464, %v2172, 0
      %2182 = vmatprep.subr.mxu0 0.0
      %2183 = vmatpush1.msra.mxu0 %v2170
      %2184 = vmatprep.subr.mxu0 0.0
      %2185 = vmatpush1.msra.mxu0 %v2180
      %2186 = vmatprep.subr.mxu0 0.0
      %2187 = vmatpush1.msra.mxu0 0.0
      %2188 = vmatprep.subr.mxu0 0.0
      %2189 = vmatpush1.msra.mxu0 0.0
      %2190 = vmatprep.subr.mxu0 0.0
      %2191 = vmatpush1.msra.mxu0 0.0
      %2192 = vmatprep.subr.mxu0 0.0
      %2193 = vmatpush1.msra.mxu0 0.0
      %2194 = vmatprep.subr.mxu0 0.0
      %2195 = vmatpush1.msra.mxu0 0.0
      %2196 = vmatprep.subr.mxu0 0.0
      %2197 = vmatpush1.msra.mxu0 0.0
      %2198 = vmatprep.subr.mxu0 0.0
      %2199 = vmatpush1.msra.mxu0 0.0
      %2200 = vmatprep.subr.mxu0 0.0
      %2201 = vmatpush1.msra.mxu0 0.0
      %2202 = vmatprep.subr.mxu0 0.0
      %2203 = vmatpush1.msra.mxu0 0.0
      %2204 = vmatprep.subr.mxu0 0.0
      %2205 = vmatpush1.msra.mxu0 0.0
      %2206 = vmatprep.subr.mxu0 0.0
      %2207 = vmatpush1.msra.mxu0 0.0
      %2208 = vmatprep.subr.mxu0 0.0
      %2209 = vmatpush1.msra.mxu0 0.0
      %2210 = vmatprep.subr.mxu0 0.0
      %2211 = vmatpush1.msra.mxu0 0.0
      %2212 = vmatprep.subr.mxu0 0.0
      %2213 = vmatpush1.msra.mxu0 0.0
      %2214 = vmatprep.subr.mxu0 0.0
      %2215 = vmatpush1.msra.mxu0 0.0
      %2216 = vmatprep.subr.mxu0 0.0
      %2217 = vmatpush1.msra.mxu0 0.0
      %2218 = vmatprep.subr.mxu0 0.0
      %2219 = vmatpush1.msra.mxu0 0.0
      %2220 = vmatprep.subr.mxu0 0.0
      %2221 = vmatpush1.msra.mxu0 0.0
      %2222 = vmatprep.subr.mxu0 0.0
      %2223 = vmatpush1.msra.mxu0 0.0
      %2224 = vmatprep.subr.mxu0 0.0
      %2225 = vmatpush1.msra.mxu0 0.0
      %2226 = vmatprep.subr.mxu0 0.0
      %2227 = vmatpush1.msra.mxu0 0.0
      %2228 = vmatprep.subr.mxu0 0.0
      %2229 = vmatpush1.msra.mxu0 0.0
      %2230 = vmatprep.subr.mxu0 0.0
      %2231 = vmatpush1.msra.mxu0 0.0
      %2232 = vmatprep.subr.mxu0 0.0
      %2233 = vmatpush1.msra.mxu0 0.0
      %2234 = vmatprep.subr.mxu0 0.0
      %2235 = vmatpush1.msra.mxu0 0.0
      %2236 = vmatprep.subr.mxu0 0.0
      %2237 = vmatpush1.msra.mxu0 0.0
      %2238 = vmatprep.subr.mxu0 0.0
      %2239 = vmatpush1.msra.mxu0 0.0
      %2240 = vmatprep.subr.mxu0 0.0
      %2241 = vmatpush1.msra.mxu0 0.0
      %2242 = vmatprep.subr.mxu0 0.0
      %2243 = vmatpush1.msra.mxu0 0.0
      %2244 = vmatprep.subr.mxu0 0.0
      %2245 = vmatpush1.msra.mxu0 0.0
      %2246 = vmatprep.mubr.f32.mxu0 0.0
      %2247 = vmatmul.mubr.f32.gmra.mrb[0].mxu0 %v2175
      %v2248 = vpop.f32.mrb[0].mxu0
      %v2249 = vadd.f32 0.0, %v2248
      %v2250 = vpop.f32.mrb[0].mxu0
      %2251 = vmatprep.mubr.f32.mxu0 0.0
      %2252 = vmatmul.mubr.f32.gmra.mrb[0].mxu0 %v2178
      %v2253 = vpop.f32.mrb[0].mxu0
      %v2254 = vadd.f32 0.0, %v2253
      %v2255 = vpop.f32.mrb[0].mxu0
      %2256 = vdwg.mxu0
      %2257 = vrot.lane.b32.xlu0 %v1652, 104
      %v2258 = vpop.permute.xlu0 %2257
      %2259 = vrot.lane.b32.xlu0 %v1653, 104
      %v2260 = vpop.permute.xlu0 %2259
      %2261 = vrot.lane.b32.xlu0 %v1644, 72
      %v2262 = vpop.permute.xlu0 %2261
      %2263 = vrot.lane.b32.xlu0 %v1649, 72
      %v2264 = vpop.permute.xlu0 %2263
      %v2265 = vsel %vm343, %v2258, 0
      %v2267 = vsel %vm343, %v2260, 0
      %v2269 = vsel %vm343, %v2262, 0
      %v2271 = vsel %vm343, %v2264, 0
      %2273 = vmatprep.subr.mxu0 0.0
      %2274 = vmatpush1.xpose.msra.mxu0 %v2269
      %2275 = vmatprep.subr.mxu0 0.0
      %2276 = vmatpush1.xpose.msra.mxu0 %v2271
      %2277 = vmatprep.subr.mxu0 0.0
      %2278 = vmatpush1.xpose.msra.mxu0 0.0
      %2279 = vmatprep.subr.mxu0 0.0
      %2280 = vmatpush1.xpose.msra.mxu0 0.0
      %2281 = vmatprep.subr.mxu0 0.0
      %2282 = vmatpush1.xpose.msra.mxu0 0.0
      %2283 = vmatprep.subr.mxu0 0.0
      %2284 = vmatpush1.xpose.msra.mxu0 0.0
      %2285 = vmatprep.subr.mxu0 0.0
      %2286 = vmatpush1.xpose.msra.mxu0 0.0
      %2287 = vmatprep.subr.mxu0 0.0
      %2288 = vmatpush1.xpose.msra.mxu0 0.0
      %2289 = vmatprep.subr.mxu0 0.0
      %2290 = vmatpush1.xpose.msra.mxu0 0.0
      %2291 = vmatprep.subr.mxu0 0.0
      %2292 = vmatpush1.xpose.msra.mxu0 0.0
      %2293 = vmatprep.subr.mxu0 0.0
      %2294 = vmatpush1.xpose.msra.mxu0 0.0
      %2295 = vmatprep.subr.mxu0 0.0
      %2296 = vmatpush1.xpose.msra.mxu0 0.0
      %2297 = vmatprep.subr.mxu0 0.0
      %2298 = vmatpush1.xpose.msra.mxu0 0.0
      %2299 = vmatprep.subr.mxu0 0.0
      %2300 = vmatpush1.xpose.msra.mxu0 0.0
      %2301 = vmatprep.subr.mxu0 0.0
      %2302 = vmatpush1.xpose.msra.mxu0 0.0
      %2303 = vmatprep.subr.mxu0 0.0
      %2304 = vmatpush1.xpose.msra.mxu0 0.0
      %2305 = vmatprep.subr.mxu0 0.0
      %2306 = vmatpush1.xpose.msra.mxu0 0.0
      %2307 = vmatprep.subr.mxu0 0.0
      %2308 = vmatpush1.xpose.msra.mxu0 0.0
      %2309 = vmatprep.subr.mxu0 0.0
      %2310 = vmatpush1.xpose.msra.mxu0 0.0
      %2311 = vmatprep.subr.mxu0 0.0
      %2312 = vmatpush1.xpose.msra.mxu0 0.0
      %2313 = vmatprep.subr.mxu0 0.0
      %2314 = vmatpush1.xpose.msra.mxu0 0.0
      %2315 = vmatprep.subr.mxu0 0.0
      %2316 = vmatpush1.xpose.msra.mxu0 0.0
      %2317 = vmatprep.subr.mxu0 0.0
      %2318 = vmatpush1.xpose.msra.mxu0 0.0
      %2319 = vmatprep.subr.mxu0 0.0
      %2320 = vmatpush1.xpose.msra.mxu0 0.0
      %2321 = vmatprep.subr.mxu0 0.0
      %2322 = vmatpush1.xpose.msra.mxu0 0.0
      %2323 = vmatprep.subr.mxu0 0.0
      %2324 = vmatpush1.xpose.msra.mxu0 0.0
      %2325 = vmatprep.subr.mxu0 0.0
      %2326 = vmatpush1.xpose.msra.mxu0 0.0
      %2327 = vmatprep.subr.mxu0 0.0
      %2328 = vmatpush1.xpose.msra.mxu0 0.0
      %2329 = vmatprep.subr.mxu0 0.0
      %2330 = vmatpush1.xpose.msra.mxu0 0.0
      %2331 = vmatprep.subr.mxu0 0.0
      %2332 = vmatpush1.xpose.msra.mxu0 0.0
      %2333 = vmatprep.subr.mxu0 0.0
      %2334 = vmatpush1.xpose.msra.mxu0 0.0
      %2335 = vmatprep.subr.mxu0 0.0
      %2336 = vmatpush1.xpose.msra.mxu0 0.0
      %2337 = vmatprep.mubr.f32.mxu0 0.0
      %2338 = vmatmul.mubr.f32.gmra.mrb[0].mxu0 %v2265
      %v2339 = vpop.f32.mrb[0].mxu0
      %v2340 = vadd.f32 0.0, %v2339
      %v2341 = vpop.f32.mrb[0].mxu0
      %2342 = vmatprep.mubr.f32.mxu0 0.0
      %2343 = vmatmul.mubr.f32.gmra.mrb[0].mxu0 %v2267
      %v2344 = vpop.f32.mrb[0].mxu0
      %v2345 = vadd.f32 0.0, %v2344
      %v2346 = vpop.f32.mrb[0].mxu0
      %2347 = vdwg.mxu0
      %v2348 = vsel %vm429, %v2340, -inf
      %2349 = vmax.xlane.f32.xlu0 %v2348
      %v2350 = vpop.xlane.xlu0 %2349
      %v2351 = vsel %vm433, %v2345, -inf
      %2352 = vmax.xlane.f32.xlu0 %v2351
      %v2353 = vpop.xlane.xlu0 %2352
      %v2354 = vsub.f32 %v2340, %v2350
      %v2355 = vsub.f32 %v2345, %v2353
      %v2356 = vmul.f32 %v2354, 1.442695
      %v2357 = vpow.pop %v2356
      %v2358 = vmul.f32 %v2355, 1.442695
      %v2359 = vpow.pop %v2358
      %v2360 = vsel %vm429, %v2357, 0.0
      %2361 = vadd.xlane.f32.xlu0 %v2360
      %v2362 = vpop.xlane.xlu0 %2361
      %v2363 = vsel %vm433, %v2359, 0.0
      %2364 = vadd.xlane.f32.xlu0 %v2363
      %v2365 = vpop.xlane.xlu0 %2364
      %v2366 = vrcp.pop %v2362
      %v2367 = vrcp.pop %v2365
      %v2368 = vmul.f32 %v2357, %v2366
      %v2369 = vmul.f32 %v2359, %v2367
      %2370 = vrot.lane.b32.xlu0 %v1644, 40
      %v2371 = vpop.permute.xlu0 %2370
      %2372 = vrot.lane.b32.xlu0 %v1649, 40
      %v2373 = vpop.permute.xlu0 %2372
      %v2376 = vsel %vm429, %v2368, 0
      %v2379 = vsel %vm429, %v2369, 0
      %v2381 = vsel %vm464, %v2373, 0
      %2383 = vmatprep.subr.mxu0 0.0
      %2384 = vmatpush1.msra.mxu0 %v2371
      %2385 = vmatprep.subr.mxu0 0.0
      %2386 = vmatpush1.msra.mxu0 %v2381
      %2387 = vmatprep.subr.mxu0 0.0
      %2388 = vmatpush1.msra.mxu0 0.0
      %2389 = vmatprep.subr.mxu0 0.0
      %2390 = vmatpush1.msra.mxu0 0.0
      %2391 = vmatprep.subr.mxu0 0.0
      %2392 = vmatpush1.msra.mxu0 0.0
      %2393 = vmatprep.subr.mxu0 0.0
      %2394 = vmatpush1.msra.mxu0 0.0
      %2395 = vmatprep.subr.mxu0 0.0
      %2396 = vmatpush1.msra.mxu0 0.0
      %2397 = vmatprep.subr.mxu0 0.0
      %2398 = vmatpush1.msra.mxu0 0.0
      %2399 = vmatprep.subr.mxu0 0.0
      %2400 = vmatpush1.msra.mxu0 0.0
      %2401 = vmatprep.subr.mxu0 0.0
      %2402 = vmatpush1.msra.mxu0 0.0
      %2403 = vmatprep.subr.mxu0 0.0
      %2404 = vmatpush1.msra.mxu0 0.0
      %2405 = vmatprep.subr.mxu0 0.0
      %2406 = vmatpush1.msra.mxu0 0.0
      %2407 = vmatprep.subr.mxu0 0.0
      %2408 = vmatpush1.msra.mxu0 0.0
      %2409 = vmatprep.subr.mxu0 0.0
      %2410 = vmatpush1.msra.mxu0 0.0
      %2411 = vmatprep.subr.mxu0 0.0
      %2412 = vmatpush1.msra.mxu0 0.0
      %2413 = vmatprep.subr.mxu0 0.0
      %2414 = vmatpush1.msra.mxu0 0.0
      %2415 = vmatprep.subr.mxu0 0.0
      %2416 = vmatpush1.msra.mxu0 0.0
      %2417 = vmatprep.subr.mxu0 0.0
      %2418 = vmatpush1.msra.mxu0 0.0
      %2419 = vmatprep.subr.mxu0 0.0
      %2420 = vmatpush1.msra.mxu0 0.0
      %2421 = vmatprep.subr.mxu0 0.0
      %2422 = vmatpush1.msra.mxu0 0.0
      %2423 = vmatprep.subr.mxu0 0.0
      %2424 = vmatpush1.msra.mxu0 0.0
      %2425 = vmatprep.subr.mxu0 0.0
      %2426 = vmatpush1.msra.mxu0 0.0
      %2427 = vmatprep.subr.mxu0 0.0
      %2428 = vmatpush1.msra.mxu0 0.0
      %2429 = vmatprep.subr.mxu0 0.0
      %2430 = vmatpush1.msra.mxu0 0.0
      %2431 = vmatprep.subr.mxu0 0.0
      %2432 = vmatpush1.msra.mxu0 0.0
      %2433 = vmatprep.subr.mxu0 0.0
      %2434 = vmatpush1.msra.mxu0 0.0
      %2435 = vmatprep.subr.mxu0 0.0
      %2436 = vmatpush1.msra.mxu0 0.0
      %2437 = vmatprep.subr.mxu0 0.0
      %2438 = vmatpush1.msra.mxu0 0.0
      %2439 = vmatprep.subr.mxu0 0.0
      %2440 = vmatpush1.msra.mxu0 0.0
      %2441 = vmatprep.subr.mxu0 0.0
      %2442 = vmatpush1.msra.mxu0 0.0
      %2443 = vmatprep.subr.mxu0 0.0
      %2444 = vmatpush1.msra.mxu0 0.0
      %2445 = vmatprep.subr.mxu0 0.0
      %2446 = vmatpush1.msra.mxu0 0.0
      %2447 = vmatprep.mubr.f32.mxu0 0.0
      %2448 = vmatmul.mubr.f32.gmra.mrb[0].mxu0 %v2376
      %v2449 = vpop.f32.mrb[0].mxu0
      %v2450 = vadd.f32 0.0, %v2449
      %v2451 = vpop.f32.mrb[0].mxu0
      %2452 = vmatprep.mubr.f32.mxu0 0.0
      %2453 = vmatmul.mubr.f32.gmra.mrb[0].mxu0 %v2379
      %v2454 = vpop.f32.mrb[0].mxu0
      %v2455 = vadd.f32 0.0, %v2454
      %v2456 = vpop.f32.mrb[0].mxu0
      %2457 = vdwg.mxu0
      %2460 = vrot.lane.b32.xlu0 %v2048, 8
      %v2461 = vpop.permute.xlu0 %2460
      %2462 = vrot.lane.b32.xlu0 %v2053, 8
      %v2463 = vpop.permute.xlu0 %2462
      %2468 = vrot.lane.b32.xlu0 %v2249, 16
      %v2469 = vpop.permute.xlu0 %2468
      %2470 = vrot.lane.b32.xlu0 %v2254, 16
      %v2471 = vpop.permute.xlu0 %2470
      %2476 = vrot.lane.b32.xlu0 %v2450, 24
      %v2477 = vpop.permute.xlu0 %2476
      %2478 = vrot.lane.b32.xlu0 %v2455, 24
      %v2479 = vpop.permute.xlu0 %2478
      %v2482 = vsel %vm343, %v1847, %v2461
      %v2483 = vsel %vm343, %v1852, %v2463
      %v2484 = vsel %vm1171, %v2482, %v2469
      %v2485 = vsel %vm1171, %v2483, %v2471
      %v2486 = vsel %vm1174, %v2484, %v2477
      %v2487 = vsel %vm1174, %v2485, %v2479
      %2492 = vrot.lane.b32.xlu0 %v1514, 32
      %v2493 = vpop.permute.xlu0 %2492
      %2494 = vrot.lane.b32.xlu0 %v1516, 32
      %v2495 = vpop.permute.xlu0 %2494
      %2496 = vrot.lane.b32.xlu0 %v1518, 32
      %v2497 = vpop.permute.xlu0 %2496
      %2498 = vrot.lane.b32.xlu0 %v1520, 32
      %v2499 = vpop.permute.xlu0 %2498
      %v2505 = vsel %vm213, %v2486, 0
      %v2508 = vsel %vm213, %v2487, 0
      %2510 = vmatprep.subr.mxu0 0.0
      %2511 = vmatpush1.msra.mxu0 %v2493
      %2512 = vmatprep.subr.mxu0 0.0
      %2513 = vmatpush1.msra.mxu0 %v2495
      %2514 = vmatprep.subr.mxu0 0.0
      %2515 = vmatpush1.msra.mxu0 %v2497
      %2516 = vmatprep.subr.mxu0 0.0
      %2517 = vmatpush1.msra.mxu0 %v2499
      %2518 = vmatprep.subr.mxu0 0.0
      %2519 = vmatpush1.msra.mxu0 0.0
      %2520 = vmatprep.subr.mxu0 0.0
      %2521 = vmatpush1.msra.mxu0 0.0
      %2522 = vmatprep.subr.mxu0 0.0
      %2523 = vmatpush1.msra.mxu0 0.0
      %2524 = vmatprep.subr.mxu0 0.0
      %2525 = vmatpush1.msra.mxu0 0.0
      %2526 = vmatprep.subr.mxu0 0.0
      %2527 = vmatpush1.msra.mxu0 0.0
      %2528 = vmatprep.subr.mxu0 0.0
      %2529 = vmatpush1.msra.mxu0 0.0
      %2530 = vmatprep.subr.mxu0 0.0
      %2531 = vmatpush1.msra.mxu0 0.0
      %2532 = vmatprep.subr.mxu0 0.0
      %2533 = vmatpush1.msra.mxu0 0.0
      %2534 = vmatprep.subr.mxu0 0.0
      %2535 = vmatpush1.msra.mxu0 0.0
      %2536 = vmatprep.subr.mxu0 0.0
      %2537 = vmatpush1.msra.mxu0 0.0
      %2538 = vmatprep.subr.mxu0 0.0
      %2539 = vmatpush1.msra.mxu0 0.0
      %2540 = vmatprep.subr.mxu0 0.0
      %2541 = vmatpush1.msra.mxu0 0.0
      %2542 = vmatprep.subr.mxu0 0.0
      %2543 = vmatpush1.msra.mxu0 0.0
      %2544 = vmatprep.subr.mxu0 0.0
      %2545 = vmatpush1.msra.mxu0 0.0
      %2546 = vmatprep.subr.mxu0 0.0
      %2547 = vmatpush1.msra.mxu0 0.0
      %2548 = vmatprep.subr.mxu0 0.0
      %2549 = vmatpush1.msra.mxu0 0.0
      %2550 = vmatprep.subr.mxu0 0.0
      %2551 = vmatpush1.msra.mxu0 0.0
      %2552 = vmatprep.subr.mxu0 0.0
      %2553 = vmatpush1.msra.mxu0 0.0
      %2554 = vmatprep.subr.mxu0 0.0
      %2555 = vmatpush1.msra.mxu0 0.0
      %2556 = vmatprep.subr.mxu0 0.0
      %2557 = vmatpush1.msra.mxu0 0.0
      %2558 = vmatprep.subr.mxu0 0.0
      %2559 = vmatpush1.msra.mxu0 0.0
      %2560 = vmatprep.subr.mxu0 0.0
      %2561 = vmatpush1.msra.mxu0 0.0
      %2562 = vmatprep.subr.mxu0 0.0
      %2563 = vmatpush1.msra.mxu0 0.0
      %2564 = vmatprep.subr.mxu0 0.0
      %2565 = vmatpush1.msra.mxu0 0.0
      %2566 = vmatprep.subr.mxu0 0.0
      %2567 = vmatpush1.msra.mxu0 0.0
      %2568 = vmatprep.subr.mxu0 0.0
      %2569 = vmatpush1.msra.mxu0 0.0
      %2570 = vmatprep.subr.mxu0 0.0
      %2571 = vmatpush1.msra.mxu0 0.0
      %2572 = vmatprep.subr.mxu0 0.0
      %2573 = vmatpush1.msra.mxu0 0.0
      %2574 = vmatprep.mubr.f32.mxu0 0.0
      %2575 = vmatmul.mubr.f32.gmra.mrb[0].mxu0 %v2505
      %v2576 = vpop.f32.mrb[0].mxu0
      %v2577 = vadd.f32 0.0, %v2576
      %v2578 = vpop.f32.mrb[0].mxu0
      %2579 = vmatprep.mubr.f32.mxu0 0.0
      %2580 = vmatmul.mubr.f32.gmra.mrb[0].mxu0 %v2508
      %v2581 = vpop.f32.mrb[0].mxu0
      %v2582 = vadd.f32 0.0, %v2581
      %v2583 = vpop.f32.mrb[0].mxu0
      %2584 = vdwg.mxu0
      %v2585 = vadd.f32 %v1511, %v2577
      %v2586 = vadd.f32 %v1512, %v2582
      %v2587 = vlaneseq
      %v2588 = vshrl.u32 %v2587, 7
      %v2589 = vsub.s32 4, %v2588
      %v2590 = vrot.slane %v1532, %v2589
      %v2591 = vadd.f32 %v2585, %v2590
      %v2592 = vadd.f32 %v2586, %v2590
      %v2593 = vsel %vm213, %v2591, 0.0
      %2594 = vadd.xlane.f32.xlu0 %v2593
      %v2595 = vpop.xlane.xlu0 %2594
      %v2596 = vsel %vm217, %v2592, 0.0
      %2597 = vadd.xlane.f32.xlu0 %v2596
      %v2598 = vpop.xlane.xlu0 %2597
      %v2599 = vmul.f32 %v2595, %v221
      %v2600 = vmul.f32 %v2598, %v221
      %v2601 = vsub.f32 %v2591, %v2599
      %v2602 = vsub.f32 %v2592, %v2600
      %v2603 = vmul.f32 %v2601, %v2601
      %v2604 = vmul.f32 %v2602, %v2602
      %v2605 = vsel %vm213, %v2603, 0.0
      %2606 = vadd.xlane.f32.xlu0 %v2605
      %v2607 = vpop.xlane.xlu0 %2606
      %v2608 = vsel %vm217, %v2604, 0.0
      %2609 = vadd.xlane.f32.xlu0 %v2608
      %v2610 = vpop.xlane.xlu0 %2609
      %v2611 = vmul.f32 %v2607, %v221
      %v2612 = vmul.f32 %v2610, %v221
      %v2613 = vadd.f32 %v2611, 1e-05
      %v2614 = vadd.f32 %v2612, 1e-05
      %v2615 = vrsqrt.pop %v2613
      %v2616 = vrsqrt.pop %v2614
      %v2617 = vmul.f32 %v2601, %v2615
      %v2618 = vmul.f32 %v2602, %v2616
      %v2619 = vlaneseq
      %v2620 = vshrl.u32 %v2619, 7
      %v2621 = vsub.s32 2, %v2620
      %v2622 = vrot.slane %v1532, %v2621
      %v2623 = vmul.f32 %v2617, %v2622
      %v2624 = vmul.f32 %v2618, %v2622
      %v2625 = vlaneseq
      %v2626 = vshrl.u32 %v2625, 7
      %v2627 = vsub.s32 3, %v2626
      %v2628 = vrot.slane %v1532, %v2627
      %v2629 = vadd.f32 %v2623, %v2628
      %v2630 = vadd.f32 %v2624, %v2628
      %v2631 = vlaneseq
      %v2632 = vshrl.u32 %v2631, 7
      %v2633 = vsub.s32 6, %v2632
      %v2634 = vrot.slane %v1532, %v2633
      %v2636 = vsel %vm213, %v2629, 0
      %v2639 = vsel %vm213, %v2630, 0
      %2641 = vmatprep.subr.mxu0 0.0
      %2642 = vmatpush1.msra.mxu0 %v1515
      %2643 = vmatprep.subr.mxu0 0.0
      %2644 = vmatpush1.msra.mxu0 %v1517
      %2645 = vmatprep.subr.mxu0 0.0
      %2646 = vmatpush1.msra.mxu0 %v1519
      %2647 = vmatprep.subr.mxu0 0.0
      %2648 = vmatpush1.msra.mxu0 %v1521
      %2649 = vmatprep.subr.mxu0 0.0
      %2650 = vmatpush1.msra.mxu0 0.0
      %2651 = vmatprep.subr.mxu0 0.0
      %2652 = vmatpush1.msra.mxu0 0.0
      %2653 = vmatprep.subr.mxu0 0.0
      %2654 = vmatpush1.msra.mxu0 0.0
      %2655 = vmatprep.subr.mxu0 0.0
      %2656 = vmatpush1.msra.mxu0 0.0
      %2657 = vmatprep.subr.mxu0 0.0
      %2658 = vmatpush1.msra.mxu0 0.0
      %2659 = vmatprep.subr.mxu0 0.0
      %2660 = vmatpush1.msra.mxu0 0.0
      %2661 = vmatprep.subr.mxu0 0.0
      %2662 = vmatpush1.msra.mxu0 0.0
      %2663 = vmatprep.subr.mxu0 0.0
      %2664 = vmatpush1.msra.mxu0 0.0
      %2665 = vmatprep.subr.mxu0 0.0
      %2666 = vmatpush1.msra.mxu0 0.0
      %2667 = vmatprep.subr.mxu0 0.0
      %2668 = vmatpush1.msra.mxu0 0.0
      %2669 = vmatprep.subr.mxu0 0.0
      %2670 = vmatpush1.msra.mxu0 0.0
      %2671 = vmatprep.subr.mxu0 0.0
      %2672 = vmatpush1.msra.mxu0 0.0
      %2673 = vmatprep.subr.mxu0 0.0
      %2674 = vmatpush1.msra.mxu0 0.0
      %2675 = vmatprep.subr.mxu0 0.0
      %2676 = vmatpush1.msra.mxu0 0.0
      %2677 = vmatprep.subr.mxu0 0.0
      %2678 = vmatpush1.msra.mxu0 0.0
      %2679 = vmatprep.subr.mxu0 0.0
      %2680 = vmatpush1.msra.mxu0 0.0
      %2681 = vmatprep.subr.mxu0 0.0
      %2682 = vmatpush1.msra.mxu0 0.0
      %2683 = vmatprep.subr.mxu0 0.0
      %2684 = vmatpush1.msra.mxu0 0.0
      %2685 = vmatprep.subr.mxu0 0.0
      %2686 = vmatpush1.msra.mxu0 0.0
      %2687 = vmatprep.subr.mxu0 0.0
      %2688 = vmatpush1.msra.mxu0 0.0
      %2689 = vmatprep.subr.mxu0 0.0
      %2690 = vmatpush1.msra.mxu0 0.0
      %2691 = vmatprep.subr.mxu0 0.0
      %2692 = vmatpush1.msra.mxu0 0.0
      %2693 = vmatprep.subr.mxu0 0.0
      %2694 = vmatpush1.msra.mxu0 0.0
      %2695 = vmatprep.subr.mxu0 0.0
      %2696 = vmatpush1.msra.mxu0 0.0
      %2697 = vmatprep.subr.mxu0 0.0
      %2698 = vmatpush1.msra.mxu0 0.0
      %2699 = vmatprep.subr.mxu0 0.0
      %2700 = vmatpush1.msra.mxu0 0.0
      %2701 = vmatprep.subr.mxu0 0.0
      %2702 = vmatpush1.msra.mxu0 0.0
      %2703 = vmatprep.subr.mxu0 0.0
      %2704 = vmatpush1.msra.mxu0 0.0
      %2705 = vmatprep.mubr.f32.mxu0 0.0
      %2706 = vmatmul.mubr.f32.gmra.mrb[0].mxu0 %v2636
      %v2707 = vpop.f32.mrb[0].mxu0
      %v2708 = vadd.f32 %v2634, %v2707
      %v2709 = vpop.f32.mrb[0].mxu0
      %2710 = vmatprep.mubr.f32.mxu0 0.0
      %2711 = vmatmul.mubr.f32.gmra.mrb[0].mxu0 %v2639
      %v2712 = vpop.f32.mrb[0].mxu0
      %v2713 = vadd.f32 %v2634, %v2712
      %v2714 = vpop.f32.mrb[0].mxu0
      %2715 = vdwg.mxu0
      %v2716 = vmul.f32 %v2708, 0.5
      %v2717 = vmul.f32 %v2713, 0.5
      %v2718 = vmul.f32 %v2708, 0.044715
      %v2719 = vmul.f32 %v2713, 0.044715
      %v2720 = vmul.f32 %v2718, %v2708
      %v2721 = vmul.f32 %v2719, %v2713
      %v2722 = vmul.f32 %v2720, %v2708
      %v2723 = vmul.f32 %v2721, %v2713
      %v2724 = vadd.f32 %v2708, %v2722
      %v2725 = vadd.f32 %v2713, %v2723
      %v2726 = vmul.f32 %v2724, 0.7978846
      %v2727 = vmul.f32 %v2725, 0.7978846
      %v2728 = vtanh.pop %v2726
      %v2729 = vtanh.pop %v2727
      %v2730 = vadd.f32 %v2728, 1.0
      %v2731 = vadd.f32 %v2729, 1.0
      %v2732 = vmul.f32 %v2716, %v2730
      %v2733 = vmul.f32 %v2717, %v2731
      %v2735 = vsel %vm1423, %v2732, 0
      %v2738 = vsel %vm1423, %v2733, 0
      %2740 = vmatprep.subr.mxu0 0.0
      %2741 = vmatpush1.msra.mxu0 %v1523
      %2742 = vmatprep.subr.mxu0 0.0
      %2743 = vmatpush1.msra.mxu0 %v1524
      %2744 = vmatprep.subr.mxu0 0.0
      %2745 = vmatpush1.msra.mxu0 %v1525
      %2746 = vmatprep.subr.mxu0 0.0
      %2747 = vmatpush1.msra.mxu0 %v1526
      %2748 = vmatprep.subr.mxu0 0.0
      %2749 = vmatpush1.msra.mxu0 %v1527
      %2750 = vmatprep.subr.mxu0 0.0
      %2751 = vmatpush1.msra.mxu0 %v1528
      %2752 = vmatprep.subr.mxu0 0.0
      %2753 = vmatpush1.msra.mxu0 %v1529
      %2754 = vmatprep.subr.mxu0 0.0
      %2755 = vmatpush1.msra.mxu0 %v1530
      %2756 = vmatprep.subr.mxu0 0.0
      %2757 = vmatpush1.msra.mxu0 0.0
      %2758 = vmatprep.subr.mxu0 0.0
      %2759 = vmatpush1.msra.mxu0 0.0
      %2760 = vmatprep.subr.mxu0 0.0
      %2761 = vmatpush1.msra.mxu0 0.0
      %2762 = vmatprep.subr.mxu0 0.0
      %2763 = vmatpush1.msra.mxu0 0.0
      %2764 = vmatprep.subr.mxu0 0.0
      %2765 = vmatpush1.msra.mxu0 0.0
      %2766 = vmatprep.subr.mxu0 0.0
      %2767 = vmatpush1.msra.mxu0 0.0
      %2768 = vmatprep.subr.mxu0 0.0
      %2769 = vmatpush1.msra.mxu0 0.0
      %2770 = vmatprep.subr.mxu0 0.0
      %2771 = vmatpush1.msra.mxu0 0.0
      %2772 = vmatprep.subr.mxu0 0.0
      %2773 = vmatpush1.msra.mxu0 0.0
      %2774 = vmatprep.subr.mxu0 0.0
      %2775 = vmatpush1.msra.mxu0 0.0
      %2776 = vmatprep.subr.mxu0 0.0
      %2777 = vmatpush1.msra.mxu0 0.0
      %2778 = vmatprep.subr.mxu0 0.0
      %2779 = vmatpush1.msra.mxu0 0.0
      %2780 = vmatprep.subr.mxu0 0.0
      %2781 = vmatpush1.msra.mxu0 0.0
      %2782 = vmatprep.subr.mxu0 0.0
      %2783 = vmatpush1.msra.mxu0 0.0
      %2784 = vmatprep.subr.mxu0 0.0
      %2785 = vmatpush1.msra.mxu0 0.0
      %2786 = vmatprep.subr.mxu0 0.0
      %2787 = vmatpush1.msra.mxu0 0.0
      %2788 = vmatprep.subr.mxu0 0.0
      %2789 = vmatpush1.msra.mxu0 0.0
      %2790 = vmatprep.subr.mxu0 0.0
      %2791 = vmatpush1.msra.mxu0 0.0
      %2792 = vmatprep.subr.mxu0 0.0
      %2793 = vmatpush1.msra.mxu0 0.0
      %2794 = vmatprep.subr.mxu0 0.0
      %2795 = vmatpush1.msra.mxu0 0.0
      %2796 = vmatprep.subr.mxu0 0.0
      %2797 = vmatpush1.msra.mxu0 0.0
      %2798 = vmatprep.subr.mxu0 0.0
      %2799 = vmatpush1.msra.mxu0 0.0
      %2800 = vmatprep.subr.mxu0 0.0
      %2801 = vmatpush1.msra.mxu0 0.0
      %2802 = vmatprep.subr.mxu0 0.0
      %2803 = vmatpush1.msra.mxu0 0.0
      %2804 = vmatprep.mubr.f32.mxu0 0.0
      %2805 = vmatmul.mubr.f32.gmra.mrb[0].mxu0 %v2735
      %v2806 = vpop.f32.mrb[0].mxu0
      %v2807 = vadd.f32 0.0, %v2806
      %v2808 = vpop.f32.mrb[0].mxu0
      %2809 = vmatprep.mubr.f32.mxu0 0.0
      %2810 = vmatmul.mubr.f32.gmra.mrb[0].mxu0 %v2738
      %v2811 = vpop.f32.mrb[0].mxu0
      %v2812 = vpop.f32.mrb[0].mxu0
      %2813 = vdwg.mxu0
      %v2814 = vadd.f32 %v2591, %v2807
      %v2815 = vlaneseq
      %v2816 = vshrl.u32 %v2815, 7
      %v2817 = vsub.s32 5, %v2816
      %v2818 = vrot.slane %v1532, %v2817
      %v2819 = vadd.f32 %v2814, %v2818
      %v2821 = vrot.slane %v212, 7
      %v2823 = vmul.f32 %v2819, %v2821
      %v2824 = vsel %vm217, %v2823, 0.0
      %2825 = vadd.xlane.f32.xlu0 %v2824
      %v2826 = vpop.xlane.xlu0 %2825
      %2827 = vrot.lane.b32.xlu0 %v2821, 96
      %v2828 = vpop.permute.xlu0 %2827
      %v2830 = vadd.f32 %v2826, %v2828
      %vm2831 = vcmask 0
      %2832 = vst.msk [vmem:[%s193] sm:$0x1] %vm2831, %v2830
      %p2833 = scmp.lt.s32.totalorder %s15, 1
      %s2834 = scalar_select %p2833, %s15, 1
      %s2835 = scalar_lea.vmem %s4, %s2834
      // Predicated region
      $region37: #{tpu_custom_call.1} parent=35 // pred_check
        %p2836 = pneg %p122
      $region38: #{tpu_custom_call.1} parent=35 // pred_check_branch
        %2838 = sbr.rel (%p2836) target = $region40
      $region39: #{tpu_custom_call.1} parent=35 // pred_region
        _
      $region40: #{tpu_custom_call.1} parent=35 // pred_fallthru
        _
    $region36: #{tpu_custom_call.1} parent=5 // pred_fallthru
      _
    %p2839 = scmp.le.s32.totalorder 2, %s10
    // Predicated region
    $region41: #{tpu_custom_call.1} parent=5 // pred_check
      %p2840 = pneg %p2839
    $region42: #{tpu_custom_call.1} parent=5 // pred_check_branch
      %2842 = sbr.rel (%p2840) target = $region44
    $region43: #{tpu_custom_call.1} parent=5 // pred_region
      %s2843 = ssub.s32 %s10, 2
      // Predicated region
      $region45: #{tpu_custom_call.1} parent=43 // pred_check
        %p2844 = pneg %p128
      $region46: #{tpu_custom_call.1} parent=43 // pred_check_branch
        %2846 = sbr.rel (%p2844) target = $region48
      $region47: #{tpu_custom_call.1} parent=43 // pred_region
        %p2847 = scmp.lt.s32.totalorder %s16, 1
        %s2848 = scalar_select %p2847, %s16, 1
        %s2849 = scalar_lea.vmem %s4, %s2848
      $region48: #{tpu_custom_call.1} parent=43 // pred_fallthru
        _
    $region44: #{tpu_custom_call.1} parent=5 // pred_fallthru
      _
  $region6: #{tpu_custom_call.1} parent=0 // loop_footer
    %s14 = sadd.s32 1, %s10
  $region7: #{tpu_custom_call.1} parent=0 // loop_footer_branch
    %9 = sbr.rel target = $region3
  $region8: #{tpu_custom_call.1} parent=0 // loop_exit
    _

</llo_original>
